<compile_context>
chip_gen: v6e
topology: v6e:2x2x1
jax: 0.10.0
libtpu: 0.0.40
codegen_flags: <defaults>
</compile_context>

<pallas_src>
import jax
import jax.numpy as jnp
from jax.experimental import pallas as pl
from jax.experimental.pallas import tpu as pltpu

B, H, W = 2, 16, 16
HW = H * W                          # 256 spatial positions per image plane (lane dim)
C_IN, C1, C2 = 4, 8, 8
K = 3
PAD = 128                           # lane halo in the padded conv scratch (aligned)
HIDDEN = C2 * H * W                 # 2048, adapter input
LIN_IN, LIN_WIDTH, LIN_OUT = 64, 32, 10


# --------------------------------------------------------------------------
# Single fused kernel: conv1+ReLU -> conv2+ReLU+skip -> NCHW flatten -> folded head
# --------------------------------------------------------------------------
def _fused_resnet_kernel(x_ref, wbd1_ref, b1_ref, wbd2_ref, b2_ref,
                         wh_ref, bh_ref, out_ref, pad_ref, flat_ref):
    f32, bf16 = jnp.float32, jnp.bfloat16

    # Decode the within-plane w position of every lane once.  Only the w (dx)
    # component of a tap ever needs masking; the h (dy) component is handled by
    # the true zero halo kept in pad_ref.
    lane = jax.lax.broadcasted_iota(jnp.int32, (1, HW), 1)
    wpos = lane % W
    w_ok_plus = wpos < (W - 1)      # valid lanes when sampling w+1
    w_ok_minus = wpos > 0           # valid lanes when sampling w-1

    def conv3x3(n_in_rows, n_out_rows, wbd_ref):
        """3x3 / stride 1 / pad 1 conv over image planes stored (row-per-(b,c))
        in pad_ref[:n_in_rows, PAD:PAD+HW]; the rest of pad_ref is zero."""
        acc = jnp.zeros((n_out_rows, HW), f32)
        for ky in range(K):                      # 9 statically-unrolled taps,
            for kx in range(K):                  # each one small MXU matmul
                dy, dx = ky - 1, kx - 1
                off = PAD + dy * W + dx
                src = pad_ref[0:n_in_rows, off:off + HW]        # (rows, 256)
                if dx == 1:
                    src = jnp.where(w_ok_plus, src, 0.0)
                elif dx == -1:
                    src = jnp.where(w_ok_minus, src, 0.0)
                acc = acc + jnp.dot(wbd_ref[ky * K + kx],        # (n_out, n_in) bf16
                                    src.astype(bf16),
                                    preferred_element_type=f32)
        return acc

    # Zero the padded scratch once; the halo regions stay zero afterwards.
    pad_ref[...] = jnp.zeros_like(pad_ref)

    # ---- layers 0+1: Conv2d(4->8, 3x3, pad 1) + ReLU  (output saved for the skip)
    pad_ref[0:B * C_IN, PAD:PAD + HW] = x_ref[...]
    h1 = jnp.maximum(conv3x3(B * C_IN, B * C1, wbd1_ref) + b1_ref[...], 0.0)

    # ---- layers 2+3: Conv2d(8->8, 3x3, pad 1) + ReLU, then residual add of h1
    pad_ref[0:B * C1, PAD:PAD + HW] = h1
    h2 = jnp.maximum(conv3x3(B * C1, B * C2, wbd2_ref) + b2_ref[...], 0.0) + h1

    # ---- layer 4 flatten: (B*C, HW) rows -> (B, C*H*W); row-major order here IS the
    #      torch NCHW flatten order, so this is a pure VMEM layout copy (16 KB).
    for r in range(B * C2):
        b, c = divmod(r, C2)
        flat_ref[b:b + 1, c * HW:(c + 1) * HW] = h2[r:r + 1, :]

    # ---- layers 4..6: folded Linear(2048->64->32->10), no activations (last layer)
    out_ref[...] = (jnp.dot(flat_ref[...].astype(bf16), wh_ref[...],
                            preferred_element_type=f32) + bh_ref[...])


def my_resnet_forward(x_nchw, kp):
    """Forward pass of MyResNet using the single fused Pallas kernel.

    `kp` are the kernel-ready (folded / block-diagonal) parameters from fold_params().
    """
    x2d = x_nchw.astype(jnp.float32).reshape(B * C_IN, HW)   # free view of NCHW
    vmem = pl.BlockSpec(memory_space=pltpu.MemorySpace.VMEM)
    return pl.pallas_call(
        _fused_resnet_kernel,
        out_shape=jax.ShapeDtypeStruct((B, LIN_OUT), jnp.float32),
        in_specs=[vmem] * 7,
        out_specs=vmem,
        scratch_shapes=[
            pltpu.VMEM((B * C2, HW + 2 * PAD), jnp.float32),   # zero-padded conv planes
            pltpu.VMEM((B, HIDDEN), jnp.float32),              # NCHW-flattened h2
        ],
    )(x2d, kp["wbd1"], kp["b1"], kp["wbd2"], kp["b2"], kp["w_head"], kp["b_head"])


# --------------------------------------------------------------------------
# Parameter preparation (done once, outside the hot path)
# --------------------------------------------------------------------------
def fold_params(params):
    """Build kernel-ready parameters:
       * per-tap block-diagonal-over-batch conv weights (so the conv is a plain
         (B*Cout, B*Cin) @ (B*Cin, HW) matmul in the lane-dense layout),
       * per-row conv bias columns,
       * the three activation-free Linear layers folded into one (2048,10) weight
         and (1,10) bias (inference-only, algebraically exact)."""
    eye_b = jnp.eye(B, dtype=jnp.float32)

    def block_diag_taps(w_hwio):                      # (3,3,Cin,Cout) -> (9, B*Cout, B*Cin)
        w_taps = w_hwio.reshape(K * K, w_hwio.shape[2], w_hwio.shape[3])
        return jax.vmap(lambda blk: jnp.kron(eye_b, blk.T))(w_taps)

    w_head = params["w_ad"] @ params["w_l1"] @ params["w_l2"]                       # (2048,10)
    b_head = (params["b_ad"] @ params["w_l1"] + params["b_l1"]) @ params["w_l2"] \
             + params["b_l2"]                                                       # (1,10)

    return {
        "wbd1": block_diag_taps(params["w_conv1"]).astype(jnp.bfloat16),  # (9,16,8)
        "b1":   jnp.tile(params["b_conv1"], B).reshape(B * C1, 1).astype(jnp.float32),
        "wbd2": block_diag_taps(params["w_conv2"]).astype(jnp.bfloat16),  # (9,16,16)
        "b2":   jnp.tile(params["b_conv2"], B).reshape(B * C2, 1).astype(jnp.float32),
        "w_head": w_head.astype(jnp.bfloat16),
        "b_head": b_head.astype(jnp.float32),
    }


# Deterministic parameter init (PyTorch-default-like uniform(-1/sqrt(fan_in)))
def init_params(key):
    ks = jax.random.split(key, 10)

    def u(k, shape, fan_in):
        bound = 1.0 / float(fan_in) ** 0.5
        return jax.random.uniform(k, shape, jnp.float32, -bound, bound)

    return {
        "w_conv1": u(ks[0], (K, K, C_IN, C1), C_IN * K * K),
        "b_conv1": u(ks[1], (C1,), C_IN * K * K),
        "w_conv2": u(ks[2], (K, K, C1, C2), C1 * K * K),
        "b_conv2": u(ks[3], (C2,), C1 * K * K),
        "w_ad":    u(ks[4], (HIDDEN, LIN_IN), HIDDEN),
        "b_ad":    u(ks[5], (1, LIN_IN), HIDDEN),
        "w_l1":    u(ks[6], (LIN_IN, LIN_WIDTH), LIN_IN),
        "b_l1":    u(ks[7], (1, LIN_WIDTH), LIN_IN),
        "w_l2":    u(ks[8], (LIN_WIDTH, LIN_OUT), LIN_WIDTH),
        "b_l2":    u(ks[9], (1, LIN_OUT), LIN_WIDTH),
    }


# Pure-JAX f32 reference (unfolded weights) for correctness checking
def reference_forward(x_nchw, params):
    x = jnp.transpose(x_nchw, (0, 2, 3, 1)).astype(jnp.float32)   # NCHW -> NHWC

    def conv(xh, w, b):
        xp = jnp.pad(xh, ((0, 0), (1, 1), (1, 1), (0, 0)))
        acc = jnp.zeros((B, H, W, w.shape[-1]), jnp.float32)
        for ky in range(K):
            for kx in range(K):
                acc = acc + jnp.einsum("bhwc,co->bhwo",
                                       xp[:, ky:ky + H, kx:kx + W, :], w[ky, kx])
        return jnp.maximum(acc + b, 0.0)

    h1 = conv(x, params["w_conv1"], params["b_conv1"])
    h2 = conv(h1, params["w_conv2"], params["b_conv2"]) + h1
    flat = jnp.transpose(h2, (0, 3, 1, 2)).reshape(B, HIDDEN)     # torch Flatten (NCHW)
    h = flat @ params["w_ad"] + params["b_ad"]
    h = h @ params["w_l1"] + params["b_l1"]
    return h @ params["w_l2"] + params["b_l2"]


if __name__ == "__main__":
    key = jax.random.PRNGKey(0)
    pkey, xkey = jax.random.split(key)
    params = init_params(pkey)
    kparams = fold_params(params)                       # one-time, outside the hot path
    x = jax.random.normal(xkey, (B, C_IN, H, W), jnp.float32)   # NCHW, like PyTorch

    fwd = jax.jit(my_resnet_forward)
    out = jax.block_until_ready(fwd(x, kparams))

    ref = reference_forward(x, params)
    assert out.shape == (B, LIN_OUT)
    # bf16 MXU inputs (f32 accumulation) -> tolerance loosened vs. the pure-f32 reference
    assert jnp.allclose(out, ref, atol=2e-2, rtol=2e-2), \
        float(jnp.max(jnp.abs(out - ref)))
    print("KERNEL_OK")
</pallas_src>

<mosaic_0001>
module attributes {stable_mosaic.version = 11 : i64} {
  func.func @_fused_resnet_kernel(%arg0: memref<8x256xf32, #tpu.memory_space<vmem>>, %arg1: memref<9x16x8xbf16, #tpu.memory_space<vmem>>, %arg2: memref<16x1xf32, #tpu.memory_space<vmem>>, %arg3: memref<9x16x16xbf16, #tpu.memory_space<vmem>>, %arg4: memref<16x1xf32, #tpu.memory_space<vmem>>, %arg5: memref<2048x10xbf16, #tpu.memory_space<vmem>>, %arg6: memref<1x10xf32, #tpu.memory_space<vmem>>, %arg7: memref<2x10xf32, #tpu.memory_space<vmem>>, %arg8: memref<16x512xf32, #tpu.memory_space<vmem>>, %arg9: memref<2x2048xf32, #tpu.memory_space<vmem>>) attributes {dimension_semantics = [], scalar_prefetch = 0 : i64, scratch_operands = 2 : i64, tpu.core_type = #tpu.core_type<tc>} {
    %0 = tpu.iota {dimensions = array<i32: 1>} : vector<1x256xi32>
    %c16_i32 = arith.constant 16 : i32
    %c0_i32 = arith.constant 0 : i32
    %1 = arith.cmpi eq, %c16_i32, %c0_i32 : i32
    %c1_i32 = arith.constant 1 : i32
    %2 = arith.select %1, %c1_i32, %c16_i32 : i32
    %3 = vector.broadcast %2 : i32 to vector<1x256xi32>
    %4 = arith.remsi %0, %3 : vector<1x256xi32>
    %c0_i32_0 = arith.constant 0 : i32
    %5 = vector.broadcast %c0_i32_0 : i32 to vector<1x256xi32>
    %6 = arith.cmpi ne, %4, %5 : vector<1x256xi32>
    %c0_i32_1 = arith.constant 0 : i32
    %7 = vector.broadcast %c0_i32_1 : i32 to vector<1x256xi32>
    %8 = arith.cmpi slt, %4, %7 : vector<1x256xi32>
    %c0_i32_2 = arith.constant 0 : i32
    %9 = arith.cmpi slt, %2, %c0_i32_2 : i32
    %10 = vector.broadcast %9 : i1 to vector<1x256xi1>
    %11 = vector.broadcast %10 : vector<1x256xi1> to vector<1x256xi1>
    %12 = arith.xori %8, %11 : vector<1x256xi1>
    %13 = arith.andi %12, %6 : vector<1x256xi1>
    %14 = vector.broadcast %2 : i32 to vector<1x256xi32>
    %15 = arith.addi %4, %14 : vector<1x256xi32>
    %16 = arith.select %13, %15, %4 : vector<1x256xi1>, vector<1x256xi32>
    %c15_i32 = arith.constant 15 : i32
    %17 = vector.broadcast %c15_i32 : i32 to vector<1x256xi32>
    %18 = arith.cmpi slt, %16, %17 : vector<1x256xi32>
    %c0_i32_3 = arith.constant 0 : i32
    %19 = vector.broadcast %c0_i32_3 : i32 to vector<1x256xi32>
    %20 = arith.cmpi sgt, %16, %19 : vector<1x256xi32>
    %cst = arith.constant 0.000000e+00 : f32
    %21 = vector.broadcast %cst : f32 to vector<16x512xf32>
    %c0 = arith.constant 0 : index
    %c0_4 = arith.constant 0 : index
    %22 = vector.load %arg8[%c0, %c0_4] : memref<16x512xf32, #tpu.memory_space<vmem>>, vector<16x512xf32>
    tpu.vector_store %arg8[%c0, %c0_4], %21 {strides = array<i32>} : memref<16x512xf32, #tpu.memory_space<vmem>>, vector<16x512xf32>,
    %c0_5 = arith.constant 0 : index
    %c0_6 = arith.constant 0 : index
    %23 = vector.load %arg0[%c0_5, %c0_6] : memref<8x256xf32, #tpu.memory_space<vmem>>, vector<8x256xf32>
    %c0_7 = arith.constant 0 : index
    %c128 = arith.constant 128 : index
    %24 = vector.load %arg8[%c0_7, %c128] : memref<16x512xf32, #tpu.memory_space<vmem>>, vector<8x256xf32>
    tpu.vector_store %arg8[%c0_7, %c128], %23 {strides = array<i32>} : memref<16x512xf32, #tpu.memory_space<vmem>>, vector<8x256xf32>,
    %cst_8 = arith.constant 0.000000e+00 : f32
    %25 = vector.broadcast %cst_8 : f32 to vector<16x256xf32>
    %c0_9 = arith.constant 0 : index
    %c111 = arith.constant 111 : index
    %26 = vector.load %arg8[%c0_9, %c111] : memref<16x512xf32, #tpu.memory_space<vmem>>, vector<8x256xf32>
    %cst_10 = arith.constant 0.000000e+00 : f32
    %27 = vector.shape_cast %20 : vector<1x256xi1> to vector<1x256xi1>
    %28 = vector.broadcast %27 : vector<1x256xi1> to vector<8x256xi1>
    %29 = vector.broadcast %cst_10 : f32 to vector<8x256xf32>
    %30 = arith.select %28, %26, %29 : vector<8x256xi1>, vector<8x256xf32>
    %c0_11 = arith.constant 0 : index
    %c0_12 = arith.constant 0 : index
    %c0_13 = arith.constant 0 : index
    %31 = vector.load %arg1[%c0_11, %c0_12, %c0_13] : memref<9x16x8xbf16, #tpu.memory_space<vmem>>, vector<1x16x8xbf16>
    %32 = vector.shape_cast %31 : vector<1x16x8xbf16> to vector<16x8xbf16>
    %33 = arith.truncf %30 : vector<8x256xf32> to vector<8x256xbf16>
    %cst_14 = arith.constant dense<0.000000e+00> : vector<16x256xf32>
    %34 = tpu.matmul %32, %33, %cst_14 {dimension_numbers = #tpu.dot_dimension_numbers<[1], [0], [0], [1], [0, 0, 1, 1], [], []>} : vector<16x8xbf16>, vector<8x256xbf16>, vector<16x256xf32> -> vector<16x256xf32>
    %35 = arith.addf %25, %34 : vector<16x256xf32>
    %c0_15 = arith.constant 0 : index
    %c112 = arith.constant 112 : index
    %36 = vector.load %arg8[%c0_15, %c112] : memref<16x512xf32, #tpu.memory_space<vmem>>, vector<8x256xf32>
    %c1 = arith.constant 1 : index
    %c0_16 = arith.constant 0 : index
    %c0_17 = arith.constant 0 : index
    %37 = vector.load %arg1[%c1, %c0_16, %c0_17] : memref<9x16x8xbf16, #tpu.memory_space<vmem>>, vector<1x16x8xbf16>
    %38 = vector.shape_cast %37 : vector<1x16x8xbf16> to vector<16x8xbf16>
    %39 = arith.truncf %36 : vector<8x256xf32> to vector<8x256xbf16>
    %cst_18 = arith.constant dense<0.000000e+00> : vector<16x256xf32>
    %40 = tpu.matmul %38, %39, %cst_18 {dimension_numbers = #tpu.dot_dimension_numbers<[1], [0], [0], [1], [0, 0, 1, 1], [], []>} : vector<16x8xbf16>, vector<8x256xbf16>, vector<16x256xf32> -> vector<16x256xf32>
    %41 = arith.addf %35, %40 : vector<16x256xf32>
    %c0_19 = arith.constant 0 : index
    %c113 = arith.constant 113 : index
    %42 = vector.load %arg8[%c0_19, %c113] : memref<16x512xf32, #tpu.memory_space<vmem>>, vector<8x256xf32>
    %cst_20 = arith.constant 0.000000e+00 : f32
    %43 = vector.shape_cast %18 : vector<1x256xi1> to vector<1x256xi1>
    %44 = vector.broadcast %43 : vector<1x256xi1> to vector<8x256xi1>
    %45 = vector.broadcast %cst_20 : f32 to vector<8x256xf32>
    %46 = arith.select %44, %42, %45 : vector<8x256xi1>, vector<8x256xf32>
    %c2 = arith.constant 2 : index
    %c0_21 = arith.constant 0 : index
    %c0_22 = arith.constant 0 : index
    %47 = vector.load %arg1[%c2, %c0_21, %c0_22] : memref<9x16x8xbf16, #tpu.memory_space<vmem>>, vector<1x16x8xbf16>
    %48 = vector.shape_cast %47 : vector<1x16x8xbf16> to vector<16x8xbf16>
    %49 = arith.truncf %46 : vector<8x256xf32> to vector<8x256xbf16>
    %cst_23 = arith.constant dense<0.000000e+00> : vector<16x256xf32>
    %50 = tpu.matmul %48, %49, %cst_23 {dimension_numbers = #tpu.dot_dimension_numbers<[1], [0], [0], [1], [0, 0, 1, 1], [], []>} : vector<16x8xbf16>, vector<8x256xbf16>, vector<16x256xf32> -> vector<16x256xf32>
    %51 = arith.addf %41, %50 : vector<16x256xf32>
    %c0_24 = arith.constant 0 : index
    %c127 = arith.constant 127 : index
    %52 = vector.load %arg8[%c0_24, %c127] : memref<16x512xf32, #tpu.memory_space<vmem>>, vector<8x256xf32>
    %cst_25 = arith.constant 0.000000e+00 : f32
    %53 = vector.shape_cast %20 : vector<1x256xi1> to vector<1x256xi1>
    %54 = vector.broadcast %53 : vector<1x256xi1> to vector<8x256xi1>
    %55 = vector.broadcast %cst_25 : f32 to vector<8x256xf32>
    %56 = arith.select %54, %52, %55 : vector<8x256xi1>, vector<8x256xf32>
    %c3 = arith.constant 3 : index
    %c0_26 = arith.constant 0 : index
    %c0_27 = arith.constant 0 : index
    %57 = vector.load %arg1[%c3, %c0_26, %c0_27] : memref<9x16x8xbf16, #tpu.memory_space<vmem>>, vector<1x16x8xbf16>
    %58 = vector.shape_cast %57 : vector<1x16x8xbf16> to vector<16x8xbf16>
    %59 = arith.truncf %56 : vector<8x256xf32> to vector<8x256xbf16>
    %cst_28 = arith.constant dense<0.000000e+00> : vector<16x256xf32>
    %60 = tpu.matmul %58, %59, %cst_28 {dimension_numbers = #tpu.dot_dimension_numbers<[1], [0], [0], [1], [0, 0, 1, 1], [], []>} : vector<16x8xbf16>, vector<8x256xbf16>, vector<16x256xf32> -> vector<16x256xf32>
    %61 = arith.addf %51, %60 : vector<16x256xf32>
    %c0_29 = arith.constant 0 : index
    %c128_30 = arith.constant 128 : index
    %62 = vector.load %arg8[%c0_29, %c128_30] : memref<16x512xf32, #tpu.memory_space<vmem>>, vector<8x256xf32>
    %c4 = arith.constant 4 : index
    %c0_31 = arith.constant 0 : index
    %c0_32 = arith.constant 0 : index
    %63 = vector.load %arg1[%c4, %c0_31, %c0_32] : memref<9x16x8xbf16, #tpu.memory_space<vmem>>, vector<1x16x8xbf16>
    %64 = vector.shape_cast %63 : vector<1x16x8xbf16> to vector<16x8xbf16>
    %65 = arith.truncf %62 : vector<8x256xf32> to vector<8x256xbf16>
    %cst_33 = arith.constant dense<0.000000e+00> : vector<16x256xf32>
    %66 = tpu.matmul %64, %65, %cst_33 {dimension_numbers = #tpu.dot_dimension_numbers<[1], [0], [0], [1], [0, 0, 1, 1], [], []>} : vector<16x8xbf16>, vector<8x256xbf16>, vector<16x256xf32> -> vector<16x256xf32>
    %67 = arith.addf %61, %66 : vector<16x256xf32>
    %c0_34 = arith.constant 0 : index
    %c129 = arith.constant 129 : index
    %68 = vector.load %arg8[%c0_34, %c129] : memref<16x512xf32, #tpu.memory_space<vmem>>, vector<8x256xf32>
    %cst_35 = arith.constant 0.000000e+00 : f32
    %69 = vector.shape_cast %18 : vector<1x256xi1> to vector<1x256xi1>
    %70 = vector.broadcast %69 : vector<1x256xi1> to vector<8x256xi1>
    %71 = vector.broadcast %cst_35 : f32 to vector<8x256xf32>
    %72 = arith.select %70, %68, %71 : vector<8x256xi1>, vector<8x256xf32>
    %c5 = arith.constant 5 : index
    %c0_36 = arith.constant 0 : index
    %c0_37 = arith.constant 0 : index
    %73 = vector.load %arg1[%c5, %c0_36, %c0_37] : memref<9x16x8xbf16, #tpu.memory_space<vmem>>, vector<1x16x8xbf16>
    %74 = vector.shape_cast %73 : vector<1x16x8xbf16> to vector<16x8xbf16>
    %75 = arith.truncf %72 : vector<8x256xf32> to vector<8x256xbf16>
    %cst_38 = arith.constant dense<0.000000e+00> : vector<16x256xf32>
    %76 = tpu.matmul %74, %75, %cst_38 {dimension_numbers = #tpu.dot_dimension_numbers<[1], [0], [0], [1], [0, 0, 1, 1], [], []>} : vector<16x8xbf16>, vector<8x256xbf16>, vector<16x256xf32> -> vector<16x256xf32>
    %77 = arith.addf %67, %76 : vector<16x256xf32>
    %c0_39 = arith.constant 0 : index
    %c143 = arith.constant 143 : index
    %78 = vector.load %arg8[%c0_39, %c143] : memref<16x512xf32, #tpu.memory_space<vmem>>, vector<8x256xf32>
    %cst_40 = arith.constant 0.000000e+00 : f32
    %79 = vector.shape_cast %20 : vector<1x256xi1> to vector<1x256xi1>
    %80 = vector.broadcast %79 : vector<1x256xi1> to vector<8x256xi1>
    %81 = vector.broadcast %cst_40 : f32 to vector<8x256xf32>
    %82 = arith.select %80, %78, %81 : vector<8x256xi1>, vector<8x256xf32>
    %c6 = arith.constant 6 : index
    %c0_41 = arith.constant 0 : index
    %c0_42 = arith.constant 0 : index
    %83 = vector.load %arg1[%c6, %c0_41, %c0_42] : memref<9x16x8xbf16, #tpu.memory_space<vmem>>, vector<1x16x8xbf16>
    %84 = vector.shape_cast %83 : vector<1x16x8xbf16> to vector<16x8xbf16>
    %85 = arith.truncf %82 : vector<8x256xf32> to vector<8x256xbf16>
    %cst_43 = arith.constant dense<0.000000e+00> : vector<16x256xf32>
    %86 = tpu.matmul %84, %85, %cst_43 {dimension_numbers = #tpu.dot_dimension_numbers<[1], [0], [0], [1], [0, 0, 1, 1], [], []>} : vector<16x8xbf16>, vector<8x256xbf16>, vector<16x256xf32> -> vector<16x256xf32>
    %87 = arith.addf %77, %86 : vector<16x256xf32>
    %c0_44 = arith.constant 0 : index
    %c144 = arith.constant 144 : index
    %88 = vector.load %arg8[%c0_44, %c144] : memref<16x512xf32, #tpu.memory_space<vmem>>, vector<8x256xf32>
    %c7 = arith.constant 7 : index
    %c0_45 = arith.constant 0 : index
    %c0_46 = arith.constant 0 : index
    %89 = vector.load %arg1[%c7, %c0_45, %c0_46] : memref<9x16x8xbf16, #tpu.memory_space<vmem>>, vector<1x16x8xbf16>
    %90 = vector.shape_cast %89 : vector<1x16x8xbf16> to vector<16x8xbf16>
    %91 = arith.truncf %88 : vector<8x256xf32> to vector<8x256xbf16>
    %cst_47 = arith.constant dense<0.000000e+00> : vector<16x256xf32>
    %92 = tpu.matmul %90, %91, %cst_47 {dimension_numbers = #tpu.dot_dimension_numbers<[1], [0], [0], [1], [0, 0, 1, 1], [], []>} : vector<16x8xbf16>, vector<8x256xbf16>, vector<16x256xf32> -> vector<16x256xf32>
    %93 = arith.addf %87, %92 : vector<16x256xf32>
    %c0_48 = arith.constant 0 : index
    %c145 = arith.constant 145 : index
    %94 = vector.load %arg8[%c0_48, %c145] : memref<16x512xf32, #tpu.memory_space<vmem>>, vector<8x256xf32>
    %cst_49 = arith.constant 0.000000e+00 : f32
    %95 = vector.shape_cast %18 : vector<1x256xi1> to vector<1x256xi1>
    %96 = vector.broadcast %95 : vector<1x256xi1> to vector<8x256xi1>
    %97 = vector.broadcast %cst_49 : f32 to vector<8x256xf32>
    %98 = arith.select %96, %94, %97 : vector<8x256xi1>, vector<8x256xf32>
    %c8 = arith.constant 8 : index
    %c0_50 = arith.constant 0 : index
    %c0_51 = arith.constant 0 : index
    %99 = vector.load %arg1[%c8, %c0_50, %c0_51] : memref<9x16x8xbf16, #tpu.memory_space<vmem>>, vector<1x16x8xbf16>
    %100 = vector.shape_cast %99 : vector<1x16x8xbf16> to vector<16x8xbf16>
    %101 = arith.truncf %98 : vector<8x256xf32> to vector<8x256xbf16>
    %cst_52 = arith.constant dense<0.000000e+00> : vector<16x256xf32>
    %102 = tpu.matmul %100, %101, %cst_52 {dimension_numbers = #tpu.dot_dimension_numbers<[1], [0], [0], [1], [0, 0, 1, 1], [], []>} : vector<16x8xbf16>, vector<8x256xbf16>, vector<16x256xf32> -> vector<16x256xf32>
    %103 = arith.addf %93, %102 : vector<16x256xf32>
    %c0_53 = arith.constant 0 : index
    %c0_54 = arith.constant 0 : index
    %104 = vector.load %arg2[%c0_53, %c0_54] : memref<16x1xf32, #tpu.memory_space<vmem>>, vector<16x1xf32>
    %105 = vector.broadcast %104 : vector<16x1xf32> to vector<16x256xf32>
    %106 = arith.addf %103, %105 : vector<16x256xf32>
    %cst_55 = arith.constant 0.000000e+00 : f32
    %107 = vector.broadcast %cst_55 : f32 to vector<16x256xf32>
    %108 = arith.maximumf %106, %107 : vector<16x256xf32>
    %c0_56 = arith.constant 0 : index
    %c128_57 = arith.constant 128 : index
    %109 = vector.load %arg8[%c0_56, %c128_57] : memref<16x512xf32, #tpu.memory_space<vmem>>, vector<16x256xf32>
    tpu.vector_store %arg8[%c0_56, %c128_57], %108 {strides = array<i32>} : memref<16x512xf32, #tpu.memory_space<vmem>>, vector<16x256xf32>,
    %cst_58 = arith.constant 0.000000e+00 : f32
    %110 = vector.broadcast %cst_58 : f32 to vector<16x256xf32>
    %c0_59 = arith.constant 0 : index
    %c111_60 = arith.constant 111 : index
    %111 = vector.load %arg8[%c0_59, %c111_60] : memref<16x512xf32, #tpu.memory_space<vmem>>, vector<16x256xf32>
    %cst_61 = arith.constant 0.000000e+00 : f32
    %112 = vector.shape_cast %20 : vector<1x256xi1> to vector<1x256xi1>
    %113 = vector.broadcast %112 : vector<1x256xi1> to vector<16x256xi1>
    %114 = vector.broadcast %cst_61 : f32 to vector<16x256xf32>
    %115 = arith.select %113, %111, %114 : vector<16x256xi1>, vector<16x256xf32>
    %c0_62 = arith.constant 0 : index
    %c0_63 = arith.constant 0 : index
    %c0_64 = arith.constant 0 : index
    %116 = vector.load %arg3[%c0_62, %c0_63, %c0_64] : memref<9x16x16xbf16, #tpu.memory_space<vmem>>, vector<1x16x16xbf16>
    %117 = vector.shape_cast %116 : vector<1x16x16xbf16> to vector<16x16xbf16>
    %118 = arith.truncf %115 : vector<16x256xf32> to vector<16x256xbf16>
    %cst_65 = arith.constant dense<0.000000e+00> : vector<16x256xf32>
    %119 = tpu.matmul %117, %118, %cst_65 {dimension_numbers = #tpu.dot_dimension_numbers<[1], [0], [0], [1], [0, 0, 1, 1], [], []>} : vector<16x16xbf16>, vector<16x256xbf16>, vector<16x256xf32> -> vector<16x256xf32>
    %120 = arith.addf %110, %119 : vector<16x256xf32>
    %c0_66 = arith.constant 0 : index
    %c112_67 = arith.constant 112 : index
    %121 = vector.load %arg8[%c0_66, %c112_67] : memref<16x512xf32, #tpu.memory_space<vmem>>, vector<16x256xf32>
    %c1_68 = arith.constant 1 : index
    %c0_69 = arith.constant 0 : index
    %c0_70 = arith.constant 0 : index
    %122 = vector.load %arg3[%c1_68, %c0_69, %c0_70] : memref<9x16x16xbf16, #tpu.memory_space<vmem>>, vector<1x16x16xbf16>
    %123 = vector.shape_cast %122 : vector<1x16x16xbf16> to vector<16x16xbf16>
    %124 = arith.truncf %121 : vector<16x256xf32> to vector<16x256xbf16>
    %cst_71 = arith.constant dense<0.000000e+00> : vector<16x256xf32>
    %125 = tpu.matmul %123, %124, %cst_71 {dimension_numbers = #tpu.dot_dimension_numbers<[1], [0], [0], [1], [0, 0, 1, 1], [], []>} : vector<16x16xbf16>, vector<16x256xbf16>, vector<16x256xf32> -> vector<16x256xf32>
    %126 = arith.addf %120, %125 : vector<16x256xf32>
    %c0_72 = arith.constant 0 : index
    %c113_73 = arith.constant 113 : index
    %127 = vector.load %arg8[%c0_72, %c113_73] : memref<16x512xf32, #tpu.memory_space<vmem>>, vector<16x256xf32>
    %cst_74 = arith.constant 0.000000e+00 : f32
    %128 = vector.shape_cast %18 : vector<1x256xi1> to vector<1x256xi1>
    %129 = vector.broadcast %128 : vector<1x256xi1> to vector<16x256xi1>
    %130 = vector.broadcast %cst_74 : f32 to vector<16x256xf32>
    %131 = arith.select %129, %127, %130 : vector<16x256xi1>, vector<16x256xf32>
    %c2_75 = arith.constant 2 : index
    %c0_76 = arith.constant 0 : index
    %c0_77 = arith.constant 0 : index
    %132 = vector.load %arg3[%c2_75, %c0_76, %c0_77] : memref<9x16x16xbf16, #tpu.memory_space<vmem>>, vector<1x16x16xbf16>
    %133 = vector.shape_cast %132 : vector<1x16x16xbf16> to vector<16x16xbf16>
    %134 = arith.truncf %131 : vector<16x256xf32> to vector<16x256xbf16>
    %cst_78 = arith.constant dense<0.000000e+00> : vector<16x256xf32>
    %135 = tpu.matmul %133, %134, %cst_78 {dimension_numbers = #tpu.dot_dimension_numbers<[1], [0], [0], [1], [0, 0, 1, 1], [], []>} : vector<16x16xbf16>, vector<16x256xbf16>, vector<16x256xf32> -> vector<16x256xf32>
    %136 = arith.addf %126, %135 : vector<16x256xf32>
    %c0_79 = arith.constant 0 : index
    %c127_80 = arith.constant 127 : index
    %137 = vector.load %arg8[%c0_79, %c127_80] : memref<16x512xf32, #tpu.memory_space<vmem>>, vector<16x256xf32>
    %cst_81 = arith.constant 0.000000e+00 : f32
    %138 = vector.shape_cast %20 : vector<1x256xi1> to vector<1x256xi1>
    %139 = vector.broadcast %138 : vector<1x256xi1> to vector<16x256xi1>
    %140 = vector.broadcast %cst_81 : f32 to vector<16x256xf32>
    %141 = arith.select %139, %137, %140 : vector<16x256xi1>, vector<16x256xf32>
    %c3_82 = arith.constant 3 : index
    %c0_83 = arith.constant 0 : index
    %c0_84 = arith.constant 0 : index
    %142 = vector.load %arg3[%c3_82, %c0_83, %c0_84] : memref<9x16x16xbf16, #tpu.memory_space<vmem>>, vector<1x16x16xbf16>
    %143 = vector.shape_cast %142 : vector<1x16x16xbf16> to vector<16x16xbf16>
    %144 = arith.truncf %141 : vector<16x256xf32> to vector<16x256xbf16>
    %cst_85 = arith.constant dense<0.000000e+00> : vector<16x256xf32>
    %145 = tpu.matmul %143, %144, %cst_85 {dimension_numbers = #tpu.dot_dimension_numbers<[1], [0], [0], [1], [0, 0, 1, 1], [], []>} : vector<16x16xbf16>, vector<16x256xbf16>, vector<16x256xf32> -> vector<16x256xf32>
    %146 = arith.addf %136, %145 : vector<16x256xf32>
    %c0_86 = arith.constant 0 : index
    %c128_87 = arith.constant 128 : index
    %147 = vector.load %arg8[%c0_86, %c128_87] : memref<16x512xf32, #tpu.memory_space<vmem>>, vector<16x256xf32>
    %c4_88 = arith.constant 4 : index
    %c0_89 = arith.constant 0 : index
    %c0_90 = arith.constant 0 : index
    %148 = vector.load %arg3[%c4_88, %c0_89, %c0_90] : memref<9x16x16xbf16, #tpu.memory_space<vmem>>, vector<1x16x16xbf16>
    %149 = vector.shape_cast %148 : vector<1x16x16xbf16> to vector<16x16xbf16>
    %150 = arith.truncf %147 : vector<16x256xf32> to vector<16x256xbf16>
    %cst_91 = arith.constant dense<0.000000e+00> : vector<16x256xf32>
    %151 = tpu.matmul %149, %150, %cst_91 {dimension_numbers = #tpu.dot_dimension_numbers<[1], [0], [0], [1], [0, 0, 1, 1], [], []>} : vector<16x16xbf16>, vector<16x256xbf16>, vector<16x256xf32> -> vector<16x256xf32>
    %152 = arith.addf %146, %151 : vector<16x256xf32>
    %c0_92 = arith.constant 0 : index
    %c129_93 = arith.constant 129 : index
    %153 = vector.load %arg8[%c0_92, %c129_93] : memref<16x512xf32, #tpu.memory_space<vmem>>, vector<16x256xf32>
    %cst_94 = arith.constant 0.000000e+00 : f32
    %154 = vector.shape_cast %18 : vector<1x256xi1> to vector<1x256xi1>
    %155 = vector.broadcast %154 : vector<1x256xi1> to vector<16x256xi1>
    %156 = vector.broadcast %cst_94 : f32 to vector<16x256xf32>
    %157 = arith.select %155, %153, %156 : vector<16x256xi1>, vector<16x256xf32>
    %c5_95 = arith.constant 5 : index
    %c0_96 = arith.constant 0 : index
    %c0_97 = arith.constant 0 : index
    %158 = vector.load %arg3[%c5_95, %c0_96, %c0_97] : memref<9x16x16xbf16, #tpu.memory_space<vmem>>, vector<1x16x16xbf16>
    %159 = vector.shape_cast %158 : vector<1x16x16xbf16> to vector<16x16xbf16>
    %160 = arith.truncf %157 : vector<16x256xf32> to vector<16x256xbf16>
    %cst_98 = arith.constant dense<0.000000e+00> : vector<16x256xf32>
    %161 = tpu.matmul %159, %160, %cst_98 {dimension_numbers = #tpu.dot_dimension_numbers<[1], [0], [0], [1], [0, 0, 1, 1], [], []>} : vector<16x16xbf16>, vector<16x256xbf16>, vector<16x256xf32> -> vector<16x256xf32>
    %162 = arith.addf %152, %161 : vector<16x256xf32>
    %c0_99 = arith.constant 0 : index
    %c143_100 = arith.constant 143 : index
    %163 = vector.load %arg8[%c0_99, %c143_100] : memref<16x512xf32, #tpu.memory_space<vmem>>, vector<16x256xf32>
    %cst_101 = arith.constant 0.000000e+00 : f32
    %164 = vector.shape_cast %20 : vector<1x256xi1> to vector<1x256xi1>
    %165 = vector.broadcast %164 : vector<1x256xi1> to vector<16x256xi1>
    %166 = vector.broadcast %cst_101 : f32 to vector<16x256xf32>
    %167 = arith.select %165, %163, %166 : vector<16x256xi1>, vector<16x256xf32>
    %c6_102 = arith.constant 6 : index
    %c0_103 = arith.constant 0 : index
    %c0_104 = arith.constant 0 : index
    %168 = vector.load %arg3[%c6_102, %c0_103, %c0_104] : memref<9x16x16xbf16, #tpu.memory_space<vmem>>, vector<1x16x16xbf16>
    %169 = vector.shape_cast %168 : vector<1x16x16xbf16> to vector<16x16xbf16>
    %170 = arith.truncf %167 : vector<16x256xf32> to vector<16x256xbf16>
    %cst_105 = arith.constant dense<0.000000e+00> : vector<16x256xf32>
    %171 = tpu.matmul %169, %170, %cst_105 {dimension_numbers = #tpu.dot_dimension_numbers<[1], [0], [0], [1], [0, 0, 1, 1], [], []>} : vector<16x16xbf16>, vector<16x256xbf16>, vector<16x256xf32> -> vector<16x256xf32>
    %172 = arith.addf %162, %171 : vector<16x256xf32>
    %c0_106 = arith.constant 0 : index
    %c144_107 = arith.constant 144 : index
    %173 = vector.load %arg8[%c0_106, %c144_107] : memref<16x512xf32, #tpu.memory_space<vmem>>, vector<16x256xf32>
    %c7_108 = arith.constant 7 : index
    %c0_109 = arith.constant 0 : index
    %c0_110 = arith.constant 0 : index
    %174 = vector.load %arg3[%c7_108, %c0_109, %c0_110] : memref<9x16x16xbf16, #tpu.memory_space<vmem>>, vector<1x16x16xbf16>
    %175 = vector.shape_cast %174 : vector<1x16x16xbf16> to vector<16x16xbf16>
    %176 = arith.truncf %173 : vector<16x256xf32> to vector<16x256xbf16>
    %cst_111 = arith.constant dense<0.000000e+00> : vector<16x256xf32>
    %177 = tpu.matmul %175, %176, %cst_111 {dimension_numbers = #tpu.dot_dimension_numbers<[1], [0], [0], [1], [0, 0, 1, 1], [], []>} : vector<16x16xbf16>, vector<16x256xbf16>, vector<16x256xf32> -> vector<16x256xf32>
    %178 = arith.addf %172, %177 : vector<16x256xf32>
    %c0_112 = arith.constant 0 : index
    %c145_113 = arith.constant 145 : index
    %179 = vector.load %arg8[%c0_112, %c145_113] : memref<16x512xf32, #tpu.memory_space<vmem>>, vector<16x256xf32>
    %cst_114 = arith.constant 0.000000e+00 : f32
    %180 = vector.shape_cast %18 : vector<1x256xi1> to vector<1x256xi1>
    %181 = vector.broadcast %180 : vector<1x256xi1> to vector<16x256xi1>
    %182 = vector.broadcast %cst_114 : f32 to vector<16x256xf32>
    %183 = arith.select %181, %179, %182 : vector<16x256xi1>, vector<16x256xf32>
    %c8_115 = arith.constant 8 : index
    %c0_116 = arith.constant 0 : index
    %c0_117 = arith.constant 0 : index
    %184 = vector.load %arg3[%c8_115, %c0_116, %c0_117] : memref<9x16x16xbf16, #tpu.memory_space<vmem>>, vector<1x16x16xbf16>
    %185 = vector.shape_cast %184 : vector<1x16x16xbf16> to vector<16x16xbf16>
    %186 = arith.truncf %183 : vector<16x256xf32> to vector<16x256xbf16>
    %cst_118 = arith.constant dense<0.000000e+00> : vector<16x256xf32>
    %187 = tpu.matmul %185, %186, %cst_118 {dimension_numbers = #tpu.dot_dimension_numbers<[1], [0], [0], [1], [0, 0, 1, 1], [], []>} : vector<16x16xbf16>, vector<16x256xbf16>, vector<16x256xf32> -> vector<16x256xf32>
    %188 = arith.addf %178, %187 : vector<16x256xf32>
    %c0_119 = arith.constant 0 : index
    %c0_120 = arith.constant 0 : index
    %189 = vector.load %arg4[%c0_119, %c0_120] : memref<16x1xf32, #tpu.memory_space<vmem>>, vector<16x1xf32>
    %190 = vector.broadcast %189 : vector<16x1xf32> to vector<16x256xf32>
    %191 = arith.addf %188, %190 : vector<16x256xf32>
    %cst_121 = arith.constant 0.000000e+00 : f32
    %192 = vector.broadcast %cst_121 : f32 to vector<16x256xf32>
    %193 = arith.maximumf %191, %192 : vector<16x256xf32>
    %194 = arith.addf %193, %108 : vector<16x256xf32>
    %195 = vector.extract_strided_slice %194 {offsets = [0, 0], sizes = [1, 256], strides = [1, 1]} : vector<16x256xf32> to vector<1x256xf32>
    %c0_122 = arith.constant 0 : index
    %c0_123 = arith.constant 0 : index
    %196 = vector.load %arg9[%c0_122, %c0_123] : memref<2x2048xf32, #tpu.memory_space<vmem>>, vector<1x256xf32>
    tpu.vector_store %arg9[%c0_122, %c0_123], %195 {strides = array<i32>} : memref<2x2048xf32, #tpu.memory_space<vmem>>, vector<1x256xf32>,
    %197 = vector.extract_strided_slice %194 {offsets = [1, 0], sizes = [1, 256], strides = [1, 1]} : vector<16x256xf32> to vector<1x256xf32>
    %c0_124 = arith.constant 0 : index
    %c256 = arith.constant 256 : index
    %198 = vector.load %arg9[%c0_124, %c256] : memref<2x2048xf32, #tpu.memory_space<vmem>>, vector<1x256xf32>
    tpu.vector_store %arg9[%c0_124, %c256], %197 {strides = array<i32>} : memref<2x2048xf32, #tpu.memory_space<vmem>>, vector<1x256xf32>,
    %199 = vector.extract_strided_slice %194 {offsets = [2, 0], sizes = [1, 256], strides = [1, 1]} : vector<16x256xf32> to vector<1x256xf32>
    %c0_125 = arith.constant 0 : index
    %c512 = arith.constant 512 : index
    %200 = vector.load %arg9[%c0_125, %c512] : memref<2x2048xf32, #tpu.memory_space<vmem>>, vector<1x256xf32>
    tpu.vector_store %arg9[%c0_125, %c512], %199 {strides = array<i32>} : memref<2x2048xf32, #tpu.memory_space<vmem>>, vector<1x256xf32>,
    %201 = vector.extract_strided_slice %194 {offsets = [3, 0], sizes = [1, 256], strides = [1, 1]} : vector<16x256xf32> to vector<1x256xf32>
    %c0_126 = arith.constant 0 : index
    %c768 = arith.constant 768 : index
    %202 = vector.load %arg9[%c0_126, %c768] : memref<2x2048xf32, #tpu.memory_space<vmem>>, vector<1x256xf32>
    tpu.vector_store %arg9[%c0_126, %c768], %201 {strides = array<i32>} : memref<2x2048xf32, #tpu.memory_space<vmem>>, vector<1x256xf32>,
    %203 = vector.extract_strided_slice %194 {offsets = [4, 0], sizes = [1, 256], strides = [1, 1]} : vector<16x256xf32> to vector<1x256xf32>
    %c0_127 = arith.constant 0 : index
    %c1024 = arith.constant 1024 : index
    %204 = vector.load %arg9[%c0_127, %c1024] : memref<2x2048xf32, #tpu.memory_space<vmem>>, vector<1x256xf32>
    tpu.vector_store %arg9[%c0_127, %c1024], %203 {strides = array<i32>} : memref<2x2048xf32, #tpu.memory_space<vmem>>, vector<1x256xf32>,
    %205 = vector.extract_strided_slice %194 {offsets = [5, 0], sizes = [1, 256], strides = [1, 1]} : vector<16x256xf32> to vector<1x256xf32>
    %c0_128 = arith.constant 0 : index
    %c1280 = arith.constant 1280 : index
    %206 = vector.load %arg9[%c0_128, %c1280] : memref<2x2048xf32, #tpu.memory_space<vmem>>, vector<1x256xf32>
    tpu.vector_store %arg9[%c0_128, %c1280], %205 {strides = array<i32>} : memref<2x2048xf32, #tpu.memory_space<vmem>>, vector<1x256xf32>,
    %207 = vector.extract_strided_slice %194 {offsets = [6, 0], sizes = [1, 256], strides = [1, 1]} : vector<16x256xf32> to vector<1x256xf32>
    %c0_129 = arith.constant 0 : index
    %c1536 = arith.constant 1536 : index
    %208 = vector.load %arg9[%c0_129, %c1536] : memref<2x2048xf32, #tpu.memory_space<vmem>>, vector<1x256xf32>
    tpu.vector_store %arg9[%c0_129, %c1536], %207 {strides = array<i32>} : memref<2x2048xf32, #tpu.memory_space<vmem>>, vector<1x256xf32>,
    %209 = vector.extract_strided_slice %194 {offsets = [7, 0], sizes = [1, 256], strides = [1, 1]} : vector<16x256xf32> to vector<1x256xf32>
    %c0_130 = arith.constant 0 : index
    %c1792 = arith.constant 1792 : index
    %210 = vector.load %arg9[%c0_130, %c1792] : memref<2x2048xf32, #tpu.memory_space<vmem>>, vector<1x256xf32>
    tpu.vector_store %arg9[%c0_130, %c1792], %209 {strides = array<i32>} : memref<2x2048xf32, #tpu.memory_space<vmem>>, vector<1x256xf32>,
    %211 = vector.extract_strided_slice %194 {offsets = [8, 0], sizes = [1, 256], strides = [1, 1]} : vector<16x256xf32> to vector<1x256xf32>
    %c1_131 = arith.constant 1 : index
    %c0_132 = arith.constant 0 : index
    %212 = vector.load %arg9[%c1_131, %c0_132] : memref<2x2048xf32, #tpu.memory_space<vmem>>, vector<1x256xf32>
    tpu.vector_store %arg9[%c1_131, %c0_132], %211 {strides = array<i32>} : memref<2x2048xf32, #tpu.memory_space<vmem>>, vector<1x256xf32>,
    %213 = vector.extract_strided_slice %194 {offsets = [9, 0], sizes = [1, 256], strides = [1, 1]} : vector<16x256xf32> to vector<1x256xf32>
    %c1_133 = arith.constant 1 : index
    %c256_134 = arith.constant 256 : index
    %214 = vector.load %arg9[%c1_133, %c256_134] : memref<2x2048xf32, #tpu.memory_space<vmem>>, vector<1x256xf32>
    tpu.vector_store %arg9[%c1_133, %c256_134], %213 {strides = array<i32>} : memref<2x2048xf32, #tpu.memory_space<vmem>>, vector<1x256xf32>,
    %215 = vector.extract_strided_slice %194 {offsets = [10, 0], sizes = [1, 256], strides = [1, 1]} : vector<16x256xf32> to vector<1x256xf32>
    %c1_135 = arith.constant 1 : index
    %c512_136 = arith.constant 512 : index
    %216 = vector.load %arg9[%c1_135, %c512_136] : memref<2x2048xf32, #tpu.memory_space<vmem>>, vector<1x256xf32>
    tpu.vector_store %arg9[%c1_135, %c512_136], %215 {strides = array<i32>} : memref<2x2048xf32, #tpu.memory_space<vmem>>, vector<1x256xf32>,
    %217 = vector.extract_strided_slice %194 {offsets = [11, 0], sizes = [1, 256], strides = [1, 1]} : vector<16x256xf32> to vector<1x256xf32>
    %c1_137 = arith.constant 1 : index
    %c768_138 = arith.constant 768 : index
    %218 = vector.load %arg9[%c1_137, %c768_138] : memref<2x2048xf32, #tpu.memory_space<vmem>>, vector<1x256xf32>
    tpu.vector_store %arg9[%c1_137, %c768_138], %217 {strides = array<i32>} : memref<2x2048xf32, #tpu.memory_space<vmem>>, vector<1x256xf32>,
    %219 = vector.extract_strided_slice %194 {offsets = [12, 0], sizes = [1, 256], strides = [1, 1]} : vector<16x256xf32> to vector<1x256xf32>
    %c1_139 = arith.constant 1 : index
    %c1024_140 = arith.constant 1024 : index
    %220 = vector.load %arg9[%c1_139, %c1024_140] : memref<2x2048xf32, #tpu.memory_space<vmem>>, vector<1x256xf32>
    tpu.vector_store %arg9[%c1_139, %c1024_140], %219 {strides = array<i32>} : memref<2x2048xf32, #tpu.memory_space<vmem>>, vector<1x256xf32>,
    %221 = vector.extract_strided_slice %194 {offsets = [13, 0], sizes = [1, 256], strides = [1, 1]} : vector<16x256xf32> to vector<1x256xf32>
    %c1_141 = arith.constant 1 : index
    %c1280_142 = arith.constant 1280 : index
    %222 = vector.load %arg9[%c1_141, %c1280_142] : memref<2x2048xf32, #tpu.memory_space<vmem>>, vector<1x256xf32>
    tpu.vector_store %arg9[%c1_141, %c1280_142], %221 {strides = array<i32>} : memref<2x2048xf32, #tpu.memory_space<vmem>>, vector<1x256xf32>,
    %223 = vector.extract_strided_slice %194 {offsets = [14, 0], sizes = [1, 256], strides = [1, 1]} : vector<16x256xf32> to vector<1x256xf32>
    %c1_143 = arith.constant 1 : index
    %c1536_144 = arith.constant 1536 : index
    %224 = vector.load %arg9[%c1_143, %c1536_144] : memref<2x2048xf32, #tpu.memory_space<vmem>>, vector<1x256xf32>
    tpu.vector_store %arg9[%c1_143, %c1536_144], %223 {strides = array<i32>} : memref<2x2048xf32, #tpu.memory_space<vmem>>, vector<1x256xf32>,
    %225 = vector.extract_strided_slice %194 {offsets = [15, 0], sizes = [1, 256], strides = [1, 1]} : vector<16x256xf32> to vector<1x256xf32>
    %c1_145 = arith.constant 1 : index
    %c1792_146 = arith.constant 1792 : index
    %226 = vector.load %arg9[%c1_145, %c1792_146] : memref<2x2048xf32, #tpu.memory_space<vmem>>, vector<1x256xf32>
    tpu.vector_store %arg9[%c1_145, %c1792_146], %225 {strides = array<i32>} : memref<2x2048xf32, #tpu.memory_space<vmem>>, vector<1x256xf32>,
    %c0_147 = arith.constant 0 : index
    %c0_148 = arith.constant 0 : index
    %227 = vector.load %arg9[%c0_147, %c0_148] : memref<2x2048xf32, #tpu.memory_space<vmem>>, vector<2x2048xf32>
    %228 = arith.truncf %227 : vector<2x2048xf32> to vector<2x2048xbf16>
    %c0_149 = arith.constant 0 : index
    %c0_150 = arith.constant 0 : index
    %229 = vector.load %arg5[%c0_149, %c0_150] : memref<2048x10xbf16, #tpu.memory_space<vmem>>, vector<2048x10xbf16>
    %cst_151 = arith.constant dense<0.000000e+00> : vector<2x10xf32>
    %230 = tpu.matmul %228, %229, %cst_151 {dimension_numbers = #tpu.dot_dimension_numbers<[1], [0], [0], [1], [0, 0, 1, 1], [], []>} : vector<2x2048xbf16>, vector<2048x10xbf16>, vector<2x10xf32> -> vector<2x10xf32>
    %c0_152 = arith.constant 0 : index
    %c0_153 = arith.constant 0 : index
    %231 = vector.load %arg6[%c0_152, %c0_153] : memref<1x10xf32, #tpu.memory_space<vmem>>, vector<1x10xf32>
    %232 = vector.broadcast %231 : vector<1x10xf32> to vector<2x10xf32>
    %233 = arith.addf %230, %232 : vector<2x10xf32>
    %c0_154 = arith.constant 0 : index
    %c0_155 = arith.constant 0 : index
    %234 = vector.load %arg7[%c0_154, %c0_155] : memref<2x10xf32, #tpu.memory_space<vmem>>, vector<2x10xf32>
    tpu.vector_store %arg7[%c0_154, %c0_155], %233 {strides = array<i32>} : memref<2x10xf32, #tpu.memory_space<vmem>>, vector<2x10xf32>,
    return
  }
}

</mosaic_0001>

<llo_original>
// kernel: my_resnet_forward.1
$region0: #{my_resnet_forward.1}
  #allocation0 [shape = 'u32[]', space=smem, size = 0x4, offset = 0x4, fixed_abs, tag = 'smem constant byte address 0x4 - core index']
  #allocation1 [shape = 'u32[144,128]{1,0:T(1,128)}', space=vmem, size = 0x12000, scoped, tag = 'internal scratch']
  #allocation2 [shape = 'f32[16,512]{1,0:T(8,128)}', space=vmem, size = 0x8000, scoped, tag = 'scratch operand']
  #allocation3 [shape = 'f32[2,2048]{1,0:T(2,128)}', space=vmem, size = 0x4000, scoped, tag = 'scratch operand']
  %s0 = inlined_call_operand.vmem [shape: f32[8,256], index: 0, kind: input, shape index: {}]
  %s1 = inlined_call_operand.vmem [shape: bf16[9,16,8], index: 1, kind: input, shape index: {}]
  %s2 = inlined_call_operand.vmem [shape: f32[16,1], index: 2, kind: input, shape index: {}]
  %s3 = inlined_call_operand.vmem [shape: bf16[9,16,16], index: 3, kind: input, shape index: {}]
  %s4 = inlined_call_operand.vmem [shape: f32[16,1], index: 4, kind: input, shape index: {}]
  %s5 = inlined_call_operand.vmem [shape: bf16[2048,10], index: 5, kind: input, shape index: {}]
  %s6 = inlined_call_operand.vmem [shape: f32[1,10], index: 6, kind: input, shape index: {}]
  %s7 = inlined_call_operand.hbm [shape: f32[2,10], index: 7, kind: output, shape index: {}]
  %s8 = sld [smem:[#allocation0]]
  $region38: #{my_resnet_forward.1} parent=0
    _
  %s10 = ssub.s32 1, %s8
  %s11 = scalar_select 0, %s10, %s8
  $region1: #{my_resnet_forward.1} parent=0
    #allocation4 [shape = 'u8[1024]{0}', space=vmem, size = 0x400, scoped, tag = 'output window, operand 0, single buffered']
    #allocation5 [shape = 's32[1]{0}', space=sflag, size = 0x4, scoped, tag = 'scoped memory for my_resnet_forward.1']
    %12 = vsyncpa [#allocation5], 0
    // Predicated region
    $region2: #{my_resnet_forward.1} parent=1 // pred_check
      _
    $region3: #{my_resnet_forward.1} parent=1 // pred_check_branch
      %14 = sbr.rel (0) target = $region5
    $region4: #{my_resnet_forward.1} parent=1 // pred_region
      _
    $region5: #{my_resnet_forward.1} parent=1 // pred_fallthru
      _
    // Predicated region
    $region6: #{my_resnet_forward.1} parent=1 // pred_check
      _
    $region7: #{my_resnet_forward.1} parent=1 // pred_check_branch
      %16 = sbr.rel (0) target = $region9
    $region8: #{my_resnet_forward.1} parent=1 // pred_region
      _
    $region9: #{my_resnet_forward.1} parent=1 // pred_fallthru
      _
    // Predicated region
    $region10: #{my_resnet_forward.1} parent=1 // pred_check
      _
    $region11: #{my_resnet_forward.1} parent=1 // pred_check_branch
      %18 = sbr.rel (0) target = $region13
    $region12: #{my_resnet_forward.1} parent=1 // pred_region
      _
    $region13: #{my_resnet_forward.1} parent=1 // pred_fallthru
      _
    // Predicated region
    $region14: #{my_resnet_forward.1} parent=1 // pred_check
      _
    $region15: #{my_resnet_forward.1} parent=1 // pred_check_branch
      %20 = sbr.rel (0) target = $region17
    $region16: #{my_resnet_forward.1} parent=1 // pred_region
      _
    $region17: #{my_resnet_forward.1} parent=1 // pred_fallthru
      _
    // Predicated region
    $region18: #{my_resnet_forward.1} parent=1 // pred_check
      _
    $region19: #{my_resnet_forward.1} parent=1 // pred_check_branch
      %22 = sbr.rel (0) target = $region21
    $region20: #{my_resnet_forward.1} parent=1 // pred_region
      _
    $region21: #{my_resnet_forward.1} parent=1 // pred_fallthru
      _
    // Predicated region
    $region22: #{my_resnet_forward.1} parent=1 // pred_check
      _
    $region23: #{my_resnet_forward.1} parent=1 // pred_check_branch
      %24 = sbr.rel (0) target = $region25
    $region24: #{my_resnet_forward.1} parent=1 // pred_region
      _
    $region25: #{my_resnet_forward.1} parent=1 // pred_fallthru
      _
    // Predicated region
    $region26: #{my_resnet_forward.1} parent=1 // pred_check
      _
    $region27: #{my_resnet_forward.1} parent=1 // pred_check_branch
      %26 = sbr.rel (0) target = $region29
    $region28: #{my_resnet_forward.1} parent=1 // pred_region
      _
    $region29: #{my_resnet_forward.1} parent=1 // pred_fallthru
      _
    %v28 = vlaneseq
    %v29 = vand.u32 %v28, 127
    %v30 = vadd.s32 %v29, 128
    %vm31 = vcmp.lt.s32.totalorder %v29, 0
    %v32 = vsub.s32 0, %v29
    %v33 = vsel %vm31, %v32, %v29
    %v34 = vshrl.u32 %v33, 4
    %v35 = vand.u32 %v33, 15
    %v36 = vsub.s32 0, %v35
    %v37 = vsel %vm31, %v36, %v35
    %vm38 = vcmp.lt.s32.totalorder %v30, 0
    %v39 = vsub.s32 0, %v30
    %v40 = vsel %vm38, %v39, %v30
    %v41 = vshrl.u32 %v40, 4
    %v42 = vand.u32 %v40, 15
    %v43 = vsub.s32 0, %v42
    %v44 = vsel %vm38, %v43, %v42
    %vm45 = vcmp.ne.s32.totalorder %v37, 0
    %vm46 = vcmp.ne.s32.totalorder %v44, 0
    %vm47 = vcmp.lt.s32.totalorder %v37, 0
    %vm48 = vcmp.lt.s32.totalorder %v44, 0
    %vm49 = vmand %vm47, %vm45
    %vm50 = vmand %vm48, %vm46
    %v51 = vadd.s32 %v37, 16
    %v52 = vadd.s32 %v44, 16
    %v53 = vsel %vm49, %v51, %v37
    %v54 = vsel %vm50, %v52, %v44
    %vm55 = vcmp.lt.s32.totalorder %v53, 15
    %vm56 = vcmp.lt.s32.totalorder %v54, 15
    %vm57 = vcmp.gt.s32.totalorder %v53, 0
    %vm58 = vcmp.gt.s32.totalorder %v54, 0
    %59 = vst [vmem:[#allocation2] sm:$0xff] 0.0
    %60 = vst [vmem:[#allocation2 + $0x8] sm:$0xff] 0.0
    %61 = vst [vmem:[#allocation2 + $0x10] sm:$0xff] 0.0
    %62 = vst [vmem:[#allocation2 + $0x18] sm:$0xff] 0.0
    %63 = vst [vmem:[#allocation2 + $0x20] sm:$0xff] 0.0
    %64 = vst [vmem:[#allocation2 + $0x28] sm:$0xff] 0.0
    %65 = vst [vmem:[#allocation2 + $0x30] sm:$0xff] 0.0
    %66 = vst [vmem:[#allocation2 + $0x38] sm:$0xff] 0.0
    %v67 = vld [vmem:[%s0] sm:$0xff]
    %v68 = vld [vmem:[%s0 + $0x8] sm:$0xff]
    %69 = vst [vmem:[#allocation2 + $0x8] sm:$0xff] %v67
    %70 = vst [vmem:[#allocation2 + $0x10] sm:$0xff] %v68
    %v71 = vld [vmem:[#allocation2] sm:$0xff]
    %v72 = vld [vmem:[#allocation2 + $0x8] sm:$0xff]
    %v73 = vld [vmem:[#allocation2 + $0x10] sm:$0xff]
    %v74 = vsel %vm57, 1, 0
    %v75 = vsel %vm58, 1, 0
    %vm76 = vcmp.eq.s32.totalorder %v74, 1
    %vm77 = vcmp.eq.s32.totalorder %v75, 1
    %81 = vrot.lane.b32.xlu0 %v71, 17
    %v82 = vpop.permute.xlu0 %81
    %83 = vrot.lane.b32.xlu0 %v72, 17
    %v84 = vpop.permute.xlu0 %83
    %85 = vrot.lane.b32.xlu0 %v73, 17
    %v86 = vpop.permute.xlu0 %85
    %vm87 = vcmask 138240
    %v88 = vsel %vm87, %v82, %v84
    %v89 = vsel %vm87, %v84, %v86
    %v92 = vsel %vm76, %v88, 0.0
    %v93 = vsel %vm77, %v89, 0.0
    %v94 = vld [vmem:[%s1] sm:$0xf]
    %v95 = vld [vmem:[%s1 + $0x4] sm:$0xf]
    %v96 = vpack.c.bf16 %v92, %v92
    %v97 = vpack.c.bf16 %v93, %v93
    %s98 = scalar_lea.vmem %s1, 8
    %v99 = vld [vmem:[%s98] sm:$0xf]
    %v100 = vld [vmem:[%s98 + $0x4] sm:$0xf]
    %v101 = vpack.c.bf16 %v71, %v71
    %v102 = vpack.c.bf16 %v72, %v72
    %v103 = vpack.c.bf16 %v73, %v73
    %v106 = vunpack.c.l.b16 %v99
    %v107 = vunpack.c.l.b16 %v100
    %v108 = vpack.c.b16 %v107, %v106
    %112 = vrot.lane.b32.xlu0 %v101, 16
    %v113 = vpop.permute.xlu0 %112
    %114 = vrot.lane.b32.xlu0 %v102, 16
    %v115 = vpop.permute.xlu0 %114
    %116 = vrot.lane.b32.xlu0 %v103, 16
    %v117 = vpop.permute.xlu0 %116
    %vm118 = vcmask 130048
    %v119 = vsel %vm118, %v113, %v115
    %v120 = vsel %vm118, %v115, %v117
    %vm121 = vcmask 64512
    %v123 = vsel %vm121, %v108, 0
    %vm125 = vcmask 1043456
    %v127 = vsel %vm125, %v119, 0
    %v130 = vsel %vm125, %v120, 0
    %132 = vmatprep.subr.bf16.mxu0 0
    %133 = vmatpush1.bf16.msra.mxu0 0
    %134 = vmatprep.subr.bf16.mxu0 0
    %135 = vmatpush1.bf16.msra.mxu0 0
    %136 = vmatprep.subr.bf16.mxu0 0
    %137 = vmatpush1.bf16.msra.mxu0 0
    %138 = vmatprep.subr.bf16.mxu0 0
    %139 = vmatpush1.bf16.msra.mxu0 0
    %140 = vmatprep.subr.bf16.mxu0 0
    %141 = vmatpush1.bf16.msra.mxu0 0
    %142 = vmatprep.subr.bf16.mxu0 0
    %143 = vmatpush1.bf16.msra.mxu0 0
    %144 = vmatprep.subr.bf16.mxu0 0
    %145 = vmatpush1.bf16.msra.mxu0 0
    %146 = vmatprep.subr.bf16.mxu0 %v130
    %147 = vmatpush1.bf16.msra.mxu0 %v127
    %148 = vmatprep.subr.bf16.mxu0 0
    %149 = vmatpush2.bf16.msra.mxu0 0
    %150 = vmatprep.subr.bf16.mxu0 0
    %151 = vmatpush2.bf16.msra.mxu0 0
    %152 = vmatprep.subr.bf16.mxu0 0
    %153 = vmatpush2.bf16.msra.mxu0 0
    %154 = vmatprep.subr.bf16.mxu0 0
    %155 = vmatpush2.bf16.msra.mxu0 0
    %156 = vmatprep.subr.bf16.mxu0 0
    %157 = vmatpush2.bf16.msra.mxu0 0
    %158 = vmatprep.subr.bf16.mxu0 0
    %159 = vmatpush2.bf16.msra.mxu0 0
    %160 = vmatprep.subr.bf16.mxu0 0
    %161 = vmatpush2.bf16.msra.mxu0 0
    %162 = vmatprep.subr.bf16.mxu0 0
    %163 = vmatpush2.bf16.msra.mxu0 0
    %164 = vmatprep.mubr.bf16.mxu0 0
    %165 = vmatmul.mubr.bf16.gmra.mxu0 %v123
    %v166 = vpop.f32.mrf.mxu0
    %v167 = vadd.f32 0.0, %v166
    %v168 = vpop.f32.mrf.mxu0
    %v169 = vadd.f32 0.0, %v168
    %v170 = vpop.f32.mrf.mxu0
    %v171 = vadd.f32 0.0, %v170
    %v172 = vpop.f32.mrf.mxu0
    %v173 = vadd.f32 0.0, %v172
    %174 = vdwg.mxu0
    %v177 = vunpack.c.l.b16 %v94
    %v178 = vunpack.c.l.b16 %v95
    %v179 = vpack.c.b16 %v178, %v177
    %v181 = vsel %vm121, %v179, 0
    %v184 = vsel %vm125, %v96, 0
    %v187 = vsel %vm125, %v97, 0
    %189 = vmatprep.subr.bf16.mxu0 0
    %190 = vmatpush1.bf16.msra.mxu0 0
    %191 = vmatprep.subr.bf16.mxu0 0
    %192 = vmatpush1.bf16.msra.mxu0 0
    %193 = vmatprep.subr.bf16.mxu0 0
    %194 = vmatpush1.bf16.msra.mxu0 0
    %195 = vmatprep.subr.bf16.mxu0 0
    %196 = vmatpush1.bf16.msra.mxu0 0
    %197 = vmatprep.subr.bf16.mxu0 0
    %198 = vmatpush1.bf16.msra.mxu0 0
    %199 = vmatprep.subr.bf16.mxu0 0
    %200 = vmatpush1.bf16.msra.mxu0 0
    %201 = vmatprep.subr.bf16.mxu0 0
    %202 = vmatpush1.bf16.msra.mxu0 0
    %203 = vmatprep.subr.bf16.mxu0 %v187
    %204 = vmatpush1.bf16.msra.mxu0 %v184
    %205 = vmatprep.subr.bf16.mxu0 0
    %206 = vmatpush2.bf16.msra.mxu0 0
    %207 = vmatprep.subr.bf16.mxu0 0
    %208 = vmatpush2.bf16.msra.mxu0 0
    %209 = vmatprep.subr.bf16.mxu0 0
    %210 = vmatpush2.bf16.msra.mxu0 0
    %211 = vmatprep.subr.bf16.mxu0 0
    %212 = vmatpush2.bf16.msra.mxu0 0
    %213 = vmatprep.subr.bf16.mxu0 0
    %214 = vmatpush2.bf16.msra.mxu0 0
    %215 = vmatprep.subr.bf16.mxu0 0
    %216 = vmatpush2.bf16.msra.mxu0 0
    %217 = vmatprep.subr.bf16.mxu0 0
    %218 = vmatpush2.bf16.msra.mxu0 0
    %219 = vmatprep.subr.bf16.mxu0 0
    %220 = vmatpush2.bf16.msra.mxu0 0
    %221 = vmatprep.mubr.bf16.mxu0 0
    %222 = vmatmul.mubr.bf16.gmra.mxu0 %v181
    %v223 = vpop.f32.mrf.mxu0
    %v224 = vadd.f32 %v167, %v223
    %v225 = vpop.f32.mrf.mxu0
    %v226 = vadd.f32 %v169, %v225
    %v227 = vpop.f32.mrf.mxu0
    %v228 = vadd.f32 %v171, %v227
    %v229 = vpop.f32.mrf.mxu0
    %v230 = vadd.f32 %v173, %v229
    %231 = vdwg.mxu0
    %v232 = vsel %vm55, 1, 0
    %v233 = vsel %vm56, 1, 0
    %vm234 = vcmp.eq.s32.totalorder %v232, 1
    %vm235 = vcmp.eq.s32.totalorder %v233, 1
    %236 = vrot.lane.b32.xlu0 %v71, 15
    %v237 = vpop.permute.xlu0 %236
    %238 = vrot.lane.b32.xlu0 %v72, 15
    %v239 = vpop.permute.xlu0 %238
    %240 = vrot.lane.b32.xlu0 %v73, 15
    %v241 = vpop.permute.xlu0 %240
    %vm242 = vcmask 121856
    %v243 = vsel %vm242, %v237, %v239
    %v244 = vsel %vm242, %v239, %v241
    %v247 = vsel %vm234, %v243, 0.0
    %v248 = vsel %vm235, %v244, 0.0
    %s249 = scalar_lea.vmem %s1, 16
    %v250 = vld [vmem:[%s249] sm:$0xf]
    %v251 = vld [vmem:[%s249 + $0x4] sm:$0xf]
    %v252 = vpack.c.bf16 %v247, %v247
    %v253 = vpack.c.bf16 %v248, %v248
    %v256 = vunpack.c.l.b16 %v250
    %v257 = vunpack.c.l.b16 %v251
    %v258 = vpack.c.b16 %v257, %v256
    %v260 = vsel %vm121, %v258, 0
    %v263 = vsel %vm125, %v252, 0
    %v266 = vsel %vm125, %v253, 0
    %268 = vmatprep.subr.bf16.mxu0 0
    %269 = vmatpush1.bf16.msra.mxu0 0
    %270 = vmatprep.subr.bf16.mxu0 0
    %271 = vmatpush1.bf16.msra.mxu0 0
    %272 = vmatprep.subr.bf16.mxu0 0
    %273 = vmatpush1.bf16.msra.mxu0 0
    %274 = vmatprep.subr.bf16.mxu0 0
    %275 = vmatpush1.bf16.msra.mxu0 0
    %276 = vmatprep.subr.bf16.mxu0 0
    %277 = vmatpush1.bf16.msra.mxu0 0
    %278 = vmatprep.subr.bf16.mxu0 0
    %279 = vmatpush1.bf16.msra.mxu0 0
    %280 = vmatprep.subr.bf16.mxu0 0
    %281 = vmatpush1.bf16.msra.mxu0 0
    %282 = vmatprep.subr.bf16.mxu0 %v266
    %283 = vmatpush1.bf16.msra.mxu0 %v263
    %284 = vmatprep.subr.bf16.mxu0 0
    %285 = vmatpush2.bf16.msra.mxu0 0
    %286 = vmatprep.subr.bf16.mxu0 0
    %287 = vmatpush2.bf16.msra.mxu0 0
    %288 = vmatprep.subr.bf16.mxu0 0
    %289 = vmatpush2.bf16.msra.mxu0 0
    %290 = vmatprep.subr.bf16.mxu0 0
    %291 = vmatpush2.bf16.msra.mxu0 0
    %292 = vmatprep.subr.bf16.mxu0 0
    %293 = vmatpush2.bf16.msra.mxu0 0
    %294 = vmatprep.subr.bf16.mxu0 0
    %295 = vmatpush2.bf16.msra.mxu0 0
    %296 = vmatprep.subr.bf16.mxu0 0
    %297 = vmatpush2.bf16.msra.mxu0 0
    %298 = vmatprep.subr.bf16.mxu0 0
    %299 = vmatpush2.bf16.msra.mxu0 0
    %300 = vmatprep.mubr.bf16.mxu0 0
    %301 = vmatmul.mubr.bf16.gmra.mxu0 %v260
    %v302 = vpop.f32.mrf.mxu0
    %v303 = vadd.f32 0.0, %v302
    %v304 = vpop.f32.mrf.mxu0
    %v305 = vadd.f32 0.0, %v304
    %v306 = vpop.f32.mrf.mxu0
    %v307 = vadd.f32 0.0, %v306
    %v308 = vpop.f32.mrf.mxu0
    %v309 = vadd.f32 0.0, %v308
    %310 = vdwg.mxu0
    %v311 = vadd.f32 %v224, %v303
    %v312 = vadd.f32 %v226, %v305
    %v313 = vadd.f32 %v228, %v307
    %v314 = vadd.f32 %v230, %v309
    %315 = vrot.lane.b32.xlu0 %v71, 1
    %v316 = vpop.permute.xlu0 %315
    %317 = vrot.lane.b32.xlu0 %v72, 1
    %v318 = vpop.permute.xlu0 %317
    %319 = vrot.lane.b32.xlu0 %v73, 1
    %v320 = vpop.permute.xlu0 %319
    %vm321 = vcmask 7168
    %v322 = vsel %vm321, %v316, %v318
    %v323 = vsel %vm321, %v318, %v320
    %v326 = vsel %vm76, %v322, 0.0
    %v327 = vsel %vm77, %v323, 0.0
    %s328 = scalar_lea.vmem %s1, 24
    %v329 = vld [vmem:[%s328] sm:$0xf]
    %v330 = vld [vmem:[%s328 + $0x4] sm:$0xf]
    %v331 = vpack.c.bf16 %v326, %v326
    %v332 = vpack.c.bf16 %v327, %v327
    %v335 = vunpack.c.l.b16 %v329
    %v336 = vunpack.c.l.b16 %v330
    %v337 = vpack.c.b16 %v336, %v335
    %v339 = vsel %vm121, %v337, 0
    %v342 = vsel %vm125, %v331, 0
    %v345 = vsel %vm125, %v332, 0
    %347 = vmatprep.subr.bf16.mxu0 0
    %348 = vmatpush1.bf16.msra.mxu0 0
    %349 = vmatprep.subr.bf16.mxu0 0
    %350 = vmatpush1.bf16.msra.mxu0 0
    %351 = vmatprep.subr.bf16.mxu0 0
    %352 = vmatpush1.bf16.msra.mxu0 0
    %353 = vmatprep.subr.bf16.mxu0 0
    %354 = vmatpush1.bf16.msra.mxu0 0
    %355 = vmatprep.subr.bf16.mxu0 0
    %356 = vmatpush1.bf16.msra.mxu0 0
    %357 = vmatprep.subr.bf16.mxu0 0
    %358 = vmatpush1.bf16.msra.mxu0 0
    %359 = vmatprep.subr.bf16.mxu0 0
    %360 = vmatpush1.bf16.msra.mxu0 0
    %361 = vmatprep.subr.bf16.mxu0 %v345
    %362 = vmatpush1.bf16.msra.mxu0 %v342
    %363 = vmatprep.subr.bf16.mxu0 0
    %364 = vmatpush2.bf16.msra.mxu0 0
    %365 = vmatprep.subr.bf16.mxu0 0
    %366 = vmatpush2.bf16.msra.mxu0 0
    %367 = vmatprep.subr.bf16.mxu0 0
    %368 = vmatpush2.bf16.msra.mxu0 0
    %369 = vmatprep.subr.bf16.mxu0 0
    %370 = vmatpush2.bf16.msra.mxu0 0
    %371 = vmatprep.subr.bf16.mxu0 0
    %372 = vmatpush2.bf16.msra.mxu0 0
    %373 = vmatprep.subr.bf16.mxu0 0
    %374 = vmatpush2.bf16.msra.mxu0 0
    %375 = vmatprep.subr.bf16.mxu0 0
    %376 = vmatpush2.bf16.msra.mxu0 0
    %377 = vmatprep.subr.bf16.mxu0 0
    %378 = vmatpush2.bf16.msra.mxu0 0
    %379 = vmatprep.mubr.bf16.mxu0 0
    %380 = vmatmul.mubr.bf16.gmra.mxu0 %v339
    %v381 = vpop.f32.mrf.mxu0
    %v382 = vadd.f32 0.0, %v381
    %v383 = vpop.f32.mrf.mxu0
    %v384 = vadd.f32 0.0, %v383
    %v385 = vpop.f32.mrf.mxu0
    %v386 = vadd.f32 0.0, %v385
    %v387 = vpop.f32.mrf.mxu0
    %v388 = vadd.f32 0.0, %v387
    %389 = vdwg.mxu0
    %v390 = vadd.f32 %v311, %v382
    %v391 = vadd.f32 %v312, %v384
    %v392 = vadd.f32 %v313, %v386
    %v393 = vadd.f32 %v314, %v388
    %s394 = scalar_lea.vmem %s1, 32
    %v395 = vld [vmem:[%s394] sm:$0xf]
    %v396 = vld [vmem:[%s394 + $0x4] sm:$0xf]
    %v399 = vunpack.c.l.b16 %v395
    %v400 = vunpack.c.l.b16 %v396
    %v401 = vpack.c.b16 %v400, %v399
    %v403 = vsel %vm121, %v401, 0
    %v406 = vsel %vm125, %v102, 0
    %v409 = vsel %vm125, %v103, 0
    %411 = vmatprep.subr.bf16.mxu0 0
    %412 = vmatpush1.bf16.msra.mxu0 0
    %413 = vmatprep.subr.bf16.mxu0 0
    %414 = vmatpush1.bf16.msra.mxu0 0
    %415 = vmatprep.subr.bf16.mxu0 0
    %416 = vmatpush1.bf16.msra.mxu0 0
    %417 = vmatprep.subr.bf16.mxu0 0
    %418 = vmatpush1.bf16.msra.mxu0 0
    %419 = vmatprep.subr.bf16.mxu0 0
    %420 = vmatpush1.bf16.msra.mxu0 0
    %421 = vmatprep.subr.bf16.mxu0 0
    %422 = vmatpush1.bf16.msra.mxu0 0
    %423 = vmatprep.subr.bf16.mxu0 0
    %424 = vmatpush1.bf16.msra.mxu0 0
    %425 = vmatprep.subr.bf16.mxu0 %v409
    %426 = vmatpush1.bf16.msra.mxu0 %v406
    %427 = vmatprep.subr.bf16.mxu0 0
    %428 = vmatpush2.bf16.msra.mxu0 0
    %429 = vmatprep.subr.bf16.mxu0 0
    %430 = vmatpush2.bf16.msra.mxu0 0
    %431 = vmatprep.subr.bf16.mxu0 0
    %432 = vmatpush2.bf16.msra.mxu0 0
    %433 = vmatprep.subr.bf16.mxu0 0
    %434 = vmatpush2.bf16.msra.mxu0 0
    %435 = vmatprep.subr.bf16.mxu0 0
    %436 = vmatpush2.bf16.msra.mxu0 0
    %437 = vmatprep.subr.bf16.mxu0 0
    %438 = vmatpush2.bf16.msra.mxu0 0
    %439 = vmatprep.subr.bf16.mxu0 0
    %440 = vmatpush2.bf16.msra.mxu0 0
    %441 = vmatprep.subr.bf16.mxu0 0
    %442 = vmatpush2.bf16.msra.mxu0 0
    %443 = vmatprep.mubr.bf16.mxu0 0
    %444 = vmatmul.mubr.bf16.gmra.mxu0 %v403
    %v445 = vpop.f32.mrf.mxu0
    %v446 = vadd.f32 0.0, %v445
    %v447 = vpop.f32.mrf.mxu0
    %v448 = vadd.f32 0.0, %v447
    %v449 = vpop.f32.mrf.mxu0
    %v450 = vadd.f32 0.0, %v449
    %v451 = vpop.f32.mrf.mxu0
    %v452 = vadd.f32 0.0, %v451
    %453 = vdwg.mxu0
    %v454 = vadd.f32 %v390, %v446
    %v455 = vadd.f32 %v391, %v448
    %v456 = vadd.f32 %v392, %v450
    %v457 = vadd.f32 %v393, %v452
    %v458 = vld [vmem:[#allocation2 + $0x8] sm:$0xff]
    %v459 = vld [vmem:[#allocation2 + $0x10] sm:$0xff]
    %v460 = vld [vmem:[#allocation2 + $0x18] sm:$0xff]
    %464 = vrot.lane.b32.xlu0 %v458, 127
    %v465 = vpop.permute.xlu0 %464
    %466 = vrot.lane.b32.xlu0 %v459, 127
    %v467 = vpop.permute.xlu0 %466
    %468 = vrot.lane.b32.xlu0 %v460, 127
    %v469 = vpop.permute.xlu0 %468
    %vm470 = vcmask 1039360
    %v471 = vsel %vm470, %v465, %v467
    %v472 = vsel %vm470, %v467, %v469
    %v475 = vsel %vm234, %v471, 0.0
    %v476 = vsel %vm235, %v472, 0.0
    %s477 = scalar_lea.vmem %s1, 40
    %v478 = vld [vmem:[%s477] sm:$0xf]
    %v479 = vld [vmem:[%s477 + $0x4] sm:$0xf]
    %v480 = vpack.c.bf16 %v475, %v475
    %v481 = vpack.c.bf16 %v476, %v476
    %v484 = vunpack.c.l.b16 %v478
    %v485 = vunpack.c.l.b16 %v479
    %v486 = vpack.c.b16 %v485, %v484
    %v488 = vsel %vm121, %v486, 0
    %v491 = vsel %vm125, %v480, 0
    %v494 = vsel %vm125, %v481, 0
    %496 = vmatprep.subr.bf16.mxu0 0
    %497 = vmatpush1.bf16.msra.mxu0 0
    %498 = vmatprep.subr.bf16.mxu0 0
    %499 = vmatpush1.bf16.msra.mxu0 0
    %500 = vmatprep.subr.bf16.mxu0 0
    %501 = vmatpush1.bf16.msra.mxu0 0
    %502 = vmatprep.subr.bf16.mxu0 0
    %503 = vmatpush1.bf16.msra.mxu0 0
    %504 = vmatprep.subr.bf16.mxu0 0
    %505 = vmatpush1.bf16.msra.mxu0 0
    %506 = vmatprep.subr.bf16.mxu0 0
    %507 = vmatpush1.bf16.msra.mxu0 0
    %508 = vmatprep.subr.bf16.mxu0 0
    %509 = vmatpush1.bf16.msra.mxu0 0
    %510 = vmatprep.subr.bf16.mxu0 %v494
    %511 = vmatpush1.bf16.msra.mxu0 %v491
    %512 = vmatprep.subr.bf16.mxu0 0
    %513 = vmatpush2.bf16.msra.mxu0 0
    %514 = vmatprep.subr.bf16.mxu0 0
    %515 = vmatpush2.bf16.msra.mxu0 0
    %516 = vmatprep.subr.bf16.mxu0 0
    %517 = vmatpush2.bf16.msra.mxu0 0
    %518 = vmatprep.subr.bf16.mxu0 0
    %519 = vmatpush2.bf16.msra.mxu0 0
    %520 = vmatprep.subr.bf16.mxu0 0
    %521 = vmatpush2.bf16.msra.mxu0 0
    %522 = vmatprep.subr.bf16.mxu0 0
    %523 = vmatpush2.bf16.msra.mxu0 0
    %524 = vmatprep.subr.bf16.mxu0 0
    %525 = vmatpush2.bf16.msra.mxu0 0
    %526 = vmatprep.subr.bf16.mxu0 0
    %527 = vmatpush2.bf16.msra.mxu0 0
    %528 = vmatprep.mubr.bf16.mxu0 0
    %529 = vmatmul.mubr.bf16.gmra.mxu0 %v488
    %v530 = vpop.f32.mrf.mxu0
    %v531 = vadd.f32 0.0, %v530
    %v532 = vpop.f32.mrf.mxu0
    %v533 = vadd.f32 0.0, %v532
    %v534 = vpop.f32.mrf.mxu0
    %v535 = vadd.f32 0.0, %v534
    %v536 = vpop.f32.mrf.mxu0
    %v537 = vadd.f32 0.0, %v536
    %538 = vdwg.mxu0
    %v539 = vadd.f32 %v454, %v531
    %v540 = vadd.f32 %v455, %v533
    %v541 = vadd.f32 %v456, %v535
    %v542 = vadd.f32 %v457, %v537
    %543 = vrot.lane.b32.xlu0 %v458, 113
    %v544 = vpop.permute.xlu0 %543
    %545 = vrot.lane.b32.xlu0 %v459, 113
    %v546 = vpop.permute.xlu0 %545
    %547 = vrot.lane.b32.xlu0 %v460, 113
    %v548 = vpop.permute.xlu0 %547
    %vm549 = vcmask 924672
    %v550 = vsel %vm549, %v544, %v546
    %v551 = vsel %vm549, %v546, %v548
    %v554 = vsel %vm76, %v550, 0.0
    %v555 = vsel %vm77, %v551, 0.0
    %s556 = scalar_lea.vmem %s1, 48
    %v557 = vld [vmem:[%s556] sm:$0xf]
    %v558 = vld [vmem:[%s556 + $0x4] sm:$0xf]
    %v559 = vpack.c.bf16 %v554, %v554
    %v560 = vpack.c.bf16 %v555, %v555
    %v563 = vunpack.c.l.b16 %v557
    %v564 = vunpack.c.l.b16 %v558
    %v565 = vpack.c.b16 %v564, %v563
    %v567 = vsel %vm121, %v565, 0
    %v570 = vsel %vm125, %v559, 0
    %v573 = vsel %vm125, %v560, 0
    %575 = vmatprep.subr.bf16.mxu0 0
    %576 = vmatpush1.bf16.msra.mxu0 0
    %577 = vmatprep.subr.bf16.mxu0 0
    %578 = vmatpush1.bf16.msra.mxu0 0
    %579 = vmatprep.subr.bf16.mxu0 0
    %580 = vmatpush1.bf16.msra.mxu0 0
    %581 = vmatprep.subr.bf16.mxu0 0
    %582 = vmatpush1.bf16.msra.mxu0 0
    %583 = vmatprep.subr.bf16.mxu0 0
    %584 = vmatpush1.bf16.msra.mxu0 0
    %585 = vmatprep.subr.bf16.mxu0 0
    %586 = vmatpush1.bf16.msra.mxu0 0
    %587 = vmatprep.subr.bf16.mxu0 0
    %588 = vmatpush1.bf16.msra.mxu0 0
    %589 = vmatprep.subr.bf16.mxu0 %v573
    %590 = vmatpush1.bf16.msra.mxu0 %v570
    %591 = vmatprep.subr.bf16.mxu0 0
    %592 = vmatpush2.bf16.msra.mxu0 0
    %593 = vmatprep.subr.bf16.mxu0 0
    %594 = vmatpush2.bf16.msra.mxu0 0
    %595 = vmatprep.subr.bf16.mxu0 0
    %596 = vmatpush2.bf16.msra.mxu0 0
    %597 = vmatprep.subr.bf16.mxu0 0
    %598 = vmatpush2.bf16.msra.mxu0 0
    %599 = vmatprep.subr.bf16.mxu0 0
    %600 = vmatpush2.bf16.msra.mxu0 0
    %601 = vmatprep.subr.bf16.mxu0 0
    %602 = vmatpush2.bf16.msra.mxu0 0
    %603 = vmatprep.subr.bf16.mxu0 0
    %604 = vmatpush2.bf16.msra.mxu0 0
    %605 = vmatprep.subr.bf16.mxu0 0
    %606 = vmatpush2.bf16.msra.mxu0 0
    %607 = vmatprep.mubr.bf16.mxu0 0
    %608 = vmatmul.mubr.bf16.gmra.mxu0 %v567
    %v609 = vpop.f32.mrf.mxu0
    %v610 = vadd.f32 0.0, %v609
    %v611 = vpop.f32.mrf.mxu0
    %v612 = vadd.f32 0.0, %v611
    %v613 = vpop.f32.mrf.mxu0
    %v614 = vadd.f32 0.0, %v613
    %v615 = vpop.f32.mrf.mxu0
    %v616 = vadd.f32 0.0, %v615
    %617 = vdwg.mxu0
    %v618 = vadd.f32 %v539, %v610
    %v619 = vadd.f32 %v540, %v612
    %v620 = vadd.f32 %v541, %v614
    %v621 = vadd.f32 %v542, %v616
    %s622 = scalar_lea.vmem %s1, 56
    %v623 = vld [vmem:[%s622] sm:$0xf]
    %v624 = vld [vmem:[%s622 + $0x4] sm:$0xf]
    %v625 = vpack.c.bf16 %v458, %v458
    %v626 = vpack.c.bf16 %v459, %v459
    %v627 = vpack.c.bf16 %v460, %v460
    %v630 = vunpack.c.l.b16 %v623
    %v631 = vunpack.c.l.b16 %v624
    %v632 = vpack.c.b16 %v631, %v630
    %636 = vrot.lane.b32.xlu0 %v625, 112
    %v637 = vpop.permute.xlu0 %636
    %638 = vrot.lane.b32.xlu0 %v626, 112
    %v639 = vpop.permute.xlu0 %638
    %640 = vrot.lane.b32.xlu0 %v627, 112
    %v641 = vpop.permute.xlu0 %640
    %vm642 = vcmask 916480
    %v643 = vsel %vm642, %v637, %v639
    %v644 = vsel %vm642, %v639, %v641
    %v646 = vsel %vm121, %v632, 0
    %v649 = vsel %vm125, %v643, 0
    %v652 = vsel %vm125, %v644, 0
    %654 = vmatprep.subr.bf16.mxu0 0
    %655 = vmatpush1.bf16.msra.mxu0 0
    %656 = vmatprep.subr.bf16.mxu0 0
    %657 = vmatpush1.bf16.msra.mxu0 0
    %658 = vmatprep.subr.bf16.mxu0 0
    %659 = vmatpush1.bf16.msra.mxu0 0
    %660 = vmatprep.subr.bf16.mxu0 0
    %661 = vmatpush1.bf16.msra.mxu0 0
    %662 = vmatprep.subr.bf16.mxu0 0
    %663 = vmatpush1.bf16.msra.mxu0 0
    %664 = vmatprep.subr.bf16.mxu0 0
    %665 = vmatpush1.bf16.msra.mxu0 0
    %666 = vmatprep.subr.bf16.mxu0 0
    %667 = vmatpush1.bf16.msra.mxu0 0
    %668 = vmatprep.subr.bf16.mxu0 %v652
    %669 = vmatpush1.bf16.msra.mxu0 %v649
    %670 = vmatprep.subr.bf16.mxu0 0
    %671 = vmatpush2.bf16.msra.mxu0 0
    %672 = vmatprep.subr.bf16.mxu0 0
    %673 = vmatpush2.bf16.msra.mxu0 0
    %674 = vmatprep.subr.bf16.mxu0 0
    %675 = vmatpush2.bf16.msra.mxu0 0
    %676 = vmatprep.subr.bf16.mxu0 0
    %677 = vmatpush2.bf16.msra.mxu0 0
    %678 = vmatprep.subr.bf16.mxu0 0
    %679 = vmatpush2.bf16.msra.mxu0 0
    %680 = vmatprep.subr.bf16.mxu0 0
    %681 = vmatpush2.bf16.msra.mxu0 0
    %682 = vmatprep.subr.bf16.mxu0 0
    %683 = vmatpush2.bf16.msra.mxu0 0
    %684 = vmatprep.subr.bf16.mxu0 0
    %685 = vmatpush2.bf16.msra.mxu0 0
    %686 = vmatprep.mubr.bf16.mxu0 0
    %687 = vmatmul.mubr.bf16.gmra.mxu0 %v646
    %v688 = vpop.f32.mrf.mxu0
    %v689 = vadd.f32 0.0, %v688
    %v690 = vpop.f32.mrf.mxu0
    %v691 = vadd.f32 0.0, %v690
    %v692 = vpop.f32.mrf.mxu0
    %v693 = vadd.f32 0.0, %v692
    %v694 = vpop.f32.mrf.mxu0
    %v695 = vadd.f32 0.0, %v694
    %696 = vdwg.mxu0
    %v697 = vadd.f32 %v618, %v689
    %v698 = vadd.f32 %v619, %v691
    %v699 = vadd.f32 %v620, %v693
    %v700 = vadd.f32 %v621, %v695
    %701 = vrot.lane.b32.xlu0 %v458, 111
    %v702 = vpop.permute.xlu0 %701
    %703 = vrot.lane.b32.xlu0 %v459, 111
    %v704 = vpop.permute.xlu0 %703
    %705 = vrot.lane.b32.xlu0 %v460, 111
    %v706 = vpop.permute.xlu0 %705
    %vm707 = vcmask 908288
    %v708 = vsel %vm707, %v702, %v704
    %v709 = vsel %vm707, %v704, %v706
    %v712 = vsel %vm234, %v708, 0.0
    %v713 = vsel %vm235, %v709, 0.0
    %s714 = scalar_lea.vmem %s1, 64
    %v715 = vld [vmem:[%s714] sm:$0xf]
    %v716 = vld [vmem:[%s714 + $0x4] sm:$0xf]
    %v717 = vpack.c.bf16 %v712, %v712
    %v718 = vpack.c.bf16 %v713, %v713
    %v721 = vunpack.c.l.b16 %v715
    %v722 = vunpack.c.l.b16 %v716
    %v723 = vpack.c.b16 %v722, %v721
    %v725 = vsel %vm121, %v723, 0
    %v728 = vsel %vm125, %v717, 0
    %v731 = vsel %vm125, %v718, 0
    %733 = vmatprep.subr.bf16.mxu0 0
    %734 = vmatpush1.bf16.msra.mxu0 0
    %735 = vmatprep.subr.bf16.mxu0 0
    %736 = vmatpush1.bf16.msra.mxu0 0
    %737 = vmatprep.subr.bf16.mxu0 0
    %738 = vmatpush1.bf16.msra.mxu0 0
    %739 = vmatprep.subr.bf16.mxu0 0
    %740 = vmatpush1.bf16.msra.mxu0 0
    %741 = vmatprep.subr.bf16.mxu0 0
    %742 = vmatpush1.bf16.msra.mxu0 0
    %743 = vmatprep.subr.bf16.mxu0 0
    %744 = vmatpush1.bf16.msra.mxu0 0
    %745 = vmatprep.subr.bf16.mxu0 0
    %746 = vmatpush1.bf16.msra.mxu0 0
    %747 = vmatprep.subr.bf16.mxu0 %v731
    %748 = vmatpush1.bf16.msra.mxu0 %v728
    %749 = vmatprep.subr.bf16.mxu0 0
    %750 = vmatpush2.bf16.msra.mxu0 0
    %751 = vmatprep.subr.bf16.mxu0 0
    %752 = vmatpush2.bf16.msra.mxu0 0
    %753 = vmatprep.subr.bf16.mxu0 0
    %754 = vmatpush2.bf16.msra.mxu0 0
    %755 = vmatprep.subr.bf16.mxu0 0
    %756 = vmatpush2.bf16.msra.mxu0 0
    %757 = vmatprep.subr.bf16.mxu0 0
    %758 = vmatpush2.bf16.msra.mxu0 0
    %759 = vmatprep.subr.bf16.mxu0 0
    %760 = vmatpush2.bf16.msra.mxu0 0
    %761 = vmatprep.subr.bf16.mxu0 0
    %762 = vmatpush2.bf16.msra.mxu0 0
    %763 = vmatprep.subr.bf16.mxu0 0
    %764 = vmatpush2.bf16.msra.mxu0 0
    %765 = vmatprep.mubr.bf16.mxu0 0
    %766 = vmatmul.mubr.bf16.gmra.mxu0 %v725
    %v767 = vpop.f32.mrf.mxu0
    %v768 = vadd.f32 0.0, %v767
    %v769 = vpop.f32.mrf.mxu0
    %v770 = vadd.f32 0.0, %v769
    %v771 = vpop.f32.mrf.mxu0
    %v772 = vadd.f32 0.0, %v771
    %v773 = vpop.f32.mrf.mxu0
    %v774 = vadd.f32 0.0, %v773
    %775 = vdwg.mxu0
    %v776 = vadd.f32 %v697, %v768
    %v777 = vadd.f32 %v698, %v770
    %v778 = vadd.f32 %v699, %v772
    %v779 = vadd.f32 %v700, %v774
    %v780 = vld [vmem:[%s2] sm:$0xff]
    %v781 = vld [vmem:[%s2 + $0x8] sm:$0xff]
    %783 = vset.pattern.permute.xlu0 0
    %784 = vperm.xlu0 %783, %v780
    %v785 = vpop.permute.xlu0 %784
    %788 = vset.pattern.permute.xlu0 0
    %789 = vperm.xlu0 %788, %v781
    %v790 = vpop.permute.xlu0 %789
    %v792 = vadd.f32 %v776, %v785
    %v793 = vadd.f32 %v777, %v785
    %v794 = vadd.f32 %v778, %v790
    %v795 = vadd.f32 %v779, %v790
    %v796 = vmax.f32 %v792, 0.0
    %v797 = vmax.f32 %v793, 0.0
    %v798 = vmax.f32 %v794, 0.0
    %v799 = vmax.f32 %v795, 0.0
    %800 = vst [vmem:[#allocation2 + $0x8] sm:$0xff] %v796
    %801 = vst [vmem:[#allocation2 + $0x10] sm:$0xff] %v797
    %802 = vst [vmem:[#allocation2 + $0x28] sm:$0xff] %v798
    %803 = vst [vmem:[#allocation2 + $0x30] sm:$0xff] %v799
    %v804 = vld [vmem:[#allocation2] sm:$0xff]
    %v805 = vld [vmem:[#allocation2 + $0x8] sm:$0xff]
    %v806 = vld [vmem:[#allocation2 + $0x10] sm:$0xff]
    %v807 = vld [vmem:[#allocation2 + $0x20] sm:$0xff]
    %v808 = vld [vmem:[#allocation2 + $0x28] sm:$0xff]
    %v809 = vld [vmem:[#allocation2 + $0x30] sm:$0xff]
    %816 = vrot.lane.b32.xlu0 %v804, 17
    %v817 = vpop.permute.xlu0 %816
    %818 = vrot.lane.b32.xlu0 %v805, 17
    %v819 = vpop.permute.xlu0 %818
    %820 = vrot.lane.b32.xlu0 %v806, 17
    %v821 = vpop.permute.xlu0 %820
    %822 = vrot.lane.b32.xlu0 %v807, 17
    %v823 = vpop.permute.xlu0 %822
    %824 = vrot.lane.b32.xlu0 %v808, 17
    %v825 = vpop.permute.xlu0 %824
    %826 = vrot.lane.b32.xlu0 %v809, 17
    %v827 = vpop.permute.xlu0 %826
    %v828 = vsel %vm87, %v817, %v819
    %v829 = vsel %vm87, %v819, %v821
    %v830 = vsel %vm87, %v823, %v825
    %v831 = vsel %vm87, %v825, %v827
    %v836 = vsel %vm76, %v828, 0.0
    %v837 = vsel %vm77, %v829, 0.0
    %v838 = vsel %vm76, %v830, 0.0
    %v839 = vsel %vm77, %v831, 0.0
    %v840 = vld [vmem:[%s3] sm:$0xf]
    %v841 = vld [vmem:[%s3 + $0x4] sm:$0xf]
    %v842 = vpack.c.bf16 %v838, %v836
    %v843 = vpack.c.bf16 %v839, %v837
    %s844 = scalar_lea.vmem %s3, 8
    %v845 = vld [vmem:[%s844] sm:$0xf]
    %v846 = vld [vmem:[%s844 + $0x4] sm:$0xf]
    %v847 = vpack.c.bf16 %v807, %v804
    %v848 = vpack.c.bf16 %v808, %v805
    %v849 = vpack.c.bf16 %v809, %v806
    %v852 = vunpack.c.l.b16 %v845
    %v853 = vunpack.c.l.b16 %v846
    %v854 = vpack.c.b16 %v853, %v852
    %858 = vrot.lane.b32.xlu0 %v847, 16
    %v859 = vpop.permute.xlu0 %858
    %860 = vrot.lane.b32.xlu0 %v848, 16
    %v861 = vpop.permute.xlu0 %860
    %862 = vrot.lane.b32.xlu0 %v849, 16
    %v863 = vpop.permute.xlu0 %862
    %v864 = vsel %vm118, %v859, %v861
    %v865 = vsel %vm118, %v861, %v863
    %vm868 = vcmask 130048
    %v870 = vsel %vm868, %v854, 0
    %872 = vmatprep.subr.bf16.mxu0 0
    %873 = vmatpush1.bf16.msra.mxu0 0
    %874 = vmatprep.subr.bf16.mxu0 0
    %875 = vmatpush1.bf16.msra.mxu0 0
    %876 = vmatprep.subr.bf16.mxu0 0
    %877 = vmatpush1.bf16.msra.mxu0 0
    %878 = vmatprep.subr.bf16.mxu0 0
    %879 = vmatpush1.bf16.msra.mxu0 0
    %880 = vmatprep.subr.bf16.mxu0 0
    %881 = vmatpush1.bf16.msra.mxu0 0
    %882 = vmatprep.subr.bf16.mxu0 0
    %883 = vmatpush1.bf16.msra.mxu0 0
    %884 = vmatprep.subr.bf16.mxu0 0
    %885 = vmatpush1.bf16.msra.mxu0 0
    %886 = vmatprep.subr.bf16.mxu0 %v865
    %887 = vmatpush1.bf16.msra.mxu0 %v864
    %888 = vmatprep.subr.bf16.mxu0 0
    %889 = vmatpush2.bf16.msra.mxu0 0
    %890 = vmatprep.subr.bf16.mxu0 0
    %891 = vmatpush2.bf16.msra.mxu0 0
    %892 = vmatprep.subr.bf16.mxu0 0
    %893 = vmatpush2.bf16.msra.mxu0 0
    %894 = vmatprep.subr.bf16.mxu0 0
    %895 = vmatpush2.bf16.msra.mxu0 0
    %896 = vmatprep.subr.bf16.mxu0 0
    %897 = vmatpush2.bf16.msra.mxu0 0
    %898 = vmatprep.subr.bf16.mxu0 0
    %899 = vmatpush2.bf16.msra.mxu0 0
    %900 = vmatprep.subr.bf16.mxu0 0
    %901 = vmatpush2.bf16.msra.mxu0 0
    %902 = vmatprep.subr.bf16.mxu0 0
    %903 = vmatpush2.bf16.msra.mxu0 0
    %904 = vmatprep.mubr.bf16.mxu0 0
    %905 = vmatmul.mubr.bf16.gmra.mxu0 %v870
    %v906 = vpop.f32.mrf.mxu0
    %v907 = vadd.f32 0.0, %v906
    %v908 = vpop.f32.mrf.mxu0
    %v909 = vadd.f32 0.0, %v908
    %v910 = vpop.f32.mrf.mxu0
    %v911 = vadd.f32 0.0, %v910
    %v912 = vpop.f32.mrf.mxu0
    %v913 = vadd.f32 0.0, %v912
    %914 = vdwg.mxu0
    %v917 = vunpack.c.l.b16 %v840
    %v918 = vunpack.c.l.b16 %v841
    %v919 = vpack.c.b16 %v918, %v917
    %v921 = vsel %vm868, %v919, 0
    %923 = vmatprep.subr.bf16.mxu0 0
    %924 = vmatpush1.bf16.msra.mxu0 0
    %925 = vmatprep.subr.bf16.mxu0 0
    %926 = vmatpush1.bf16.msra.mxu0 0
    %927 = vmatprep.subr.bf16.mxu0 0
    %928 = vmatpush1.bf16.msra.mxu0 0
    %929 = vmatprep.subr.bf16.mxu0 0
    %930 = vmatpush1.bf16.msra.mxu0 0
    %931 = vmatprep.subr.bf16.mxu0 0
    %932 = vmatpush1.bf16.msra.mxu0 0
    %933 = vmatprep.subr.bf16.mxu0 0
    %934 = vmatpush1.bf16.msra.mxu0 0
    %935 = vmatprep.subr.bf16.mxu0 0
    %936 = vmatpush1.bf16.msra.mxu0 0
    %937 = vmatprep.subr.bf16.mxu0 %v843
    %938 = vmatpush1.bf16.msra.mxu0 %v842
    %939 = vmatprep.subr.bf16.mxu0 0
    %940 = vmatpush2.bf16.msra.mxu0 0
    %941 = vmatprep.subr.bf16.mxu0 0
    %942 = vmatpush2.bf16.msra.mxu0 0
    %943 = vmatprep.subr.bf16.mxu0 0
    %944 = vmatpush2.bf16.msra.mxu0 0
    %945 = vmatprep.subr.bf16.mxu0 0
    %946 = vmatpush2.bf16.msra.mxu0 0
    %947 = vmatprep.subr.bf16.mxu0 0
    %948 = vmatpush2.bf16.msra.mxu0 0
    %949 = vmatprep.subr.bf16.mxu0 0
    %950 = vmatpush2.bf16.msra.mxu0 0
    %951 = vmatprep.subr.bf16.mxu0 0
    %952 = vmatpush2.bf16.msra.mxu0 0
    %953 = vmatprep.subr.bf16.mxu0 0
    %954 = vmatpush2.bf16.msra.mxu0 0
    %955 = vmatprep.mubr.bf16.mxu0 0
    %956 = vmatmul.mubr.bf16.gmra.mxu0 %v921
    %v957 = vpop.f32.mrf.mxu0
    %v958 = vadd.f32 %v907, %v957
    %v959 = vpop.f32.mrf.mxu0
    %v960 = vadd.f32 %v909, %v959
    %v961 = vpop.f32.mrf.mxu0
    %v962 = vadd.f32 %v911, %v961
    %v963 = vpop.f32.mrf.mxu0
    %v964 = vadd.f32 %v913, %v963
    %965 = vdwg.mxu0
    %966 = vrot.lane.b32.xlu0 %v804, 15
    %v967 = vpop.permute.xlu0 %966
    %968 = vrot.lane.b32.xlu0 %v805, 15
    %v969 = vpop.permute.xlu0 %968
    %970 = vrot.lane.b32.xlu0 %v806, 15
    %v971 = vpop.permute.xlu0 %970
    %972 = vrot.lane.b32.xlu0 %v807, 15
    %v973 = vpop.permute.xlu0 %972
    %974 = vrot.lane.b32.xlu0 %v808, 15
    %v975 = vpop.permute.xlu0 %974
    %976 = vrot.lane.b32.xlu0 %v809, 15
    %v977 = vpop.permute.xlu0 %976
    %v978 = vsel %vm242, %v967, %v969
    %v979 = vsel %vm242, %v969, %v971
    %v980 = vsel %vm242, %v973, %v975
    %v981 = vsel %vm242, %v975, %v977
    %v986 = vsel %vm234, %v978, 0.0
    %v987 = vsel %vm235, %v979, 0.0
    %v988 = vsel %vm234, %v980, 0.0
    %v989 = vsel %vm235, %v981, 0.0
    %s990 = scalar_lea.vmem %s3, 16
    %v991 = vld [vmem:[%s990] sm:$0xf]
    %v992 = vld [vmem:[%s990 + $0x4] sm:$0xf]
    %v993 = vpack.c.bf16 %v988, %v986
    %v994 = vpack.c.bf16 %v989, %v987
    %v997 = vunpack.c.l.b16 %v991
    %v998 = vunpack.c.l.b16 %v992
    %v999 = vpack.c.b16 %v998, %v997
    %v1001 = vsel %vm868, %v999, 0
    %1003 = vmatprep.subr.bf16.mxu0 0
    %1004 = vmatpush1.bf16.msra.mxu0 0
    %1005 = vmatprep.subr.bf16.mxu0 0
    %1006 = vmatpush1.bf16.msra.mxu0 0
    %1007 = vmatprep.subr.bf16.mxu0 0
    %1008 = vmatpush1.bf16.msra.mxu0 0
    %1009 = vmatprep.subr.bf16.mxu0 0
    %1010 = vmatpush1.bf16.msra.mxu0 0
    %1011 = vmatprep.subr.bf16.mxu0 0
    %1012 = vmatpush1.bf16.msra.mxu0 0
    %1013 = vmatprep.subr.bf16.mxu0 0
    %1014 = vmatpush1.bf16.msra.mxu0 0
    %1015 = vmatprep.subr.bf16.mxu0 0
    %1016 = vmatpush1.bf16.msra.mxu0 0
    %1017 = vmatprep.subr.bf16.mxu0 %v994
    %1018 = vmatpush1.bf16.msra.mxu0 %v993
    %1019 = vmatprep.subr.bf16.mxu0 0
    %1020 = vmatpush2.bf16.msra.mxu0 0
    %1021 = vmatprep.subr.bf16.mxu0 0
    %1022 = vmatpush2.bf16.msra.mxu0 0
    %1023 = vmatprep.subr.bf16.mxu0 0
    %1024 = vmatpush2.bf16.msra.mxu0 0
    %1025 = vmatprep.subr.bf16.mxu0 0
    %1026 = vmatpush2.bf16.msra.mxu0 0
    %1027 = vmatprep.subr.bf16.mxu0 0
    %1028 = vmatpush2.bf16.msra.mxu0 0
    %1029 = vmatprep.subr.bf16.mxu0 0
    %1030 = vmatpush2.bf16.msra.mxu0 0
    %1031 = vmatprep.subr.bf16.mxu0 0
    %1032 = vmatpush2.bf16.msra.mxu0 0
    %1033 = vmatprep.subr.bf16.mxu0 0
    %1034 = vmatpush2.bf16.msra.mxu0 0
    %1035 = vmatprep.mubr.bf16.mxu0 0
    %1036 = vmatmul.mubr.bf16.gmra.mxu0 %v1001
    %v1037 = vpop.f32.mrf.mxu0
    %v1038 = vadd.f32 0.0, %v1037
    %v1039 = vpop.f32.mrf.mxu0
    %v1040 = vadd.f32 0.0, %v1039
    %v1041 = vpop.f32.mrf.mxu0
    %v1042 = vadd.f32 0.0, %v1041
    %v1043 = vpop.f32.mrf.mxu0
    %v1044 = vadd.f32 0.0, %v1043
    %1045 = vdwg.mxu0
    %v1046 = vadd.f32 %v958, %v1038
    %v1047 = vadd.f32 %v960, %v1040
    %v1048 = vadd.f32 %v962, %v1042
    %v1049 = vadd.f32 %v964, %v1044
    %1050 = vrot.lane.b32.xlu0 %v804, 1
    %v1051 = vpop.permute.xlu0 %1050
    %1052 = vrot.lane.b32.xlu0 %v805, 1
    %v1053 = vpop.permute.xlu0 %1052
    %1054 = vrot.lane.b32.xlu0 %v806, 1
    %v1055 = vpop.permute.xlu0 %1054
    %1056 = vrot.lane.b32.xlu0 %v807, 1
    %v1057 = vpop.permute.xlu0 %1056
    %1058 = vrot.lane.b32.xlu0 %v808, 1
    %v1059 = vpop.permute.xlu0 %1058
    %1060 = vrot.lane.b32.xlu0 %v809, 1
    %v1061 = vpop.permute.xlu0 %1060
    %v1062 = vsel %vm321, %v1051, %v1053
    %v1063 = vsel %vm321, %v1053, %v1055
    %v1064 = vsel %vm321, %v1057, %v1059
    %v1065 = vsel %vm321, %v1059, %v1061
    %v1070 = vsel %vm76, %v1062, 0.0
    %v1071 = vsel %vm77, %v1063, 0.0
    %v1072 = vsel %vm76, %v1064, 0.0
    %v1073 = vsel %vm77, %v1065, 0.0
    %s1074 = scalar_lea.vmem %s3, 24
    %v1075 = vld [vmem:[%s1074] sm:$0xf]
    %v1076 = vld [vmem:[%s1074 + $0x4] sm:$0xf]
    %v1077 = vpack.c.bf16 %v1072, %v1070
    %v1078 = vpack.c.bf16 %v1073, %v1071
    %v1081 = vunpack.c.l.b16 %v1075
    %v1082 = vunpack.c.l.b16 %v1076
    %v1083 = vpack.c.b16 %v1082, %v1081
    %v1085 = vsel %vm868, %v1083, 0
    %1087 = vmatprep.subr.bf16.mxu0 0
    %1088 = vmatpush1.bf16.msra.mxu0 0
    %1089 = vmatprep.subr.bf16.mxu0 0
    %1090 = vmatpush1.bf16.msra.mxu0 0
    %1091 = vmatprep.subr.bf16.mxu0 0
    %1092 = vmatpush1.bf16.msra.mxu0 0
    %1093 = vmatprep.subr.bf16.mxu0 0
    %1094 = vmatpush1.bf16.msra.mxu0 0
    %1095 = vmatprep.subr.bf16.mxu0 0
    %1096 = vmatpush1.bf16.msra.mxu0 0
    %1097 = vmatprep.subr.bf16.mxu0 0
    %1098 = vmatpush1.bf16.msra.mxu0 0
    %1099 = vmatprep.subr.bf16.mxu0 0
    %1100 = vmatpush1.bf16.msra.mxu0 0
    %1101 = vmatprep.subr.bf16.mxu0 %v1078
    %1102 = vmatpush1.bf16.msra.mxu0 %v1077
    %1103 = vmatprep.subr.bf16.mxu0 0
    %1104 = vmatpush2.bf16.msra.mxu0 0
    %1105 = vmatprep.subr.bf16.mxu0 0
    %1106 = vmatpush2.bf16.msra.mxu0 0
    %1107 = vmatprep.subr.bf16.mxu0 0
    %1108 = vmatpush2.bf16.msra.mxu0 0
    %1109 = vmatprep.subr.bf16.mxu0 0
    %1110 = vmatpush2.bf16.msra.mxu0 0
    %1111 = vmatprep.subr.bf16.mxu0 0
    %1112 = vmatpush2.bf16.msra.mxu0 0
    %1113 = vmatprep.subr.bf16.mxu0 0
    %1114 = vmatpush2.bf16.msra.mxu0 0
    %1115 = vmatprep.subr.bf16.mxu0 0
    %1116 = vmatpush2.bf16.msra.mxu0 0
    %1117 = vmatprep.subr.bf16.mxu0 0
    %1118 = vmatpush2.bf16.msra.mxu0 0
    %1119 = vmatprep.mubr.bf16.mxu0 0
    %1120 = vmatmul.mubr.bf16.gmra.mxu0 %v1085
    %v1121 = vpop.f32.mrf.mxu0
    %v1122 = vadd.f32 0.0, %v1121
    %v1123 = vpop.f32.mrf.mxu0
    %v1124 = vadd.f32 0.0, %v1123
    %v1125 = vpop.f32.mrf.mxu0
    %v1126 = vadd.f32 0.0, %v1125
    %v1127 = vpop.f32.mrf.mxu0
    %v1128 = vadd.f32 0.0, %v1127
    %1129 = vdwg.mxu0
    %v1130 = vadd.f32 %v1046, %v1122
    %v1131 = vadd.f32 %v1047, %v1124
    %v1132 = vadd.f32 %v1048, %v1126
    %v1133 = vadd.f32 %v1049, %v1128
    %s1134 = scalar_lea.vmem %s3, 32
    %v1135 = vld [vmem:[%s1134] sm:$0xf]
    %v1136 = vld [vmem:[%s1134 + $0x4] sm:$0xf]
    %v1139 = vunpack.c.l.b16 %v1135
    %v1140 = vunpack.c.l.b16 %v1136
    %v1141 = vpack.c.b16 %v1140, %v1139
    %v1143 = vsel %vm868, %v1141, 0
    %1145 = vmatprep.subr.bf16.mxu0 0
    %1146 = vmatpush1.bf16.msra.mxu0 0
    %1147 = vmatprep.subr.bf16.mxu0 0
    %1148 = vmatpush1.bf16.msra.mxu0 0
    %1149 = vmatprep.subr.bf16.mxu0 0
    %1150 = vmatpush1.bf16.msra.mxu0 0
    %1151 = vmatprep.subr.bf16.mxu0 0
    %1152 = vmatpush1.bf16.msra.mxu0 0
    %1153 = vmatprep.subr.bf16.mxu0 0
    %1154 = vmatpush1.bf16.msra.mxu0 0
    %1155 = vmatprep.subr.bf16.mxu0 0
    %1156 = vmatpush1.bf16.msra.mxu0 0
    %1157 = vmatprep.subr.bf16.mxu0 0
    %1158 = vmatpush1.bf16.msra.mxu0 0
    %1159 = vmatprep.subr.bf16.mxu0 %v849
    %1160 = vmatpush1.bf16.msra.mxu0 %v848
    %1161 = vmatprep.subr.bf16.mxu0 0
    %1162 = vmatpush2.bf16.msra.mxu0 0
    %1163 = vmatprep.subr.bf16.mxu0 0
    %1164 = vmatpush2.bf16.msra.mxu0 0
    %1165 = vmatprep.subr.bf16.mxu0 0
    %1166 = vmatpush2.bf16.msra.mxu0 0
    %1167 = vmatprep.subr.bf16.mxu0 0
    %1168 = vmatpush2.bf16.msra.mxu0 0
    %1169 = vmatprep.subr.bf16.mxu0 0
    %1170 = vmatpush2.bf16.msra.mxu0 0
    %1171 = vmatprep.subr.bf16.mxu0 0
    %1172 = vmatpush2.bf16.msra.mxu0 0
    %1173 = vmatprep.subr.bf16.mxu0 0
    %1174 = vmatpush2.bf16.msra.mxu0 0
    %1175 = vmatprep.subr.bf16.mxu0 0
    %1176 = vmatpush2.bf16.msra.mxu0 0
    %1177 = vmatprep.mubr.bf16.mxu0 0
    %1178 = vmatmul.mubr.bf16.gmra.mxu0 %v1143
    %v1179 = vpop.f32.mrf.mxu0
    %v1180 = vadd.f32 0.0, %v1179
    %v1181 = vpop.f32.mrf.mxu0
    %v1182 = vadd.f32 0.0, %v1181
    %v1183 = vpop.f32.mrf.mxu0
    %v1184 = vadd.f32 0.0, %v1183
    %v1185 = vpop.f32.mrf.mxu0
    %v1186 = vadd.f32 0.0, %v1185
    %1187 = vdwg.mxu0
    %v1188 = vadd.f32 %v1130, %v1180
    %v1189 = vadd.f32 %v1131, %v1182
    %v1190 = vadd.f32 %v1132, %v1184
    %v1191 = vadd.f32 %v1133, %v1186
    %v1192 = vld [vmem:[#allocation2 + $0x8] sm:$0xff]
    %v1193 = vld [vmem:[#allocation2 + $0x10] sm:$0xff]
    %v1194 = vld [vmem:[#allocation2 + $0x18] sm:$0xff]
    %v1195 = vld [vmem:[#allocation2 + $0x28] sm:$0xff]
    %v1196 = vld [vmem:[#allocation2 + $0x30] sm:$0xff]
    %v1197 = vld [vmem:[#allocation2 + $0x38] sm:$0xff]
    %1204 = vrot.lane.b32.xlu0 %v1192, 127
    %v1205 = vpop.permute.xlu0 %1204
    %1206 = vrot.lane.b32.xlu0 %v1193, 127
    %v1207 = vpop.permute.xlu0 %1206
    %1208 = vrot.lane.b32.xlu0 %v1194, 127
    %v1209 = vpop.permute.xlu0 %1208
    %1210 = vrot.lane.b32.xlu0 %v1195, 127
    %v1211 = vpop.permute.xlu0 %1210
    %1212 = vrot.lane.b32.xlu0 %v1196, 127
    %v1213 = vpop.permute.xlu0 %1212
    %1214 = vrot.lane.b32.xlu0 %v1197, 127
    %v1215 = vpop.permute.xlu0 %1214
    %v1216 = vsel %vm470, %v1205, %v1207
    %v1217 = vsel %vm470, %v1207, %v1209
    %v1218 = vsel %vm470, %v1211, %v1213
    %v1219 = vsel %vm470, %v1213, %v1215
    %v1224 = vsel %vm234, %v1216, 0.0
    %v1225 = vsel %vm235, %v1217, 0.0
    %v1226 = vsel %vm234, %v1218, 0.0
    %v1227 = vsel %vm235, %v1219, 0.0
    %s1228 = scalar_lea.vmem %s3, 40
    %v1229 = vld [vmem:[%s1228] sm:$0xf]
    %v1230 = vld [vmem:[%s1228 + $0x4] sm:$0xf]
    %v1231 = vpack.c.bf16 %v1226, %v1224
    %v1232 = vpack.c.bf16 %v1227, %v1225
    %v1235 = vunpack.c.l.b16 %v1229
    %v1236 = vunpack.c.l.b16 %v1230
    %v1237 = vpack.c.b16 %v1236, %v1235
    %v1239 = vsel %vm868, %v1237, 0
    %1241 = vmatprep.subr.bf16.mxu0 0
    %1242 = vmatpush1.bf16.msra.mxu0 0
    %1243 = vmatprep.subr.bf16.mxu0 0
    %1244 = vmatpush1.bf16.msra.mxu0 0
    %1245 = vmatprep.subr.bf16.mxu0 0
    %1246 = vmatpush1.bf16.msra.mxu0 0
    %1247 = vmatprep.subr.bf16.mxu0 0
    %1248 = vmatpush1.bf16.msra.mxu0 0
    %1249 = vmatprep.subr.bf16.mxu0 0
    %1250 = vmatpush1.bf16.msra.mxu0 0
    %1251 = vmatprep.subr.bf16.mxu0 0
    %1252 = vmatpush1.bf16.msra.mxu0 0
    %1253 = vmatprep.subr.bf16.mxu0 0
    %1254 = vmatpush1.bf16.msra.mxu0 0
    %1255 = vmatprep.subr.bf16.mxu0 %v1232
    %1256 = vmatpush1.bf16.msra.mxu0 %v1231
    %1257 = vmatprep.subr.bf16.mxu0 0
    %1258 = vmatpush2.bf16.msra.mxu0 0
    %1259 = vmatprep.subr.bf16.mxu0 0
    %1260 = vmatpush2.bf16.msra.mxu0 0
    %1261 = vmatprep.subr.bf16.mxu0 0
    %1262 = vmatpush2.bf16.msra.mxu0 0
    %1263 = vmatprep.subr.bf16.mxu0 0
    %1264 = vmatpush2.bf16.msra.mxu0 0
    %1265 = vmatprep.subr.bf16.mxu0 0
    %1266 = vmatpush2.bf16.msra.mxu0 0
    %1267 = vmatprep.subr.bf16.mxu0 0
    %1268 = vmatpush2.bf16.msra.mxu0 0
    %1269 = vmatprep.subr.bf16.mxu0 0
    %1270 = vmatpush2.bf16.msra.mxu0 0
    %1271 = vmatprep.subr.bf16.mxu0 0
    %1272 = vmatpush2.bf16.msra.mxu0 0
    %1273 = vmatprep.mubr.bf16.mxu0 0
    %1274 = vmatmul.mubr.bf16.gmra.mxu0 %v1239
    %v1275 = vpop.f32.mrf.mxu0
    %v1276 = vadd.f32 0.0, %v1275
    %v1277 = vpop.f32.mrf.mxu0
    %v1278 = vadd.f32 0.0, %v1277
    %v1279 = vpop.f32.mrf.mxu0
    %v1280 = vadd.f32 0.0, %v1279
    %v1281 = vpop.f32.mrf.mxu0
    %v1282 = vadd.f32 0.0, %v1281
    %1283 = vdwg.mxu0
    %v1284 = vadd.f32 %v1188, %v1276
    %v1285 = vadd.f32 %v1189, %v1278
    %v1286 = vadd.f32 %v1190, %v1280
    %v1287 = vadd.f32 %v1191, %v1282
    %1288 = vrot.lane.b32.xlu0 %v1192, 113
    %v1289 = vpop.permute.xlu0 %1288
    %1290 = vrot.lane.b32.xlu0 %v1193, 113
    %v1291 = vpop.permute.xlu0 %1290
    %1292 = vrot.lane.b32.xlu0 %v1194, 113
    %v1293 = vpop.permute.xlu0 %1292
    %1294 = vrot.lane.b32.xlu0 %v1195, 113
    %v1295 = vpop.permute.xlu0 %1294
    %1296 = vrot.lane.b32.xlu0 %v1196, 113
    %v1297 = vpop.permute.xlu0 %1296
    %1298 = vrot.lane.b32.xlu0 %v1197, 113
    %v1299 = vpop.permute.xlu0 %1298
    %v1300 = vsel %vm549, %v1289, %v1291
    %v1301 = vsel %vm549, %v1291, %v1293
    %v1302 = vsel %vm549, %v1295, %v1297
    %v1303 = vsel %vm549, %v1297, %v1299
    %v1308 = vsel %vm76, %v1300, 0.0
    %v1309 = vsel %vm77, %v1301, 0.0
    %v1310 = vsel %vm76, %v1302, 0.0
    %v1311 = vsel %vm77, %v1303, 0.0
    %s1312 = scalar_lea.vmem %s3, 48
    %v1313 = vld [vmem:[%s1312] sm:$0xf]
    %v1314 = vld [vmem:[%s1312 + $0x4] sm:$0xf]
    %v1315 = vpack.c.bf16 %v1310, %v1308
    %v1316 = vpack.c.bf16 %v1311, %v1309
    %v1319 = vunpack.c.l.b16 %v1313
    %v1320 = vunpack.c.l.b16 %v1314
    %v1321 = vpack.c.b16 %v1320, %v1319
    %v1323 = vsel %vm868, %v1321, 0
    %1325 = vmatprep.subr.bf16.mxu0 0
    %1326 = vmatpush1.bf16.msra.mxu0 0
    %1327 = vmatprep.subr.bf16.mxu0 0
    %1328 = vmatpush1.bf16.msra.mxu0 0
    %1329 = vmatprep.subr.bf16.mxu0 0
    %1330 = vmatpush1.bf16.msra.mxu0 0
    %1331 = vmatprep.subr.bf16.mxu0 0
    %1332 = vmatpush1.bf16.msra.mxu0 0
    %1333 = vmatprep.subr.bf16.mxu0 0
    %1334 = vmatpush1.bf16.msra.mxu0 0
    %1335 = vmatprep.subr.bf16.mxu0 0
    %1336 = vmatpush1.bf16.msra.mxu0 0
    %1337 = vmatprep.subr.bf16.mxu0 0
    %1338 = vmatpush1.bf16.msra.mxu0 0
    %1339 = vmatprep.subr.bf16.mxu0 %v1316
    %1340 = vmatpush1.bf16.msra.mxu0 %v1315
    %1341 = vmatprep.subr.bf16.mxu0 0
    %1342 = vmatpush2.bf16.msra.mxu0 0
    %1343 = vmatprep.subr.bf16.mxu0 0
    %1344 = vmatpush2.bf16.msra.mxu0 0
    %1345 = vmatprep.subr.bf16.mxu0 0
    %1346 = vmatpush2.bf16.msra.mxu0 0
    %1347 = vmatprep.subr.bf16.mxu0 0
    %1348 = vmatpush2.bf16.msra.mxu0 0
    %1349 = vmatprep.subr.bf16.mxu0 0
    %1350 = vmatpush2.bf16.msra.mxu0 0
    %1351 = vmatprep.subr.bf16.mxu0 0
    %1352 = vmatpush2.bf16.msra.mxu0 0
    %1353 = vmatprep.subr.bf16.mxu0 0
    %1354 = vmatpush2.bf16.msra.mxu0 0
    %1355 = vmatprep.subr.bf16.mxu0 0
    %1356 = vmatpush2.bf16.msra.mxu0 0
    %1357 = vmatprep.mubr.bf16.mxu0 0
    %1358 = vmatmul.mubr.bf16.gmra.mxu0 %v1323
    %v1359 = vpop.f32.mrf.mxu0
    %v1360 = vadd.f32 0.0, %v1359
    %v1361 = vpop.f32.mrf.mxu0
    %v1362 = vadd.f32 0.0, %v1361
    %v1363 = vpop.f32.mrf.mxu0
    %v1364 = vadd.f32 0.0, %v1363
    %v1365 = vpop.f32.mrf.mxu0
    %v1366 = vadd.f32 0.0, %v1365
    %1367 = vdwg.mxu0
    %v1368 = vadd.f32 %v1284, %v1360
    %v1369 = vadd.f32 %v1285, %v1362
    %v1370 = vadd.f32 %v1286, %v1364
    %v1371 = vadd.f32 %v1287, %v1366
    %s1372 = scalar_lea.vmem %s3, 56
    %v1373 = vld [vmem:[%s1372] sm:$0xf]
    %v1374 = vld [vmem:[%s1372 + $0x4] sm:$0xf]
    %v1375 = vpack.c.bf16 %v1195, %v1192
    %v1376 = vpack.c.bf16 %v1196, %v1193
    %v1377 = vpack.c.bf16 %v1197, %v1194
    %v1380 = vunpack.c.l.b16 %v1373
    %v1381 = vunpack.c.l.b16 %v1374
    %v1382 = vpack.c.b16 %v1381, %v1380
    %1386 = vrot.lane.b32.xlu0 %v1375, 112
    %v1387 = vpop.permute.xlu0 %1386
    %1388 = vrot.lane.b32.xlu0 %v1376, 112
    %v1389 = vpop.permute.xlu0 %1388
    %1390 = vrot.lane.b32.xlu0 %v1377, 112
    %v1391 = vpop.permute.xlu0 %1390
    %v1392 = vsel %vm642, %v1387, %v1389
    %v1393 = vsel %vm642, %v1389, %v1391
    %v1397 = vsel %vm868, %v1382, 0
    %1399 = vmatprep.subr.bf16.mxu0 0
    %1400 = vmatpush1.bf16.msra.mxu0 0
    %1401 = vmatprep.subr.bf16.mxu0 0
    %1402 = vmatpush1.bf16.msra.mxu0 0
    %1403 = vmatprep.subr.bf16.mxu0 0
    %1404 = vmatpush1.bf16.msra.mxu0 0
    %1405 = vmatprep.subr.bf16.mxu0 0
    %1406 = vmatpush1.bf16.msra.mxu0 0
    %1407 = vmatprep.subr.bf16.mxu0 0
    %1408 = vmatpush1.bf16.msra.mxu0 0
    %1409 = vmatprep.subr.bf16.mxu0 0
    %1410 = vmatpush1.bf16.msra.mxu0 0
    %1411 = vmatprep.subr.bf16.mxu0 0
    %1412 = vmatpush1.bf16.msra.mxu0 0
    %1413 = vmatprep.subr.bf16.mxu0 %v1393
    %1414 = vmatpush1.bf16.msra.mxu0 %v1392
    %1415 = vmatprep.subr.bf16.mxu0 0
    %1416 = vmatpush2.bf16.msra.mxu0 0
    %1417 = vmatprep.subr.bf16.mxu0 0
    %1418 = vmatpush2.bf16.msra.mxu0 0
    %1419 = vmatprep.subr.bf16.mxu0 0
    %1420 = vmatpush2.bf16.msra.mxu0 0
    %1421 = vmatprep.subr.bf16.mxu0 0
    %1422 = vmatpush2.bf16.msra.mxu0 0
    %1423 = vmatprep.subr.bf16.mxu0 0
    %1424 = vmatpush2.bf16.msra.mxu0 0
    %1425 = vmatprep.subr.bf16.mxu0 0
    %1426 = vmatpush2.bf16.msra.mxu0 0
    %1427 = vmatprep.subr.bf16.mxu0 0
    %1428 = vmatpush2.bf16.msra.mxu0 0
    %1429 = vmatprep.subr.bf16.mxu0 0
    %1430 = vmatpush2.bf16.msra.mxu0 0
    %1431 = vmatprep.mubr.bf16.mxu0 0
    %1432 = vmatmul.mubr.bf16.gmra.mxu0 %v1397
    %v1433 = vpop.f32.mrf.mxu0
    %v1434 = vadd.f32 0.0, %v1433
    %v1435 = vpop.f32.mrf.mxu0
    %v1436 = vadd.f32 0.0, %v1435
    %v1437 = vpop.f32.mrf.mxu0
    %v1438 = vadd.f32 0.0, %v1437
    %v1439 = vpop.f32.mrf.mxu0
    %v1440 = vadd.f32 0.0, %v1439
    %1441 = vdwg.mxu0
    %v1442 = vadd.f32 %v1368, %v1434
    %v1443 = vadd.f32 %v1369, %v1436
    %v1444 = vadd.f32 %v1370, %v1438
    %v1445 = vadd.f32 %v1371, %v1440
    %1446 = vrot.lane.b32.xlu0 %v1192, 111
    %v1447 = vpop.permute.xlu0 %1446
    %1448 = vrot.lane.b32.xlu0 %v1193, 111
    %v1449 = vpop.permute.xlu0 %1448
    %1450 = vrot.lane.b32.xlu0 %v1194, 111
    %v1451 = vpop.permute.xlu0 %1450
    %1452 = vrot.lane.b32.xlu0 %v1195, 111
    %v1453 = vpop.permute.xlu0 %1452
    %1454 = vrot.lane.b32.xlu0 %v1196, 111
    %v1455 = vpop.permute.xlu0 %1454
    %1456 = vrot.lane.b32.xlu0 %v1197, 111
    %v1457 = vpop.permute.xlu0 %1456
    %v1458 = vsel %vm707, %v1447, %v1449
    %v1459 = vsel %vm707, %v1449, %v1451
    %v1460 = vsel %vm707, %v1453, %v1455
    %v1461 = vsel %vm707, %v1455, %v1457
    %v1466 = vsel %vm234, %v1458, 0.0
    %v1467 = vsel %vm235, %v1459, 0.0
    %v1468 = vsel %vm234, %v1460, 0.0
    %v1469 = vsel %vm235, %v1461, 0.0
    %s1470 = scalar_lea.vmem %s3, 64
    %v1471 = vld [vmem:[%s1470] sm:$0xf]
    %v1472 = vld [vmem:[%s1470 + $0x4] sm:$0xf]
    %v1473 = vpack.c.bf16 %v1468, %v1466
    %v1474 = vpack.c.bf16 %v1469, %v1467
    %v1477 = vunpack.c.l.b16 %v1471
    %v1478 = vunpack.c.l.b16 %v1472
    %v1479 = vpack.c.b16 %v1478, %v1477
    %v1481 = vsel %vm868, %v1479, 0
    %1483 = vmatprep.subr.bf16.mxu0 0
    %1484 = vmatpush1.bf16.msra.mxu0 0
    %1485 = vmatprep.subr.bf16.mxu0 0
    %1486 = vmatpush1.bf16.msra.mxu0 0
    %1487 = vmatprep.subr.bf16.mxu0 0
    %1488 = vmatpush1.bf16.msra.mxu0 0
    %1489 = vmatprep.subr.bf16.mxu0 0
    %1490 = vmatpush1.bf16.msra.mxu0 0
    %1491 = vmatprep.subr.bf16.mxu0 0
    %1492 = vmatpush1.bf16.msra.mxu0 0
    %1493 = vmatprep.subr.bf16.mxu0 0
    %1494 = vmatpush1.bf16.msra.mxu0 0
    %1495 = vmatprep.subr.bf16.mxu0 0
    %1496 = vmatpush1.bf16.msra.mxu0 0
    %1497 = vmatprep.subr.bf16.mxu0 %v1474
    %1498 = vmatpush1.bf16.msra.mxu0 %v1473
    %1499 = vmatprep.subr.bf16.mxu0 0
    %1500 = vmatpush2.bf16.msra.mxu0 0
    %1501 = vmatprep.subr.bf16.mxu0 0
    %1502 = vmatpush2.bf16.msra.mxu0 0
    %1503 = vmatprep.subr.bf16.mxu0 0
    %1504 = vmatpush2.bf16.msra.mxu0 0
    %1505 = vmatprep.subr.bf16.mxu0 0
    %1506 = vmatpush2.bf16.msra.mxu0 0
    %1507 = vmatprep.subr.bf16.mxu0 0
    %1508 = vmatpush2.bf16.msra.mxu0 0
    %1509 = vmatprep.subr.bf16.mxu0 0
    %1510 = vmatpush2.bf16.msra.mxu0 0
    %1511 = vmatprep.subr.bf16.mxu0 0
    %1512 = vmatpush2.bf16.msra.mxu0 0
    %1513 = vmatprep.subr.bf16.mxu0 0
    %1514 = vmatpush2.bf16.msra.mxu0 0
    %1515 = vmatprep.mubr.bf16.mxu0 0
    %1516 = vmatmul.mubr.bf16.gmra.mxu0 %v1481
    %v1517 = vpop.f32.mrf.mxu0
    %v1518 = vadd.f32 0.0, %v1517
    %v1519 = vpop.f32.mrf.mxu0
    %v1520 = vadd.f32 0.0, %v1519
    %v1521 = vpop.f32.mrf.mxu0
    %v1522 = vadd.f32 0.0, %v1521
    %v1523 = vpop.f32.mrf.mxu0
    %v1524 = vadd.f32 0.0, %v1523
    %1525 = vdwg.mxu0
    %v1526 = vadd.f32 %v1442, %v1518
    %v1527 = vadd.f32 %v1443, %v1520
    %v1528 = vadd.f32 %v1444, %v1522
    %v1529 = vadd.f32 %v1445, %v1524
    %v1530 = vld [vmem:[%s4] sm:$0xff]
    %v1531 = vld [vmem:[%s4 + $0x8] sm:$0xff]
    %1533 = vset.pattern.permute.xlu0 0
    %1534 = vperm.xlu0 %1533, %v1530
    %v1535 = vpop.permute.xlu0 %1534
    %1538 = vset.pattern.permute.xlu0 0
    %1539 = vperm.xlu0 %1538, %v1531
    %v1540 = vpop.permute.xlu0 %1539
    %v1542 = vadd.f32 %v1526, %v1535
    %v1543 = vadd.f32 %v1527, %v1535
    %v1544 = vadd.f32 %v1528, %v1540
    %v1545 = vadd.f32 %v1529, %v1540
    %v1546 = vmax.f32 %v1542, 0.0
    %v1547 = vmax.f32 %v1543, 0.0
    %v1548 = vmax.f32 %v1544, 0.0
    %v1549 = vmax.f32 %v1545, 0.0
    %v1550 = vadd.f32 %v1546, %v796
    %v1551 = vadd.f32 %v1547, %v797
    %v1552 = vadd.f32 %v1548, %v798
    %v1553 = vadd.f32 %v1549, %v799
    %v1556 = vcombine.low %v1550, %v1551
    %v1558 = vunpack.c.l.s4 1966171168
    %v1559 = vunpack.c.0.s8 %v1558
    %v1560 = vlaneseq
    %v1561 = vshrl.u32 %v1560, 7
    %v1562 = vsub.s32 %v1559, %v1561
    %v1563 = vrot.slane %v1556, %v1562
    %v1565 = vunpack.c.l.s4 1966171168
    %v1566 = vunpack.c.0.s8 %v1565
    %v1567 = vlaneseq
    %v1568 = vshrl.u32 %v1567, 7
    %v1569 = vsub.s32 %v1566, %v1568
    %v1570 = vrot.slane %v1563, %v1569
    %v1572 = vlaneseq
    %vm1573 = vcmp.ge.s32.totalorder %v1572, 0
    %vm1574 = vcmp.lt.s32.totalorder %v1572, 256
    %vm1575 = vmand %vm1573, %vm1574
    %1576 = vst.msk [vmem:[#allocation3] ss:$2 sm:$0x3] %vm1575, %v1570
    %v1577 = vcombine.high %v1563, %v1563
    %v1579 = vunpack.c.l.s4 1966171168
    %v1580 = vunpack.c.0.s8 %v1579
    %v1581 = vlaneseq
    %v1582 = vshrl.u32 %v1581, 7
    %v1583 = vsub.s32 %v1580, %v1582
    %v1584 = vrot.slane %v1577, %v1583
    %s1586 = scalar_lea.vmem [#allocation3], 4
    %1587 = vst.msk [vmem:[%s1586] ss:$2 sm:$0x3] %vm1575, %v1584
    %v1588 = vcombine.high %v1570, %v1570
    %s1590 = scalar_lea.vmem [#allocation3], 8
    %1591 = vst.msk [vmem:[%s1590] ss:$2 sm:$0x3] %vm1575, %v1588
    %v1592 = vcombine.high %v1584, %v1584
    %s1594 = scalar_lea.vmem [#allocation3], 12
    %1595 = vst.msk [vmem:[%s1594] ss:$2 sm:$0x3] %vm1575, %v1592
    %v1596 = vcombine.high %v1550, %v1551
    %v1598 = vunpack.c.l.s4 1966171168
    %v1599 = vunpack.c.0.s8 %v1598
    %v1600 = vlaneseq
    %v1601 = vshrl.u32 %v1600, 7
    %v1602 = vsub.s32 %v1599, %v1601
    %v1603 = vrot.slane %v1596, %v1602
    %v1605 = vunpack.c.l.s4 1966171168
    %v1606 = vunpack.c.0.s8 %v1605
    %v1607 = vlaneseq
    %v1608 = vshrl.u32 %v1607, 7
    %v1609 = vsub.s32 %v1606, %v1608
    %v1610 = vrot.slane %v1603, %v1609
    %s1612 = scalar_lea.vmem [#allocation3], 16
    %1613 = vst.msk [vmem:[%s1612] ss:$2 sm:$0x3] %vm1575, %v1610
    %v1614 = vcombine.high %v1603, %v1603
    %v1616 = vunpack.c.l.s4 1966171168
    %v1617 = vunpack.c.0.s8 %v1616
    %v1618 = vlaneseq
    %v1619 = vshrl.u32 %v1618, 7
    %v1620 = vsub.s32 %v1617, %v1619
    %v1621 = vrot.slane %v1614, %v1620
    %s1623 = scalar_lea.vmem [#allocation3], 20
    %1624 = vst.msk [vmem:[%s1623] ss:$2 sm:$0x3] %vm1575, %v1621
    %v1625 = vcombine.high %v1610, %v1610
    %s1627 = scalar_lea.vmem [#allocation3], 24
    %1628 = vst.msk [vmem:[%s1627] ss:$2 sm:$0x3] %vm1575, %v1625
    %v1629 = vcombine.high %v1621, %v1621
    %s1631 = scalar_lea.vmem [#allocation3], 28
    %1632 = vst.msk [vmem:[%s1631] ss:$2 sm:$0x3] %vm1575, %v1629
    %v1635 = vcombine.low %v1552, %v1553
    %v1637 = vunpack.c.l.s4 1966171168
    %v1638 = vunpack.c.0.s8 %v1637
    %v1639 = vlaneseq
    %v1640 = vshrl.u32 %v1639, 7
    %v1641 = vsub.s32 %v1638, %v1640
    %v1642 = vrot.slane %v1635, %v1641
    %v1644 = vunpack.c.l.s4 1966171168
    %v1645 = vunpack.c.0.s8 %v1644
    %v1646 = vlaneseq
    %v1647 = vshrl.u32 %v1646, 7
    %v1648 = vsub.s32 %v1645, %v1647
    %v1649 = vrot.slane %v1642, %v1648
    %s1651 = scalar_lea.vmem [#allocation3], 1
    %1652 = vst.msk [vmem:[%s1651] ss:$2 sm:$0x3] %vm1575, %v1649
    %v1653 = vcombine.high %v1642, %v1642
    %v1655 = vunpack.c.l.s4 1966171168
    %v1656 = vunpack.c.0.s8 %v1655
    %v1657 = vlaneseq
    %v1658 = vshrl.u32 %v1657, 7
    %v1659 = vsub.s32 %v1656, %v1658
    %v1660 = vrot.slane %v1653, %v1659
    %s1662 = scalar_lea.vmem [#allocation3], 5
    %1663 = vst.msk [vmem:[%s1662] ss:$2 sm:$0x3] %vm1575, %v1660
    %v1664 = vcombine.high %v1649, %v1649
    %s1666 = scalar_lea.vmem [#allocation3], 9
    %1667 = vst.msk [vmem:[%s1666] ss:$2 sm:$0x3] %vm1575, %v1664
    %v1668 = vcombine.high %v1660, %v1660
    %s1670 = scalar_lea.vmem [#allocation3], 13
    %1671 = vst.msk [vmem:[%s1670] ss:$2 sm:$0x3] %vm1575, %v1668
    %v1672 = vcombine.high %v1552, %v1553
    %v1674 = vunpack.c.l.s4 1966171168
    %v1675 = vunpack.c.0.s8 %v1674
    %v1676 = vlaneseq
    %v1677 = vshrl.u32 %v1676, 7
    %v1678 = vsub.s32 %v1675, %v1677
    %v1679 = vrot.slane %v1672, %v1678
    %v1681 = vunpack.c.l.s4 1966171168
    %v1682 = vunpack.c.0.s8 %v1681
    %v1683 = vlaneseq
    %v1684 = vshrl.u32 %v1683, 7
    %v1685 = vsub.s32 %v1682, %v1684
    %v1686 = vrot.slane %v1679, %v1685
    %s1688 = scalar_lea.vmem [#allocation3], 17
    %1689 = vst.msk [vmem:[%s1688] ss:$2 sm:$0x3] %vm1575, %v1686
    %v1690 = vcombine.high %v1679, %v1679
    %v1692 = vunpack.c.l.s4 1966171168
    %v1693 = vunpack.c.0.s8 %v1692
    %v1694 = vlaneseq
    %v1695 = vshrl.u32 %v1694, 7
    %v1696 = vsub.s32 %v1693, %v1695
    %v1697 = vrot.slane %v1690, %v1696
    %s1699 = scalar_lea.vmem [#allocation3], 21
    %1700 = vst.msk [vmem:[%s1699] ss:$2 sm:$0x3] %vm1575, %v1697
    %v1701 = vcombine.high %v1686, %v1686
    %s1703 = scalar_lea.vmem [#allocation3], 25
    %1704 = vst.msk [vmem:[%s1703] ss:$2 sm:$0x3] %vm1575, %v1701
    %v1705 = vcombine.high %v1697, %v1697
    %s1707 = scalar_lea.vmem [#allocation3], 29
    %1708 = vst.msk [vmem:[%s1707] ss:$2 sm:$0x3] %vm1575, %v1705
    %v1709 = vld [vmem:[#allocation3] sm:$0xff]
    %v1710 = vld [vmem:[#allocation3 + $0x8] sm:$0xff]
    %v1711 = vld [vmem:[#allocation3 + $0x10] sm:$0xff]
    %v1712 = vld [vmem:[#allocation3 + $0x18] sm:$0xff]
    %v1717 = vcombine.high %v1709, %v1709
    %v1719 = vunpack.c.l.s4 1983009808
    %v1720 = vunpack.c.0.s8 %v1719
    %v1721 = vlaneseq
    %v1722 = vshrl.u32 %v1721, 7
    %v1723 = vsub.s32 %v1720, %v1722
    %v1724 = vrot.slane %v1709, %v1723
    %v1726 = vunpack.c.l.s4 1983009808
    %v1727 = vunpack.c.0.s8 %v1726
    %v1728 = vlaneseq
    %v1729 = vshrl.u32 %v1728, 7
    %v1730 = vsub.s32 %v1727, %v1729
    %v1731 = vrot.slane %v1717, %v1730
    %v1732 = vcombine.high %v1724, %v1724
    %v1733 = vcombine.high %v1731, %v1731
    %v1734 = vcombine.high %v1710, %v1710
    %v1736 = vunpack.c.l.s4 1983009808
    %v1737 = vunpack.c.0.s8 %v1736
    %v1738 = vlaneseq
    %v1739 = vshrl.u32 %v1738, 7
    %v1740 = vsub.s32 %v1737, %v1739
    %v1741 = vrot.slane %v1710, %v1740
    %v1743 = vunpack.c.l.s4 1983009808
    %v1744 = vunpack.c.0.s8 %v1743
    %v1745 = vlaneseq
    %v1746 = vshrl.u32 %v1745, 7
    %v1747 = vsub.s32 %v1744, %v1746
    %v1748 = vrot.slane %v1734, %v1747
    %v1749 = vcombine.high %v1741, %v1741
    %v1750 = vcombine.high %v1748, %v1748
    %v1751 = vcombine.high %v1711, %v1711
    %v1753 = vunpack.c.l.s4 1983009808
    %v1754 = vunpack.c.0.s8 %v1753
    %v1755 = vlaneseq
    %v1756 = vshrl.u32 %v1755, 7
    %v1757 = vsub.s32 %v1754, %v1756
    %v1758 = vrot.slane %v1711, %v1757
    %v1760 = vunpack.c.l.s4 1983009808
    %v1761 = vunpack.c.0.s8 %v1760
    %v1762 = vlaneseq
    %v1763 = vshrl.u32 %v1762, 7
    %v1764 = vsub.s32 %v1761, %v1763
    %v1765 = vrot.slane %v1751, %v1764
    %v1766 = vcombine.high %v1758, %v1758
    %v1767 = vcombine.high %v1765, %v1765
    %v1768 = vcombine.high %v1712, %v1712
    %v1770 = vunpack.c.l.s4 1983009808
    %v1771 = vunpack.c.0.s8 %v1770
    %v1772 = vlaneseq
    %v1773 = vshrl.u32 %v1772, 7
    %v1774 = vsub.s32 %v1771, %v1773
    %v1775 = vrot.slane %v1712, %v1774
    %v1777 = vunpack.c.l.s4 1983009808
    %v1778 = vunpack.c.0.s8 %v1777
    %v1779 = vlaneseq
    %v1780 = vshrl.u32 %v1779, 7
    %v1781 = vsub.s32 %v1778, %v1780
    %v1782 = vrot.slane %v1768, %v1781
    %v1783 = vcombine.high %v1775, %v1775
    %v1784 = vcombine.high %v1782, %v1782
    %v1801 = vpack.c.bf16 %v1724, %v1724
    %v1802 = vpack.c.bf16 %v1732, %v1732
    %v1803 = vpack.c.bf16 %v1731, %v1731
    %v1804 = vpack.c.bf16 %v1733, %v1733
    %v1805 = vpack.c.bf16 %v1741, %v1741
    %v1806 = vpack.c.bf16 %v1749, %v1749
    %v1807 = vpack.c.bf16 %v1748, %v1748
    %v1808 = vpack.c.bf16 %v1750, %v1750
    %v1809 = vpack.c.bf16 %v1758, %v1758
    %v1810 = vpack.c.bf16 %v1766, %v1766
    %v1811 = vpack.c.bf16 %v1765, %v1765
    %v1812 = vpack.c.bf16 %v1767, %v1767
    %v1813 = vpack.c.bf16 %v1775, %v1775
    %v1814 = vpack.c.bf16 %v1783, %v1783
    %v1815 = vpack.c.bf16 %v1782, %v1782
    %v1816 = vpack.c.bf16 %v1784, %v1784
    %v1817 = vld [vmem:[%s5] sm:$0xf]
    %v1818 = vld [vmem:[%s5 + $0x4] sm:$0xf]
    %v1819 = vld [vmem:[%s5 + $0x8] sm:$0xf]
    %v1820 = vld [vmem:[%s5 + $0xc] sm:$0xf]
    %v1821 = vld [vmem:[%s5 + $0x10] sm:$0xf]
    %v1822 = vld [vmem:[%s5 + $0x14] sm:$0xf]
    %v1823 = vld [vmem:[%s5 + $0x18] sm:$0xf]
    %v1824 = vld [vmem:[%s5 + $0x1c] sm:$0xf]
    %v1825 = vld [vmem:[%s5 + $0x20] sm:$0xf]
    %v1826 = vld [vmem:[%s5 + $0x24] sm:$0xf]
    %v1827 = vld [vmem:[%s5 + $0x28] sm:$0xf]
    %v1828 = vld [vmem:[%s5 + $0x2c] sm:$0xf]
    %v1829 = vld [vmem:[%s5 + $0x30] sm:$0xf]
    %v1830 = vld [vmem:[%s5 + $0x34] sm:$0xf]
    %v1831 = vld [vmem:[%s5 + $0x38] sm:$0xf]
    %v1832 = vld [vmem:[%s5 + $0x3c] sm:$0xf]
    %v1833 = vld [vmem:[%s5 + $0x40] sm:$0xf]
    %v1834 = vld [vmem:[%s5 + $0x44] sm:$0xf]
    %v1835 = vld [vmem:[%s5 + $0x48] sm:$0xf]
    %v1836 = vld [vmem:[%s5 + $0x4c] sm:$0xf]
    %v1837 = vld [vmem:[%s5 + $0x50] sm:$0xf]
    %v1838 = vld [vmem:[%s5 + $0x54] sm:$0xf]
    %v1839 = vld [vmem:[%s5 + $0x58] sm:$0xf]
    %v1840 = vld [vmem:[%s5 + $0x5c] sm:$0xf]
    %v1841 = vld [vmem:[%s5 + $0x60] sm:$0xf]
    %v1842 = vld [vmem:[%s5 + $0x64] sm:$0xf]
    %v1843 = vld [vmem:[%s5 + $0x68] sm:$0xf]
    %v1844 = vld [vmem:[%s5 + $0x6c] sm:$0xf]
    %v1845 = vld [vmem:[%s5 + $0x70] sm:$0xf]
    %v1846 = vld [vmem:[%s5 + $0x74] sm:$0xf]
    %v1847 = vld [vmem:[%s5 + $0x78] sm:$0xf]
    %v1848 = vld [vmem:[%s5 + $0x7c] sm:$0xf]
    %v1849 = vld [vmem:[%s5 + $0x80] sm:$0xf]
    %v1850 = vld [vmem:[%s5 + $0x84] sm:$0xf]
    %v1851 = vld [vmem:[%s5 + $0x88] sm:$0xf]
    %v1852 = vld [vmem:[%s5 + $0x8c] sm:$0xf]
    %v1853 = vld [vmem:[%s5 + $0x90] sm:$0xf]
    %v1854 = vld [vmem:[%s5 + $0x94] sm:$0xf]
    %v1855 = vld [vmem:[%s5 + $0x98] sm:$0xf]
    %v1856 = vld [vmem:[%s5 + $0x9c] sm:$0xf]
    %v1857 = vld [vmem:[%s5 + $0xa0] sm:$0xf]
    %v1858 = vld [vmem:[%s5 + $0xa4] sm:$0xf]
    %v1859 = vld [vmem:[%s5 + $0xa8] sm:$0xf]
    %v1860 = vld [vmem:[%s5 + $0xac] sm:$0xf]
    %v1861 = vld [vmem:[%s5 + $0xb0] sm:$0xf]
    %v1862 = vld [vmem:[%s5 + $0xb4] sm:$0xf]
    %v1863 = vld [vmem:[%s5 + $0xb8] sm:$0xf]
    %v1864 = vld [vmem:[%s5 + $0xbc] sm:$0xf]
    %v1865 = vld [vmem:[%s5 + $0xc0] sm:$0xf]
    %v1866 = vld [vmem:[%s5 + $0xc4] sm:$0xf]
    %v1867 = vld [vmem:[%s5 + $0xc8] sm:$0xf]
    %v1868 = vld [vmem:[%s5 + $0xcc] sm:$0xf]
    %v1869 = vld [vmem:[%s5 + $0xd0] sm:$0xf]
    %v1870 = vld [vmem:[%s5 + $0xd4] sm:$0xf]
    %v1871 = vld [vmem:[%s5 + $0xd8] sm:$0xf]
    %v1872 = vld [vmem:[%s5 + $0xdc] sm:$0xf]
    %v1873 = vld [vmem:[%s5 + $0xe0] sm:$0xf]
    %v1874 = vld [vmem:[%s5 + $0xe4] sm:$0xf]
    %v1875 = vld [vmem:[%s5 + $0xe8] sm:$0xf]
    %v1876 = vld [vmem:[%s5 + $0xec] sm:$0xf]
    %v1877 = vld [vmem:[%s5 + $0xf0] sm:$0xf]
    %v1878 = vld [vmem:[%s5 + $0xf4] sm:$0xf]
    %v1879 = vld [vmem:[%s5 + $0xf8] sm:$0xf]
    %v1880 = vld [vmem:[%s5 + $0xfc] sm:$0xf]
    %v1881 = vld [vmem:[%s5 + $0x100] sm:$0xf]
    %v1882 = vld [vmem:[%s5 + $0x104] sm:$0xf]
    %v1883 = vld [vmem:[%s5 + $0x108] sm:$0xf]
    %v1884 = vld [vmem:[%s5 + $0x10c] sm:$0xf]
    %v1885 = vld [vmem:[%s5 + $0x110] sm:$0xf]
    %v1886 = vld [vmem:[%s5 + $0x114] sm:$0xf]
    %v1887 = vld [vmem:[%s5 + $0x118] sm:$0xf]
    %v1888 = vld [vmem:[%s5 + $0x11c] sm:$0xf]
    %v1889 = vld [vmem:[%s5 + $0x120] sm:$0xf]
    %v1890 = vld [vmem:[%s5 + $0x124] sm:$0xf]
    %v1891 = vld [vmem:[%s5 + $0x128] sm:$0xf]
    %v1892 = vld [vmem:[%s5 + $0x12c] sm:$0xf]
    %v1893 = vld [vmem:[%s5 + $0x130] sm:$0xf]
    %v1894 = vld [vmem:[%s5 + $0x134] sm:$0xf]
    %v1895 = vld [vmem:[%s5 + $0x138] sm:$0xf]
    %v1896 = vld [vmem:[%s5 + $0x13c] sm:$0xf]
    %v1897 = vld [vmem:[%s5 + $0x140] sm:$0xf]
    %v1898 = vld [vmem:[%s5 + $0x144] sm:$0xf]
    %v1899 = vld [vmem:[%s5 + $0x148] sm:$0xf]
    %v1900 = vld [vmem:[%s5 + $0x14c] sm:$0xf]
    %v1901 = vld [vmem:[%s5 + $0x150] sm:$0xf]
    %v1902 = vld [vmem:[%s5 + $0x154] sm:$0xf]
    %v1903 = vld [vmem:[%s5 + $0x158] sm:$0xf]
    %v1904 = vld [vmem:[%s5 + $0x15c] sm:$0xf]
    %v1905 = vld [vmem:[%s5 + $0x160] sm:$0xf]
    %v1906 = vld [vmem:[%s5 + $0x164] sm:$0xf]
    %v1907 = vld [vmem:[%s5 + $0x168] sm:$0xf]
    %v1908 = vld [vmem:[%s5 + $0x16c] sm:$0xf]
    %v1909 = vld [vmem:[%s5 + $0x170] sm:$0xf]
    %v1910 = vld [vmem:[%s5 + $0x174] sm:$0xf]
    %v1911 = vld [vmem:[%s5 + $0x178] sm:$0xf]
    %v1912 = vld [vmem:[%s5 + $0x17c] sm:$0xf]
    %v1913 = vld [vmem:[%s5 + $0x180] sm:$0xf]
    %v1914 = vld [vmem:[%s5 + $0x184] sm:$0xf]
    %v1915 = vld [vmem:[%s5 + $0x188] sm:$0xf]
    %v1916 = vld [vmem:[%s5 + $0x18c] sm:$0xf]
    %v1917 = vld [vmem:[%s5 + $0x190] sm:$0xf]
    %v1918 = vld [vmem:[%s5 + $0x194] sm:$0xf]
    %v1919 = vld [vmem:[%s5 + $0x198] sm:$0xf]
    %v1920 = vld [vmem:[%s5 + $0x19c] sm:$0xf]
    %v1921 = vld [vmem:[%s5 + $0x1a0] sm:$0xf]
    %v1922 = vld [vmem:[%s5 + $0x1a4] sm:$0xf]
    %v1923 = vld [vmem:[%s5 + $0x1a8] sm:$0xf]
    %v1924 = vld [vmem:[%s5 + $0x1ac] sm:$0xf]
    %v1925 = vld [vmem:[%s5 + $0x1b0] sm:$0xf]
    %v1926 = vld [vmem:[%s5 + $0x1b4] sm:$0xf]
    %v1927 = vld [vmem:[%s5 + $0x1b8] sm:$0xf]
    %v1928 = vld [vmem:[%s5 + $0x1bc] sm:$0xf]
    %v1929 = vld [vmem:[%s5 + $0x1c0] sm:$0xf]
    %v1930 = vld [vmem:[%s5 + $0x1c4] sm:$0xf]
    %v1931 = vld [vmem:[%s5 + $0x1c8] sm:$0xf]
    %v1932 = vld [vmem:[%s5 + $0x1cc] sm:$0xf]
    %v1933 = vld [vmem:[%s5 + $0x1d0] sm:$0xf]
    %v1934 = vld [vmem:[%s5 + $0x1d4] sm:$0xf]
    %v1935 = vld [vmem:[%s5 + $0x1d8] sm:$0xf]
    %v1936 = vld [vmem:[%s5 + $0x1dc] sm:$0xf]
    %v1937 = vld [vmem:[%s5 + $0x1e0] sm:$0xf]
    %v1938 = vld [vmem:[%s5 + $0x1e4] sm:$0xf]
    %v1939 = vld [vmem:[%s5 + $0x1e8] sm:$0xf]
    %v1940 = vld [vmem:[%s5 + $0x1ec] sm:$0xf]
    %v1941 = vld [vmem:[%s5 + $0x1f0] sm:$0xf]
    %v1942 = vld [vmem:[%s5 + $0x1f4] sm:$0xf]
    %v1943 = vld [vmem:[%s5 + $0x1f8] sm:$0xf]
    %v1944 = vld [vmem:[%s5 + $0x1fc] sm:$0xf]
    %v1945 = vld [vmem:[%s5 + $0x200] sm:$0xf]
    %v1946 = vld [vmem:[%s5 + $0x204] sm:$0xf]
    %v1947 = vld [vmem:[%s5 + $0x208] sm:$0xf]
    %v1948 = vld [vmem:[%s5 + $0x20c] sm:$0xf]
    %v1949 = vld [vmem:[%s5 + $0x210] sm:$0xf]
    %v1950 = vld [vmem:[%s5 + $0x214] sm:$0xf]
    %v1951 = vld [vmem:[%s5 + $0x218] sm:$0xf]
    %v1952 = vld [vmem:[%s5 + $0x21c] sm:$0xf]
    %v1953 = vld [vmem:[%s5 + $0x220] sm:$0xf]
    %v1954 = vld [vmem:[%s5 + $0x224] sm:$0xf]
    %v1955 = vld [vmem:[%s5 + $0x228] sm:$0xf]
    %v1956 = vld [vmem:[%s5 + $0x22c] sm:$0xf]
    %v1957 = vld [vmem:[%s5 + $0x230] sm:$0xf]
    %v1958 = vld [vmem:[%s5 + $0x234] sm:$0xf]
    %v1959 = vld [vmem:[%s5 + $0x238] sm:$0xf]
    %v1960 = vld [vmem:[%s5 + $0x23c] sm:$0xf]
    %v1961 = vld [vmem:[%s5 + $0x240] sm:$0xf]
    %v1962 = vld [vmem:[%s5 + $0x244] sm:$0xf]
    %v1963 = vld [vmem:[%s5 + $0x248] sm:$0xf]
    %v1964 = vld [vmem:[%s5 + $0x24c] sm:$0xf]
    %v1965 = vld [vmem:[%s5 + $0x250] sm:$0xf]
    %v1966 = vld [vmem:[%s5 + $0x254] sm:$0xf]
    %v1967 = vld [vmem:[%s5 + $0x258] sm:$0xf]
    %v1968 = vld [vmem:[%s5 + $0x25c] sm:$0xf]
    %v1969 = vld [vmem:[%s5 + $0x260] sm:$0xf]
    %v1970 = vld [vmem:[%s5 + $0x264] sm:$0xf]
    %v1971 = vld [vmem:[%s5 + $0x268] sm:$0xf]
    %v1972 = vld [vmem:[%s5 + $0x26c] sm:$0xf]
    %v1973 = vld [vmem:[%s5 + $0x270] sm:$0xf]
    %v1974 = vld [vmem:[%s5 + $0x274] sm:$0xf]
    %v1975 = vld [vmem:[%s5 + $0x278] sm:$0xf]
    %v1976 = vld [vmem:[%s5 + $0x27c] sm:$0xf]
    %v1977 = vld [vmem:[%s5 + $0x280] sm:$0xf]
    %v1978 = vld [vmem:[%s5 + $0x284] sm:$0xf]
    %v1979 = vld [vmem:[%s5 + $0x288] sm:$0xf]
    %v1980 = vld [vmem:[%s5 + $0x28c] sm:$0xf]
    %v1981 = vld [vmem:[%s5 + $0x290] sm:$0xf]
    %v1982 = vld [vmem:[%s5 + $0x294] sm:$0xf]
    %v1983 = vld [vmem:[%s5 + $0x298] sm:$0xf]
    %v1984 = vld [vmem:[%s5 + $0x29c] sm:$0xf]
    %v1985 = vld [vmem:[%s5 + $0x2a0] sm:$0xf]
    %v1986 = vld [vmem:[%s5 + $0x2a4] sm:$0xf]
    %v1987 = vld [vmem:[%s5 + $0x2a8] sm:$0xf]
    %v1988 = vld [vmem:[%s5 + $0x2ac] sm:$0xf]
    %v1989 = vld [vmem:[%s5 + $0x2b0] sm:$0xf]
    %v1990 = vld [vmem:[%s5 + $0x2b4] sm:$0xf]
    %v1991 = vld [vmem:[%s5 + $0x2b8] sm:$0xf]
    %v1992 = vld [vmem:[%s5 + $0x2bc] sm:$0xf]
    %v1993 = vld [vmem:[%s5 + $0x2c0] sm:$0xf]
    %v1994 = vld [vmem:[%s5 + $0x2c4] sm:$0xf]
    %v1995 = vld [vmem:[%s5 + $0x2c8] sm:$0xf]
    %v1996 = vld [vmem:[%s5 + $0x2cc] sm:$0xf]
    %v1997 = vld [vmem:[%s5 + $0x2d0] sm:$0xf]
    %v1998 = vld [vmem:[%s5 + $0x2d4] sm:$0xf]
    %v1999 = vld [vmem:[%s5 + $0x2d8] sm:$0xf]
    %v2000 = vld [vmem:[%s5 + $0x2dc] sm:$0xf]
    %v2001 = vld [vmem:[%s5 + $0x2e0] sm:$0xf]
    %v2002 = vld [vmem:[%s5 + $0x2e4] sm:$0xf]
    %v2003 = vld [vmem:[%s5 + $0x2e8] sm:$0xf]
    %v2004 = vld [vmem:[%s5 + $0x2ec] sm:$0xf]
    %v2005 = vld [vmem:[%s5 + $0x2f0] sm:$0xf]
    %v2006 = vld [vmem:[%s5 + $0x2f4] sm:$0xf]
    %v2007 = vld [vmem:[%s5 + $0x2f8] sm:$0xf]
    %v2008 = vld [vmem:[%s5 + $0x2fc] sm:$0xf]
    %v2009 = vld [vmem:[%s5 + $0x300] sm:$0xf]
    %v2010 = vld [vmem:[%s5 + $0x304] sm:$0xf]
    %v2011 = vld [vmem:[%s5 + $0x308] sm:$0xf]
    %v2012 = vld [vmem:[%s5 + $0x30c] sm:$0xf]
    %v2013 = vld [vmem:[%s5 + $0x310] sm:$0xf]
    %v2014 = vld [vmem:[%s5 + $0x314] sm:$0xf]
    %v2015 = vld [vmem:[%s5 + $0x318] sm:$0xf]
    %v2016 = vld [vmem:[%s5 + $0x31c] sm:$0xf]
    %v2017 = vld [vmem:[%s5 + $0x320] sm:$0xf]
    %v2018 = vld [vmem:[%s5 + $0x324] sm:$0xf]
    %v2019 = vld [vmem:[%s5 + $0x328] sm:$0xf]
    %v2020 = vld [vmem:[%s5 + $0x32c] sm:$0xf]
    %v2021 = vld [vmem:[%s5 + $0x330] sm:$0xf]
    %v2022 = vld [vmem:[%s5 + $0x334] sm:$0xf]
    %v2023 = vld [vmem:[%s5 + $0x338] sm:$0xf]
    %v2024 = vld [vmem:[%s5 + $0x33c] sm:$0xf]
    %v2025 = vld [vmem:[%s5 + $0x340] sm:$0xf]
    %v2026 = vld [vmem:[%s5 + $0x344] sm:$0xf]
    %v2027 = vld [vmem:[%s5 + $0x348] sm:$0xf]
    %v2028 = vld [vmem:[%s5 + $0x34c] sm:$0xf]
    %v2029 = vld [vmem:[%s5 + $0x350] sm:$0xf]
    %v2030 = vld [vmem:[%s5 + $0x354] sm:$0xf]
    %v2031 = vld [vmem:[%s5 + $0x358] sm:$0xf]
    %v2032 = vld [vmem:[%s5 + $0x35c] sm:$0xf]
    %v2033 = vld [vmem:[%s5 + $0x360] sm:$0xf]
    %v2034 = vld [vmem:[%s5 + $0x364] sm:$0xf]
    %v2035 = vld [vmem:[%s5 + $0x368] sm:$0xf]
    %v2036 = vld [vmem:[%s5 + $0x36c] sm:$0xf]
    %v2037 = vld [vmem:[%s5 + $0x370] sm:$0xf]
    %v2038 = vld [vmem:[%s5 + $0x374] sm:$0xf]
    %v2039 = vld [vmem:[%s5 + $0x378] sm:$0xf]
    %v2040 = vld [vmem:[%s5 + $0x37c] sm:$0xf]
    %v2041 = vld [vmem:[%s5 + $0x380] sm:$0xf]
    %v2042 = vld [vmem:[%s5 + $0x384] sm:$0xf]
    %v2043 = vld [vmem:[%s5 + $0x388] sm:$0xf]
    %v2044 = vld [vmem:[%s5 + $0x38c] sm:$0xf]
    %v2045 = vld [vmem:[%s5 + $0x390] sm:$0xf]
    %v2046 = vld [vmem:[%s5 + $0x394] sm:$0xf]
    %v2047 = vld [vmem:[%s5 + $0x398] sm:$0xf]
    %v2048 = vld [vmem:[%s5 + $0x39c] sm:$0xf]
    %v2049 = vld [vmem:[%s5 + $0x3a0] sm:$0xf]
    %v2050 = vld [vmem:[%s5 + $0x3a4] sm:$0xf]
    %v2051 = vld [vmem:[%s5 + $0x3a8] sm:$0xf]
    %v2052 = vld [vmem:[%s5 + $0x3ac] sm:$0xf]
    %v2053 = vld [vmem:[%s5 + $0x3b0] sm:$0xf]
    %v2054 = vld [vmem:[%s5 + $0x3b4] sm:$0xf]
    %v2055 = vld [vmem:[%s5 + $0x3b8] sm:$0xf]
    %v2056 = vld [vmem:[%s5 + $0x3bc] sm:$0xf]
    %v2057 = vld [vmem:[%s5 + $0x3c0] sm:$0xf]
    %v2058 = vld [vmem:[%s5 + $0x3c4] sm:$0xf]
    %v2059 = vld [vmem:[%s5 + $0x3c8] sm:$0xf]
    %v2060 = vld [vmem:[%s5 + $0x3cc] sm:$0xf]
    %v2061 = vld [vmem:[%s5 + $0x3d0] sm:$0xf]
    %v2062 = vld [vmem:[%s5 + $0x3d4] sm:$0xf]
    %v2063 = vld [vmem:[%s5 + $0x3d8] sm:$0xf]
    %v2064 = vld [vmem:[%s5 + $0x3dc] sm:$0xf]
    %v2065 = vld [vmem:[%s5 + $0x3e0] sm:$0xf]
    %v2066 = vld [vmem:[%s5 + $0x3e4] sm:$0xf]
    %v2067 = vld [vmem:[%s5 + $0x3e8] sm:$0xf]
    %v2068 = vld [vmem:[%s5 + $0x3ec] sm:$0xf]
    %v2069 = vld [vmem:[%s5 + $0x3f0] sm:$0xf]
    %v2070 = vld [vmem:[%s5 + $0x3f4] sm:$0xf]
    %v2071 = vld [vmem:[%s5 + $0x3f8] sm:$0xf]
    %v2072 = vld [vmem:[%s5 + $0x3fc] sm:$0xf]
    %v2073 = vld [vmem:[%s6] sm:$0x1]
    %v2075 = vlaneseq
    %v2076 = vshrl.u32 %v2075, 7
    %v2077 = vsub.s32 0, %v2076
    %v2078 = vrot.slane %v2073, %v2077
    %v2336 = vunpack.c.l.b16 %v1817
    %v2337 = vunpack.c.l.b16 %v1818
    %v2338 = vunpack.c.l.b16 %v1819
    %v2339 = vunpack.c.l.b16 %v1820
    %v2340 = vunpack.c.l.b16 %v1821
    %v2341 = vunpack.c.l.b16 %v1822
    %v2342 = vunpack.c.l.b16 %v1823
    %v2343 = vunpack.c.l.b16 %v1824
    %v2344 = vunpack.c.l.b16 %v1825
    %v2345 = vunpack.c.l.b16 %v1826
    %v2346 = vunpack.c.l.b16 %v1827
    %v2347 = vunpack.c.l.b16 %v1828
    %v2348 = vunpack.c.l.b16 %v1829
    %v2349 = vunpack.c.l.b16 %v1830
    %v2350 = vunpack.c.l.b16 %v1831
    %v2351 = vunpack.c.l.b16 %v1832
    %v2352 = vunpack.c.l.b16 %v1833
    %v2353 = vunpack.c.l.b16 %v1834
    %v2354 = vunpack.c.l.b16 %v1835
    %v2355 = vunpack.c.l.b16 %v1836
    %v2356 = vunpack.c.l.b16 %v1837
    %v2357 = vunpack.c.l.b16 %v1838
    %v2358 = vunpack.c.l.b16 %v1839
    %v2359 = vunpack.c.l.b16 %v1840
    %v2360 = vunpack.c.l.b16 %v1841
    %v2361 = vunpack.c.l.b16 %v1842
    %v2362 = vunpack.c.l.b16 %v1843
    %v2363 = vunpack.c.l.b16 %v1844
    %v2364 = vunpack.c.l.b16 %v1845
    %v2365 = vunpack.c.l.b16 %v1846
    %v2366 = vunpack.c.l.b16 %v1847
    %v2367 = vunpack.c.l.b16 %v1848
    %v2368 = vunpack.c.l.b16 %v1849
    %v2369 = vunpack.c.l.b16 %v1850
    %v2370 = vunpack.c.l.b16 %v1851
    %v2371 = vunpack.c.l.b16 %v1852
    %v2372 = vunpack.c.l.b16 %v1853
    %v2373 = vunpack.c.l.b16 %v1854
    %v2374 = vunpack.c.l.b16 %v1855
    %v2375 = vunpack.c.l.b16 %v1856
    %v2376 = vunpack.c.l.b16 %v1857
    %v2377 = vunpack.c.l.b16 %v1858
    %v2378 = vunpack.c.l.b16 %v1859
    %v2379 = vunpack.c.l.b16 %v1860
    %v2380 = vunpack.c.l.b16 %v1861
    %v2381 = vunpack.c.l.b16 %v1862
    %v2382 = vunpack.c.l.b16 %v1863
    %v2383 = vunpack.c.l.b16 %v1864
    %v2384 = vunpack.c.l.b16 %v1865
    %v2385 = vunpack.c.l.b16 %v1866
    %v2386 = vunpack.c.l.b16 %v1867
    %v2387 = vunpack.c.l.b16 %v1868
    %v2388 = vunpack.c.l.b16 %v1869
    %v2389 = vunpack.c.l.b16 %v1870
    %v2390 = vunpack.c.l.b16 %v1871
    %v2391 = vunpack.c.l.b16 %v1872
    %v2392 = vunpack.c.l.b16 %v1873
    %v2393 = vunpack.c.l.b16 %v1874
    %v2394 = vunpack.c.l.b16 %v1875
    %v2395 = vunpack.c.l.b16 %v1876
    %v2396 = vunpack.c.l.b16 %v1877
    %v2397 = vunpack.c.l.b16 %v1878
    %v2398 = vunpack.c.l.b16 %v1879
    %v2399 = vunpack.c.l.b16 %v1880
    %v2400 = vunpack.c.l.b16 %v1881
    %v2401 = vunpack.c.l.b16 %v1882
    %v2402 = vunpack.c.l.b16 %v1883
    %v2403 = vunpack.c.l.b16 %v1884
    %v2404 = vunpack.c.l.b16 %v1885
    %v2405 = vunpack.c.l.b16 %v1886
    %v2406 = vunpack.c.l.b16 %v1887
    %v2407 = vunpack.c.l.b16 %v1888
    %v2408 = vunpack.c.l.b16 %v1889
    %v2409 = vunpack.c.l.b16 %v1890
    %v2410 = vunpack.c.l.b16 %v1891
    %v2411 = vunpack.c.l.b16 %v1892
    %v2412 = vunpack.c.l.b16 %v1893
    %v2413 = vunpack.c.l.b16 %v1894
    %v2414 = vunpack.c.l.b16 %v1895
    %v2415 = vunpack.c.l.b16 %v1896
    %v2416 = vunpack.c.l.b16 %v1897
    %v2417 = vunpack.c.l.b16 %v1898
    %v2418 = vunpack.c.l.b16 %v1899
    %v2419 = vunpack.c.l.b16 %v1900
    %v2420 = vunpack.c.l.b16 %v1901
    %v2421 = vunpack.c.l.b16 %v1902
    %v2422 = vunpack.c.l.b16 %v1903
    %v2423 = vunpack.c.l.b16 %v1904
    %v2424 = vunpack.c.l.b16 %v1905
    %v2425 = vunpack.c.l.b16 %v1906
    %v2426 = vunpack.c.l.b16 %v1907
    %v2427 = vunpack.c.l.b16 %v1908
    %v2428 = vunpack.c.l.b16 %v1909
    %v2429 = vunpack.c.l.b16 %v1910
    %v2430 = vunpack.c.l.b16 %v1911
    %v2431 = vunpack.c.l.b16 %v1912
    %v2432 = vunpack.c.l.b16 %v1913
    %v2433 = vunpack.c.l.b16 %v1914
    %v2434 = vunpack.c.l.b16 %v1915
    %v2435 = vunpack.c.l.b16 %v1916
    %v2436 = vunpack.c.l.b16 %v1917
    %v2437 = vunpack.c.l.b16 %v1918
    %v2438 = vunpack.c.l.b16 %v1919
    %v2439 = vunpack.c.l.b16 %v1920
    %v2440 = vunpack.c.l.b16 %v1921
    %v2441 = vunpack.c.l.b16 %v1922
    %v2442 = vunpack.c.l.b16 %v1923
    %v2443 = vunpack.c.l.b16 %v1924
    %v2444 = vunpack.c.l.b16 %v1925
    %v2445 = vunpack.c.l.b16 %v1926
    %v2446 = vunpack.c.l.b16 %v1927
    %v2447 = vunpack.c.l.b16 %v1928
    %v2448 = vunpack.c.l.b16 %v1929
    %v2449 = vunpack.c.l.b16 %v1930
    %v2450 = vunpack.c.l.b16 %v1931
    %v2451 = vunpack.c.l.b16 %v1932
    %v2452 = vunpack.c.l.b16 %v1933
    %v2453 = vunpack.c.l.b16 %v1934
    %v2454 = vunpack.c.l.b16 %v1935
    %v2455 = vunpack.c.l.b16 %v1936
    %v2456 = vunpack.c.l.b16 %v1937
    %v2457 = vunpack.c.l.b16 %v1938
    %v2458 = vunpack.c.l.b16 %v1939
    %v2459 = vunpack.c.l.b16 %v1940
    %v2460 = vunpack.c.l.b16 %v1941
    %v2461 = vunpack.c.l.b16 %v1942
    %v2462 = vunpack.c.l.b16 %v1943
    %v2463 = vunpack.c.l.b16 %v1944
    %v2464 = vunpack.c.l.b16 %v1945
    %v2465 = vunpack.c.l.b16 %v1946
    %v2466 = vunpack.c.l.b16 %v1947
    %v2467 = vunpack.c.l.b16 %v1948
    %v2468 = vunpack.c.l.b16 %v1949
    %v2469 = vunpack.c.l.b16 %v1950
    %v2470 = vunpack.c.l.b16 %v1951
    %v2471 = vunpack.c.l.b16 %v1952
    %v2472 = vunpack.c.l.b16 %v1953
    %v2473 = vunpack.c.l.b16 %v1954
    %v2474 = vunpack.c.l.b16 %v1955
    %v2475 = vunpack.c.l.b16 %v1956
    %v2476 = vunpack.c.l.b16 %v1957
    %v2477 = vunpack.c.l.b16 %v1958
    %v2478 = vunpack.c.l.b16 %v1959
    %v2479 = vunpack.c.l.b16 %v1960
    %v2480 = vunpack.c.l.b16 %v1961
    %v2481 = vunpack.c.l.b16 %v1962
    %v2482 = vunpack.c.l.b16 %v1963
    %v2483 = vunpack.c.l.b16 %v1964
    %v2484 = vunpack.c.l.b16 %v1965
    %v2485 = vunpack.c.l.b16 %v1966
    %v2486 = vunpack.c.l.b16 %v1967
    %v2487 = vunpack.c.l.b16 %v1968
    %v2488 = vunpack.c.l.b16 %v1969
    %v2489 = vunpack.c.l.b16 %v1970
    %v2490 = vunpack.c.l.b16 %v1971
    %v2491 = vunpack.c.l.b16 %v1972
    %v2492 = vunpack.c.l.b16 %v1973
    %v2493 = vunpack.c.l.b16 %v1974
    %v2494 = vunpack.c.l.b16 %v1975
    %v2495 = vunpack.c.l.b16 %v1976
    %v2496 = vunpack.c.l.b16 %v1977
    %v2497 = vunpack.c.l.b16 %v1978
    %v2498 = vunpack.c.l.b16 %v1979
    %v2499 = vunpack.c.l.b16 %v1980
    %v2500 = vunpack.c.l.b16 %v1981
    %v2501 = vunpack.c.l.b16 %v1982
    %v2502 = vunpack.c.l.b16 %v1983
    %v2503 = vunpack.c.l.b16 %v1984
    %v2504 = vunpack.c.l.b16 %v1985
    %v2505 = vunpack.c.l.b16 %v1986
    %v2506 = vunpack.c.l.b16 %v1987
    %v2507 = vunpack.c.l.b16 %v1988
    %v2508 = vunpack.c.l.b16 %v1989
    %v2509 = vunpack.c.l.b16 %v1990
    %v2510 = vunpack.c.l.b16 %v1991
    %v2511 = vunpack.c.l.b16 %v1992
    %v2512 = vunpack.c.l.b16 %v1993
    %v2513 = vunpack.c.l.b16 %v1994
    %v2514 = vunpack.c.l.b16 %v1995
    %v2515 = vunpack.c.l.b16 %v1996
    %v2516 = vunpack.c.l.b16 %v1997
    %v2517 = vunpack.c.l.b16 %v1998
    %v2518 = vunpack.c.l.b16 %v1999
    %v2519 = vunpack.c.l.b16 %v2000
    %v2520 = vunpack.c.l.b16 %v2001
    %v2521 = vunpack.c.l.b16 %v2002
    %v2522 = vunpack.c.l.b16 %v2003
    %v2523 = vunpack.c.l.b16 %v2004
    %v2524 = vunpack.c.l.b16 %v2005
    %v2525 = vunpack.c.l.b16 %v2006
    %v2526 = vunpack.c.l.b16 %v2007
    %v2527 = vunpack.c.l.b16 %v2008
    %v2528 = vunpack.c.l.b16 %v2009
    %v2529 = vunpack.c.l.b16 %v2010
    %v2530 = vunpack.c.l.b16 %v2011
    %v2531 = vunpack.c.l.b16 %v2012
    %v2532 = vunpack.c.l.b16 %v2013
    %v2533 = vunpack.c.l.b16 %v2014
    %v2534 = vunpack.c.l.b16 %v2015
    %v2535 = vunpack.c.l.b16 %v2016
    %v2536 = vunpack.c.l.b16 %v2017
    %v2537 = vunpack.c.l.b16 %v2018
    %v2538 = vunpack.c.l.b16 %v2019
    %v2539 = vunpack.c.l.b16 %v2020
    %v2540 = vunpack.c.l.b16 %v2021
    %v2541 = vunpack.c.l.b16 %v2022
    %v2542 = vunpack.c.l.b16 %v2023
    %v2543 = vunpack.c.l.b16 %v2024
    %v2544 = vunpack.c.l.b16 %v2025
    %v2545 = vunpack.c.l.b16 %v2026
    %v2546 = vunpack.c.l.b16 %v2027
    %v2547 = vunpack.c.l.b16 %v2028
    %v2548 = vunpack.c.l.b16 %v2029
    %v2549 = vunpack.c.l.b16 %v2030
    %v2550 = vunpack.c.l.b16 %v2031
    %v2551 = vunpack.c.l.b16 %v2032
    %v2552 = vunpack.c.l.b16 %v2033
    %v2553 = vunpack.c.l.b16 %v2034
    %v2554 = vunpack.c.l.b16 %v2035
    %v2555 = vunpack.c.l.b16 %v2036
    %v2556 = vunpack.c.l.b16 %v2037
    %v2557 = vunpack.c.l.b16 %v2038
    %v2558 = vunpack.c.l.b16 %v2039
    %v2559 = vunpack.c.l.b16 %v2040
    %v2560 = vunpack.c.l.b16 %v2041
    %v2561 = vunpack.c.l.b16 %v2042
    %v2562 = vunpack.c.l.b16 %v2043
    %v2563 = vunpack.c.l.b16 %v2044
    %v2564 = vunpack.c.l.b16 %v2045
    %v2565 = vunpack.c.l.b16 %v2046
    %v2566 = vunpack.c.l.b16 %v2047
    %v2567 = vunpack.c.l.b16 %v2048
    %v2568 = vunpack.c.l.b16 %v2049
    %v2569 = vunpack.c.l.b16 %v2050
    %v2570 = vunpack.c.l.b16 %v2051
    %v2571 = vunpack.c.l.b16 %v2052
    %v2572 = vunpack.c.l.b16 %v2053
    %v2573 = vunpack.c.l.b16 %v2054
    %v2574 = vunpack.c.l.b16 %v2055
    %v2575 = vunpack.c.l.b16 %v2056
    %v2576 = vunpack.c.l.b16 %v2057
    %v2577 = vunpack.c.l.b16 %v2058
    %v2578 = vunpack.c.l.b16 %v2059
    %v2579 = vunpack.c.l.b16 %v2060
    %v2580 = vunpack.c.l.b16 %v2061
    %v2581 = vunpack.c.l.b16 %v2062
    %v2582 = vunpack.c.l.b16 %v2063
    %v2583 = vunpack.c.l.b16 %v2064
    %v2584 = vunpack.c.l.b16 %v2065
    %v2585 = vunpack.c.l.b16 %v2066
    %v2586 = vunpack.c.l.b16 %v2067
    %v2587 = vunpack.c.l.b16 %v2068
    %v2588 = vunpack.c.l.b16 %v2069
    %v2589 = vunpack.c.l.b16 %v2070
    %v2590 = vunpack.c.l.b16 %v2071
    %v2591 = vunpack.c.l.b16 %v2072
    %v2592 = vpack.c.b16 %v2337, %v2336
    %v2593 = vpack.c.b16 %v2339, %v2338
    %v2594 = vpack.c.b16 %v2341, %v2340
    %v2595 = vpack.c.b16 %v2343, %v2342
    %v2596 = vpack.c.b16 %v2345, %v2344
    %v2597 = vpack.c.b16 %v2347, %v2346
    %v2598 = vpack.c.b16 %v2349, %v2348
    %v2599 = vpack.c.b16 %v2351, %v2350
    %v2600 = vpack.c.b16 %v2353, %v2352
    %v2601 = vpack.c.b16 %v2355, %v2354
    %v2602 = vpack.c.b16 %v2357, %v2356
    %v2603 = vpack.c.b16 %v2359, %v2358
    %v2604 = vpack.c.b16 %v2361, %v2360
    %v2605 = vpack.c.b16 %v2363, %v2362
    %v2606 = vpack.c.b16 %v2365, %v2364
    %v2607 = vpack.c.b16 %v2367, %v2366
    %v2608 = vpack.c.b16 %v2369, %v2368
    %v2609 = vpack.c.b16 %v2371, %v2370
    %v2610 = vpack.c.b16 %v2373, %v2372
    %v2611 = vpack.c.b16 %v2375, %v2374
    %v2612 = vpack.c.b16 %v2377, %v2376
    %v2613 = vpack.c.b16 %v2379, %v2378
    %v2614 = vpack.c.b16 %v2381, %v2380
    %v2615 = vpack.c.b16 %v2383, %v2382
    %v2616 = vpack.c.b16 %v2385, %v2384
    %v2617 = vpack.c.b16 %v2387, %v2386
    %v2618 = vpack.c.b16 %v2389, %v2388
    %v2619 = vpack.c.b16 %v2391, %v2390
    %v2620 = vpack.c.b16 %v2393, %v2392
    %v2621 = vpack.c.b16 %v2395, %v2394
    %v2622 = vpack.c.b16 %v2397, %v2396
    %v2623 = vpack.c.b16 %v2399, %v2398
    %v2624 = vpack.c.b16 %v2401, %v2400
    %v2625 = vpack.c.b16 %v2403, %v2402
    %v2626 = vpack.c.b16 %v2405, %v2404
    %v2627 = vpack.c.b16 %v2407, %v2406
    %v2628 = vpack.c.b16 %v2409, %v2408
    %v2629 = vpack.c.b16 %v2411, %v2410
    %v2630 = vpack.c.b16 %v2413, %v2412
    %v2631 = vpack.c.b16 %v2415, %v2414
    %v2632 = vpack.c.b16 %v2417, %v2416
    %v2633 = vpack.c.b16 %v2419, %v2418
    %v2634 = vpack.c.b16 %v2421, %v2420
    %v2635 = vpack.c.b16 %v2423, %v2422
    %v2636 = vpack.c.b16 %v2425, %v2424
    %v2637 = vpack.c.b16 %v2427, %v2426
    %v2638 = vpack.c.b16 %v2429, %v2428
    %v2639 = vpack.c.b16 %v2431, %v2430
    %v2640 = vpack.c.b16 %v2433, %v2432
    %v2641 = vpack.c.b16 %v2435, %v2434
    %v2642 = vpack.c.b16 %v2437, %v2436
    %v2643 = vpack.c.b16 %v2439, %v2438
    %v2644 = vpack.c.b16 %v2441, %v2440
    %v2645 = vpack.c.b16 %v2443, %v2442
    %v2646 = vpack.c.b16 %v2445, %v2444
    %v2647 = vpack.c.b16 %v2447, %v2446
    %v2648 = vpack.c.b16 %v2449, %v2448
    %v2649 = vpack.c.b16 %v2451, %v2450
    %v2650 = vpack.c.b16 %v2453, %v2452
    %v2651 = vpack.c.b16 %v2455, %v2454
    %v2652 = vpack.c.b16 %v2457, %v2456
    %v2653 = vpack.c.b16 %v2459, %v2458
    %v2654 = vpack.c.b16 %v2461, %v2460
    %v2655 = vpack.c.b16 %v2463, %v2462
    %v2656 = vpack.c.b16 %v2465, %v2464
    %v2657 = vpack.c.b16 %v2467, %v2466
    %v2658 = vpack.c.b16 %v2469, %v2468
    %v2659 = vpack.c.b16 %v2471, %v2470
    %v2660 = vpack.c.b16 %v2473, %v2472
    %v2661 = vpack.c.b16 %v2475, %v2474
    %v2662 = vpack.c.b16 %v2477, %v2476
    %v2663 = vpack.c.b16 %v2479, %v2478
    %v2664 = vpack.c.b16 %v2481, %v2480
    %v2665 = vpack.c.b16 %v2483, %v2482
    %v2666 = vpack.c.b16 %v2485, %v2484
    %v2667 = vpack.c.b16 %v2487, %v2486
    %v2668 = vpack.c.b16 %v2489, %v2488
    %v2669 = vpack.c.b16 %v2491, %v2490
    %v2670 = vpack.c.b16 %v2493, %v2492
    %v2671 = vpack.c.b16 %v2495, %v2494
    %v2672 = vpack.c.b16 %v2497, %v2496
    %v2673 = vpack.c.b16 %v2499, %v2498
    %v2674 = vpack.c.b16 %v2501, %v2500
    %v2675 = vpack.c.b16 %v2503, %v2502
    %v2676 = vpack.c.b16 %v2505, %v2504
    %v2677 = vpack.c.b16 %v2507, %v2506
    %v2678 = vpack.c.b16 %v2509, %v2508
    %v2679 = vpack.c.b16 %v2511, %v2510
    %v2680 = vpack.c.b16 %v2513, %v2512
    %v2681 = vpack.c.b16 %v2515, %v2514
    %v2682 = vpack.c.b16 %v2517, %v2516
    %v2683 = vpack.c.b16 %v2519, %v2518
    %v2684 = vpack.c.b16 %v2521, %v2520
    %v2685 = vpack.c.b16 %v2523, %v2522
    %v2686 = vpack.c.b16 %v2525, %v2524
    %v2687 = vpack.c.b16 %v2527, %v2526
    %v2688 = vpack.c.b16 %v2529, %v2528
    %v2689 = vpack.c.b16 %v2531, %v2530
    %v2690 = vpack.c.b16 %v2533, %v2532
    %v2691 = vpack.c.b16 %v2535, %v2534
    %v2692 = vpack.c.b16 %v2537, %v2536
    %v2693 = vpack.c.b16 %v2539, %v2538
    %v2694 = vpack.c.b16 %v2541, %v2540
    %v2695 = vpack.c.b16 %v2543, %v2542
    %v2696 = vpack.c.b16 %v2545, %v2544
    %v2697 = vpack.c.b16 %v2547, %v2546
    %v2698 = vpack.c.b16 %v2549, %v2548
    %v2699 = vpack.c.b16 %v2551, %v2550
    %v2700 = vpack.c.b16 %v2553, %v2552
    %v2701 = vpack.c.b16 %v2555, %v2554
    %v2702 = vpack.c.b16 %v2557, %v2556
    %v2703 = vpack.c.b16 %v2559, %v2558
    %v2704 = vpack.c.b16 %v2561, %v2560
    %v2705 = vpack.c.b16 %v2563, %v2562
    %v2706 = vpack.c.b16 %v2565, %v2564
    %v2707 = vpack.c.b16 %v2567, %v2566
    %v2708 = vpack.c.b16 %v2569, %v2568
    %v2709 = vpack.c.b16 %v2571, %v2570
    %v2710 = vpack.c.b16 %v2573, %v2572
    %v2711 = vpack.c.b16 %v2575, %v2574
    %v2712 = vpack.c.b16 %v2577, %v2576
    %v2713 = vpack.c.b16 %v2579, %v2578
    %v2714 = vpack.c.b16 %v2581, %v2580
    %v2715 = vpack.c.b16 %v2583, %v2582
    %v2716 = vpack.c.b16 %v2585, %v2584
    %v2717 = vpack.c.b16 %v2587, %v2586
    %v2718 = vpack.c.b16 %v2589, %v2588
    %v2719 = vpack.c.b16 %v2591, %v2590
    %2848 = vmatprep.subr.bf16.mxu0 0
    %2849 = vmatpush1.bf16.msra.mxu0 %v2599
    %2850 = vmatprep.subr.bf16.mxu0 0
    %2851 = vmatpush1.bf16.msra.mxu0 %v2598
    %2852 = vmatprep.subr.bf16.mxu0 0
    %2853 = vmatpush1.bf16.msra.mxu0 %v2597
    %2854 = vmatprep.subr.bf16.mxu0 0
    %2855 = vmatpush1.bf16.msra.mxu0 %v2596
    %2856 = vmatprep.subr.bf16.mxu0 0
    %2857 = vmatpush1.bf16.msra.mxu0 %v2595
    %2858 = vmatprep.subr.bf16.mxu0 0
    %2859 = vmatpush1.bf16.msra.mxu0 %v2594
    %2860 = vmatprep.subr.bf16.mxu0 0
    %2861 = vmatpush1.bf16.msra.mxu0 %v2593
    %2862 = vmatprep.subr.bf16.mxu0 0
    %2863 = vmatpush1.bf16.msra.mxu0 %v2592
    %2864 = vmatprep.subr.bf16.mxu0 0
    %2865 = vmatpush2.bf16.msra.mxu0 %v2607
    %2866 = vmatprep.subr.bf16.mxu0 0
    %2867 = vmatpush2.bf16.msra.mxu0 %v2606
    %2868 = vmatprep.subr.bf16.mxu0 0
    %2869 = vmatpush2.bf16.msra.mxu0 %v2605
    %2870 = vmatprep.subr.bf16.mxu0 0
    %2871 = vmatpush2.bf16.msra.mxu0 %v2604
    %2872 = vmatprep.subr.bf16.mxu0 0
    %2873 = vmatpush2.bf16.msra.mxu0 %v2603
    %2874 = vmatprep.subr.bf16.mxu0 0
    %2875 = vmatpush2.bf16.msra.mxu0 %v2602
    %2876 = vmatprep.subr.bf16.mxu0 0
    %2877 = vmatpush2.bf16.msra.mxu0 %v2601
    %2878 = vmatprep.subr.bf16.mxu0 0
    %2879 = vmatpush2.bf16.msra.mxu0 %v2600
    %2880 = vmatprep.mubr.bf16.mxu0 %v1802
    %2881 = vmatmul.mubr.bf16.gmra.mxu0 %v1801
    %v2882 = vpop.f32.mrf.mxu0
    %v2883 = vadd.f32 %v2078, %v2882
    %v2884 = vpop.f32.mrf.mxu0
    %v2885 = vpop.f32.mrf.mxu0
    %v2886 = vpop.f32.mrf.mxu0
    %2887 = vdwg.mxu0
    %2888 = vmatprep.subr.bf16.mxu0 0
    %2889 = vmatpush1.bf16.msra.mxu0 %v2615
    %2890 = vmatprep.subr.bf16.mxu0 0
    %2891 = vmatpush1.bf16.msra.mxu0 %v2614
    %2892 = vmatprep.subr.bf16.mxu0 0
    %2893 = vmatpush1.bf16.msra.mxu0 %v2613
    %2894 = vmatprep.subr.bf16.mxu0 0
    %2895 = vmatpush1.bf16.msra.mxu0 %v2612
    %2896 = vmatprep.subr.bf16.mxu0 0
    %2897 = vmatpush1.bf16.msra.mxu0 %v2611
    %2898 = vmatprep.subr.bf16.mxu0 0
    %2899 = vmatpush1.bf16.msra.mxu0 %v2610
    %2900 = vmatprep.subr.bf16.mxu0 0
    %2901 = vmatpush1.bf16.msra.mxu0 %v2609
    %2902 = vmatprep.subr.bf16.mxu0 0
    %2903 = vmatpush1.bf16.msra.mxu0 %v2608
    %2904 = vmatprep.subr.bf16.mxu0 0
    %2905 = vmatpush2.bf16.msra.mxu0 %v2623
    %2906 = vmatprep.subr.bf16.mxu0 0
    %2907 = vmatpush2.bf16.msra.mxu0 %v2622
    %2908 = vmatprep.subr.bf16.mxu0 0
    %2909 = vmatpush2.bf16.msra.mxu0 %v2621
    %2910 = vmatprep.subr.bf16.mxu0 0
    %2911 = vmatpush2.bf16.msra.mxu0 %v2620
    %2912 = vmatprep.subr.bf16.mxu0 0
    %2913 = vmatpush2.bf16.msra.mxu0 %v2619
    %2914 = vmatprep.subr.bf16.mxu0 0
    %2915 = vmatpush2.bf16.msra.mxu0 %v2618
    %2916 = vmatprep.subr.bf16.mxu0 0
    %2917 = vmatpush2.bf16.msra.mxu0 %v2617
    %2918 = vmatprep.subr.bf16.mxu0 0
    %2919 = vmatpush2.bf16.msra.mxu0 %v2616
    %2920 = vmatprep.mubr.bf16.mxu0 %v1804
    %2921 = vmatmul.mubr.bf16.gmra.mxu0 %v1803
    %v2922 = vpop.f32.mrf.mxu0
    %v2923 = vadd.f32 %v2883, %v2922
    %v2924 = vpop.f32.mrf.mxu0
    %v2925 = vpop.f32.mrf.mxu0
    %v2926 = vpop.f32.mrf.mxu0
    %2927 = vdwg.mxu0
    %2928 = vmatprep.subr.bf16.mxu0 0
    %2929 = vmatpush1.bf16.msra.mxu0 %v2631
    %2930 = vmatprep.subr.bf16.mxu0 0
    %2931 = vmatpush1.bf16.msra.mxu0 %v2630
    %2932 = vmatprep.subr.bf16.mxu0 0
    %2933 = vmatpush1.bf16.msra.mxu0 %v2629
    %2934 = vmatprep.subr.bf16.mxu0 0
    %2935 = vmatpush1.bf16.msra.mxu0 %v2628
    %2936 = vmatprep.subr.bf16.mxu0 0
    %2937 = vmatpush1.bf16.msra.mxu0 %v2627
    %2938 = vmatprep.subr.bf16.mxu0 0
    %2939 = vmatpush1.bf16.msra.mxu0 %v2626
    %2940 = vmatprep.subr.bf16.mxu0 0
    %2941 = vmatpush1.bf16.msra.mxu0 %v2625
    %2942 = vmatprep.subr.bf16.mxu0 0
    %2943 = vmatpush1.bf16.msra.mxu0 %v2624
    %2944 = vmatprep.subr.bf16.mxu0 0
    %2945 = vmatpush2.bf16.msra.mxu0 %v2639
    %2946 = vmatprep.subr.bf16.mxu0 0
    %2947 = vmatpush2.bf16.msra.mxu0 %v2638
    %2948 = vmatprep.subr.bf16.mxu0 0
    %2949 = vmatpush2.bf16.msra.mxu0 %v2637
    %2950 = vmatprep.subr.bf16.mxu0 0
    %2951 = vmatpush2.bf16.msra.mxu0 %v2636
    %2952 = vmatprep.subr.bf16.mxu0 0
    %2953 = vmatpush2.bf16.msra.mxu0 %v2635
    %2954 = vmatprep.subr.bf16.mxu0 0
    %2955 = vmatpush2.bf16.msra.mxu0 %v2634
    %2956 = vmatprep.subr.bf16.mxu0 0
    %2957 = vmatpush2.bf16.msra.mxu0 %v2633
    %2958 = vmatprep.subr.bf16.mxu0 0
    %2959 = vmatpush2.bf16.msra.mxu0 %v2632
    %2960 = vmatprep.mubr.bf16.mxu0 %v1806
    %2961 = vmatmul.mubr.bf16.gmra.mxu0 %v1805
    %v2962 = vpop.f32.mrf.mxu0
    %v2963 = vadd.f32 %v2923, %v2962
    %v2964 = vpop.f32.mrf.mxu0
    %v2965 = vpop.f32.mrf.mxu0
    %v2966 = vpop.f32.mrf.mxu0
    %2967 = vdwg.mxu0
    %2968 = vmatprep.subr.bf16.mxu0 0
    %2969 = vmatpush1.bf16.msra.mxu0 %v2647
    %2970 = vmatprep.subr.bf16.mxu0 0
    %2971 = vmatpush1.bf16.msra.mxu0 %v2646
    %2972 = vmatprep.subr.bf16.mxu0 0
    %2973 = vmatpush1.bf16.msra.mxu0 %v2645
    %2974 = vmatprep.subr.bf16.mxu0 0
    %2975 = vmatpush1.bf16.msra.mxu0 %v2644
    %2976 = vmatprep.subr.bf16.mxu0 0
    %2977 = vmatpush1.bf16.msra.mxu0 %v2643
    %2978 = vmatprep.subr.bf16.mxu0 0
    %2979 = vmatpush1.bf16.msra.mxu0 %v2642
    %2980 = vmatprep.subr.bf16.mxu0 0
    %2981 = vmatpush1.bf16.msra.mxu0 %v2641
    %2982 = vmatprep.subr.bf16.mxu0 0
    %2983 = vmatpush1.bf16.msra.mxu0 %v2640
    %2984 = vmatprep.subr.bf16.mxu0 0
    %2985 = vmatpush2.bf16.msra.mxu0 %v2655
    %2986 = vmatprep.subr.bf16.mxu0 0
    %2987 = vmatpush2.bf16.msra.mxu0 %v2654
    %2988 = vmatprep.subr.bf16.mxu0 0
    %2989 = vmatpush2.bf16.msra.mxu0 %v2653
    %2990 = vmatprep.subr.bf16.mxu0 0
    %2991 = vmatpush2.bf16.msra.mxu0 %v2652
    %2992 = vmatprep.subr.bf16.mxu0 0
    %2993 = vmatpush2.bf16.msra.mxu0 %v2651
    %2994 = vmatprep.subr.bf16.mxu0 0
    %2995 = vmatpush2.bf16.msra.mxu0 %v2650
    %2996 = vmatprep.subr.bf16.mxu0 0
    %2997 = vmatpush2.bf16.msra.mxu0 %v2649
    %2998 = vmatprep.subr.bf16.mxu0 0
    %2999 = vmatpush2.bf16.msra.mxu0 %v2648
    %3000 = vmatprep.mubr.bf16.mxu0 %v1808
    %3001 = vmatmul.mubr.bf16.gmra.mxu0 %v1807
    %v3002 = vpop.f32.mrf.mxu0
    %v3003 = vadd.f32 %v2963, %v3002
    %v3004 = vpop.f32.mrf.mxu0
    %v3005 = vpop.f32.mrf.mxu0
    %v3006 = vpop.f32.mrf.mxu0
    %3007 = vdwg.mxu0
    %3008 = vmatprep.subr.bf16.mxu0 0
    %3009 = vmatpush1.bf16.msra.mxu0 %v2663
    %3010 = vmatprep.subr.bf16.mxu0 0
    %3011 = vmatpush1.bf16.msra.mxu0 %v2662
    %3012 = vmatprep.subr.bf16.mxu0 0
    %3013 = vmatpush1.bf16.msra.mxu0 %v2661
    %3014 = vmatprep.subr.bf16.mxu0 0
    %3015 = vmatpush1.bf16.msra.mxu0 %v2660
    %3016 = vmatprep.subr.bf16.mxu0 0
    %3017 = vmatpush1.bf16.msra.mxu0 %v2659
    %3018 = vmatprep.subr.bf16.mxu0 0
    %3019 = vmatpush1.bf16.msra.mxu0 %v2658
    %3020 = vmatprep.subr.bf16.mxu0 0
    %3021 = vmatpush1.bf16.msra.mxu0 %v2657
    %3022 = vmatprep.subr.bf16.mxu0 0
    %3023 = vmatpush1.bf16.msra.mxu0 %v2656
    %3024 = vmatprep.subr.bf16.mxu0 0
    %3025 = vmatpush2.bf16.msra.mxu0 %v2671
    %3026 = vmatprep.subr.bf16.mxu0 0
    %3027 = vmatpush2.bf16.msra.mxu0 %v2670
    %3028 = vmatprep.subr.bf16.mxu0 0
    %3029 = vmatpush2.bf16.msra.mxu0 %v2669
    %3030 = vmatprep.subr.bf16.mxu0 0
    %3031 = vmatpush2.bf16.msra.mxu0 %v2668
    %3032 = vmatprep.subr.bf16.mxu0 0
    %3033 = vmatpush2.bf16.msra.mxu0 %v2667
    %3034 = vmatprep.subr.bf16.mxu0 0
    %3035 = vmatpush2.bf16.msra.mxu0 %v2666
    %3036 = vmatprep.subr.bf16.mxu0 0
    %3037 = vmatpush2.bf16.msra.mxu0 %v2665
    %3038 = vmatprep.subr.bf16.mxu0 0
    %3039 = vmatpush2.bf16.msra.mxu0 %v2664
    %3040 = vmatprep.mubr.bf16.mxu0 %v1810
    %3041 = vmatmul.mubr.bf16.gmra.mxu0 %v1809
    %v3042 = vpop.f32.mrf.mxu0
    %v3043 = vadd.f32 %v3003, %v3042
    %v3044 = vpop.f32.mrf.mxu0
    %v3045 = vpop.f32.mrf.mxu0
    %v3046 = vpop.f32.mrf.mxu0
    %3047 = vdwg.mxu0
    %3048 = vmatprep.subr.bf16.mxu0 0
    %3049 = vmatpush1.bf16.msra.mxu0 %v2679
    %3050 = vmatprep.subr.bf16.mxu0 0
    %3051 = vmatpush1.bf16.msra.mxu0 %v2678
    %3052 = vmatprep.subr.bf16.mxu0 0
    %3053 = vmatpush1.bf16.msra.mxu0 %v2677
    %3054 = vmatprep.subr.bf16.mxu0 0
    %3055 = vmatpush1.bf16.msra.mxu0 %v2676
    %3056 = vmatprep.subr.bf16.mxu0 0
    %3057 = vmatpush1.bf16.msra.mxu0 %v2675
    %3058 = vmatprep.subr.bf16.mxu0 0
    %3059 = vmatpush1.bf16.msra.mxu0 %v2674
    %3060 = vmatprep.subr.bf16.mxu0 0
    %3061 = vmatpush1.bf16.msra.mxu0 %v2673
    %3062 = vmatprep.subr.bf16.mxu0 0
    %3063 = vmatpush1.bf16.msra.mxu0 %v2672
    %3064 = vmatprep.subr.bf16.mxu0 0
    %3065 = vmatpush2.bf16.msra.mxu0 %v2687
    %3066 = vmatprep.subr.bf16.mxu0 0
    %3067 = vmatpush2.bf16.msra.mxu0 %v2686
    %3068 = vmatprep.subr.bf16.mxu0 0
    %3069 = vmatpush2.bf16.msra.mxu0 %v2685
    %3070 = vmatprep.subr.bf16.mxu0 0
    %3071 = vmatpush2.bf16.msra.mxu0 %v2684
    %3072 = vmatprep.subr.bf16.mxu0 0
    %3073 = vmatpush2.bf16.msra.mxu0 %v2683
    %3074 = vmatprep.subr.bf16.mxu0 0
    %3075 = vmatpush2.bf16.msra.mxu0 %v2682
    %3076 = vmatprep.subr.bf16.mxu0 0
    %3077 = vmatpush2.bf16.msra.mxu0 %v2681
    %3078 = vmatprep.subr.bf16.mxu0 0
    %3079 = vmatpush2.bf16.msra.mxu0 %v2680
    %3080 = vmatprep.mubr.bf16.mxu0 %v1812
    %3081 = vmatmul.mubr.bf16.gmra.mxu0 %v1811
    %v3082 = vpop.f32.mrf.mxu0
    %v3083 = vadd.f32 %v3043, %v3082
    %v3084 = vpop.f32.mrf.mxu0
    %v3085 = vpop.f32.mrf.mxu0
    %v3086 = vpop.f32.mrf.mxu0
    %3087 = vdwg.mxu0
    %3088 = vmatprep.subr.bf16.mxu0 0
    %3089 = vmatpush1.bf16.msra.mxu0 %v2695
    %3090 = vmatprep.subr.bf16.mxu0 0
    %3091 = vmatpush1.bf16.msra.mxu0 %v2694
    %3092 = vmatprep.subr.bf16.mxu0 0
    %3093 = vmatpush1.bf16.msra.mxu0 %v2693
    %3094 = vmatprep.subr.bf16.mxu0 0
    %3095 = vmatpush1.bf16.msra.mxu0 %v2692
    %3096 = vmatprep.subr.bf16.mxu0 0
    %3097 = vmatpush1.bf16.msra.mxu0 %v2691
    %3098 = vmatprep.subr.bf16.mxu0 0
    %3099 = vmatpush1.bf16.msra.mxu0 %v2690
    %3100 = vmatprep.subr.bf16.mxu0 0
    %3101 = vmatpush1.bf16.msra.mxu0 %v2689
    %3102 = vmatprep.subr.bf16.mxu0 0
    %3103 = vmatpush1.bf16.msra.mxu0 %v2688
    %3104 = vmatprep.subr.bf16.mxu0 0
    %3105 = vmatpush2.bf16.msra.mxu0 %v2703
    %3106 = vmatprep.subr.bf16.mxu0 0
    %3107 = vmatpush2.bf16.msra.mxu0 %v2702
    %3108 = vmatprep.subr.bf16.mxu0 0
    %3109 = vmatpush2.bf16.msra.mxu0 %v2701
    %3110 = vmatprep.subr.bf16.mxu0 0
    %3111 = vmatpush2.bf16.msra.mxu0 %v2700
    %3112 = vmatprep.subr.bf16.mxu0 0
    %3113 = vmatpush2.bf16.msra.mxu0 %v2699
    %3114 = vmatprep.subr.bf16.mxu0 0
    %3115 = vmatpush2.bf16.msra.mxu0 %v2698
    %3116 = vmatprep.subr.bf16.mxu0 0
    %3117 = vmatpush2.bf16.msra.mxu0 %v2697
    %3118 = vmatprep.subr.bf16.mxu0 0
    %3119 = vmatpush2.bf16.msra.mxu0 %v2696
    %3120 = vmatprep.mubr.bf16.mxu0 %v1814
    %3121 = vmatmul.mubr.bf16.gmra.mxu0 %v1813
    %v3122 = vpop.f32.mrf.mxu0
    %v3123 = vadd.f32 %v3083, %v3122
    %v3124 = vpop.f32.mrf.mxu0
    %v3125 = vpop.f32.mrf.mxu0
    %v3126 = vpop.f32.mrf.mxu0
    %3127 = vdwg.mxu0
    %3128 = vmatprep.subr.bf16.mxu0 0
    %3129 = vmatpush1.bf16.msra.mxu0 %v2711
    %3130 = vmatprep.subr.bf16.mxu0 0
    %3131 = vmatpush1.bf16.msra.mxu0 %v2710
    %3132 = vmatprep.subr.bf16.mxu0 0
    %3133 = vmatpush1.bf16.msra.mxu0 %v2709
    %3134 = vmatprep.subr.bf16.mxu0 0
    %3135 = vmatpush1.bf16.msra.mxu0 %v2708
    %3136 = vmatprep.subr.bf16.mxu0 0
    %3137 = vmatpush1.bf16.msra.mxu0 %v2707
    %3138 = vmatprep.subr.bf16.mxu0 0
    %3139 = vmatpush1.bf16.msra.mxu0 %v2706
    %3140 = vmatprep.subr.bf16.mxu0 0
    %3141 = vmatpush1.bf16.msra.mxu0 %v2705
    %3142 = vmatprep.subr.bf16.mxu0 0
    %3143 = vmatpush1.bf16.msra.mxu0 %v2704
    %3144 = vmatprep.subr.bf16.mxu0 0
    %3145 = vmatpush2.bf16.msra.mxu0 %v2719
    %3146 = vmatprep.subr.bf16.mxu0 0
    %3147 = vmatpush2.bf16.msra.mxu0 %v2718
    %3148 = vmatprep.subr.bf16.mxu0 0
    %3149 = vmatpush2.bf16.msra.mxu0 %v2717
    %3150 = vmatprep.subr.bf16.mxu0 0
    %3151 = vmatpush2.bf16.msra.mxu0 %v2716
    %3152 = vmatprep.subr.bf16.mxu0 0
    %3153 = vmatpush2.bf16.msra.mxu0 %v2715
    %3154 = vmatprep.subr.bf16.mxu0 0
    %3155 = vmatpush2.bf16.msra.mxu0 %v2714
    %3156 = vmatprep.subr.bf16.mxu0 0
    %3157 = vmatpush2.bf16.msra.mxu0 %v2713
    %3158 = vmatprep.subr.bf16.mxu0 0
    %3159 = vmatpush2.bf16.msra.mxu0 %v2712
    %3160 = vmatprep.mubr.bf16.mxu0 %v1816
    %3161 = vmatmul.mubr.bf16.gmra.mxu0 %v1815
    %v3162 = vpop.f32.mrf.mxu0
    %v3163 = vadd.f32 %v3123, %v3162
    %v3164 = vpop.f32.mrf.mxu0
    %v3165 = vpop.f32.mrf.mxu0
    %v3166 = vpop.f32.mrf.mxu0
    %3167 = vdwg.mxu0
    %vm3168 = vcmask 74752
    %3169 = vst.msk [vmem:[#allocation4] sm:$0x3] %vm3168, %v3163
    // Predicated region
    $region30: #{my_resnet_forward.1} parent=1 // pred_check
      _
    $region31: #{my_resnet_forward.1} parent=1 // pred_check_branch
      %3171 = sbr.rel (0) target = $region33
    $region32: #{my_resnet_forward.1} parent=1 // pred_region
      %s3173 = ssub.s32 32, 32
      %3174 = vsyncadd [#allocation5], %s3173
      %s3176 = sshll.u32 [#allocation4], 4
      %s3177 = int_to_ptr.vmem [resolvable:$true] %s3176
      %3179 = dma.vmem_to_hbm [thread:$0]  %s3177, 32, %s7, [#allocation5]
    $region33: #{my_resnet_forward.1} parent=1 // pred_fallthru
      _
    // Predicated region
    $region34: #{my_resnet_forward.1} parent=1 // pred_check
      _
    $region35: #{my_resnet_forward.1} parent=1 // pred_check_branch
      %3181 = sbr.rel (0) target = $region37
    $region36: #{my_resnet_forward.1} parent=1 // pred_region
      %3182 = dma.done [#allocation5], 32
    $region37: #{my_resnet_forward.1} parent=1 // pred_fallthru
      _
    %3183 = vsyncpa [#allocation5], 1

</llo_original>
